<compile_context>
chip_gen: v7x
topology: tpu7x:2x2x1
jax: 0.10.0
libtpu: 0.0.40
codegen_flags: <defaults>
</compile_context>

<pallas_src>
import functools

import jax
import jax.numpy as jnp
from jax.experimental import pallas as pl
from jax.experimental.pallas import tpu as pltpu

HIDDEN = 512        # conv1 output channels (fixed by the module)
HIDDEN_CHUNK = 128  # rows of the hidden dim processed per MXU matmul


def _make_kernel(hidden, chunk, mxu_bf16):
    """Per-tile kernel: chunked conv1 (MXU) -> ReLU -> conv2 (VPU reduce) -> Softplus."""
    n_chunks = hidden // chunk

    def kernel(x_ref, w1_ref, b1_ref, w2_ref, b2_ref, o_ref):
        # x_ref:  (1, C, T)  pixel tile (channels on sublanes, pixels on lanes)
        # w1_ref: (H, C)     conv1 weight
        # b1_ref: (H, 1)     conv1 bias (column)
        # w2_ref: (H, 1)     conv2 weight (column)
        # b2_ref: (1, 1)     conv2 bias (SMEM scalar)
        # o_ref:  (1, 1, T)  softplus attention scores (lane-dense)
        x = x_ref[0]                                   # (C, T)
        if mxu_bf16 and x.dtype != jnp.bfloat16:
            # In-VMEM cast only; X still streams from HBM at its native width.
            x = x.astype(jnp.bfloat16)

        t = x.shape[-1]
        s = jnp.zeros((1, t), jnp.float32)
        # Static unrolled loop over hidden chunks: keeps the live (chunk, T)
        # intermediate small and overlaps the next chunk's vmatmul pushes with
        # the previous chunk's VPU epilogue.
        for ci in range(n_chunks):
            c0 = ci * chunk
            h = jnp.dot(w1_ref[pl.ds(c0, chunk), :], x,
                        preferred_element_type=jnp.float32)            # (chunk, T)
            h = jnp.maximum(h + b1_ref[pl.ds(c0, chunk), :], 0.0)      # bias + ReLU
            # conv2 is an N=1 matmul -> VPU multiply + sublane reduction.
            s = s + jnp.sum(h * w2_ref[pl.ds(c0, chunk), :],
                            axis=0, keepdims=True)                      # (1, T)

        s = s + b2_ref[0, 0]
        # Softplus(beta=1, threshold=20): log1p(exp(x)) for x <= 20, identity above.
        o_ref[0] = jnp.where(s > 20.0, s, jnp.log1p(jnp.exp(jnp.minimum(s, 20.0))))

    return kernel


def _vmem_budget(c, hidden, chunk, t, x_bytes, w_bytes, weight_bufs):
    """Approximate per-step VMEM bytes for the given tiling."""
    return (2 * c * t * x_bytes                  # x tile double buffer
            + weight_bufs * hidden * c * w_bytes  # W1 (resident)
            + weight_bufs * hidden * 2 * 4        # b1 + w2 columns
            + 2 * 1 * t * 4                       # output double buffer
            + 2 * chunk * t * 4                   # h chunk + epilogue temporaries
            + 2 * t * 4)                          # s accumulator / misc


def _vmem_capacity_bytes():
    """Generation-aware VMEM capacity; conservative fallback (v7x per-TC)."""
    try:
        return int(pltpu.get_tpu_info().vmem_capacity_bytes)
    except Exception:
        return 64 << 20


def _pick_tile(hw, c, hidden, chunk, x_bytes, w_bytes, vmem_cap):
    """Largest lane tile (multiple of 128) whose per-step VMEM fits the budget."""
    hw_128 = pl.cdiv(hw, 128) * 128
    cap = int(vmem_cap * 0.45)
    for cand in (2048, 1024, 512, 256, 128):
        if cand > hw_128:
            continue
        if _vmem_budget(c, hidden, chunk, cand, x_bytes, w_bytes, 2) <= cap:
            return cand
    return 128


def _make_in_specs(c, hidden, t, single_buf_weights):
    if single_buf_weights and hasattr(pl, "Buffered"):
        # Constant index_map -> a second pipeline buffer is pure waste.
        wkw = {"pipeline_mode": pl.Buffered(1)}
    else:
        wkw = {}
    return [
        pl.BlockSpec((1, c, t), lambda bi, ti: (bi, 0, ti)),        # x tile
        pl.BlockSpec((hidden, c), lambda bi, ti: (0, 0), **wkw),    # W1 (resident)
        pl.BlockSpec((hidden, 1), lambda bi, ti: (0, 0), **wkw),    # b1
        pl.BlockSpec((hidden, 1), lambda bi, ti: (0, 0), **wkw),    # w2
        pl.BlockSpec(memory_space=pltpu.MemorySpace.SMEM),          # b2 scalar
    ]


@functools.partial(
    jax.jit,
    static_argnames=("t", "chunk", "mxu_bf16", "single_buf_weights", "vmem_limit"))
def _spatial_attention_call(x, w1, b1, w2, b2, *, t, chunk, mxu_bf16,
                            single_buf_weights, vmem_limit):
    b, c, hw = x.shape
    hidden = w1.shape[0]
    grid = (b, pl.cdiv(hw, t))  # ragged last tile handled by Pallas (masked DMA)
    kernel = _make_kernel(hidden, chunk, mxu_bf16)
    return pl.pallas_call(
        kernel,
        out_shape=jax.ShapeDtypeStruct((b, 1, hw), jnp.float32),
        grid_spec=pltpu.PrefetchScalarGridSpec(
            num_scalar_prefetch=0,
            grid=grid,
            in_specs=_make_in_specs(c, hidden, t, single_buf_weights),
            out_specs=pl.BlockSpec((1, 1, t), lambda bi, ti: (bi, 0, ti)),
        ),
        compiler_params=pltpu.CompilerParams(
            dimension_semantics=("parallel", "parallel"),
            vmem_limit_bytes=vmem_limit,
        ),
    )(x, w1, b1, w2, b2)


def spatial_attention_2d(x_nchw, w1, b1, w2, b2, *, t_hw=None, mxu_bf16=False):
    """x_nchw: (b, c, h, w).  Returns (b, 1, h, w) float32 softplus attention scores."""
    b, c, hh, ww = x_nchw.shape
    hidden = w1.shape[0]
    hw = hh * ww

    # Channel-major view straight from NCHW: metadata-only reshape, no HBM pass.
    x = x_nchw.reshape(b, c, hw)

    chunk = HIDDEN_CHUNK if hidden % HIDDEN_CHUNK == 0 else hidden
    x_bytes = jnp.dtype(x.dtype).itemsize
    w_bytes = 2 if mxu_bf16 else jnp.dtype(w1.dtype).itemsize

    vmem_cap = _vmem_capacity_bytes()
    if t_hw is None:
        t = _pick_tile(hw, c, hidden, chunk, x_bytes, w_bytes, vmem_cap)
    else:
        t = max(128, (min(int(t_hw), pl.cdiv(hw, 128) * 128) // 128) * 128)

    budget = _vmem_budget(c, hidden, chunk, t, x_bytes, w_bytes, 2)
    vmem_limit = int(min(max(budget + (8 << 20), 32 << 20), int(vmem_cap * 0.9)))

    if mxu_bf16:
        # W1 is tiny (hidden*c) -> casting it in the wrapper costs nothing.
        # X is deliberately NOT cast here (that would be an extra HBM pass);
        # the kernel casts the resident VMEM tile, or callers may pass bf16 x
        # directly to also halve the input HBM traffic.
        w1 = w1.astype(jnp.bfloat16)

    kwargs = dict(t=t, chunk=chunk, mxu_bf16=mxu_bf16, vmem_limit=vmem_limit)
    try:
        out = _spatial_attention_call(x, w1, b1, w2, b2,
                                      single_buf_weights=True, **kwargs)
    except Exception:
        # Fallback for JAX builds that reject pipeline_mode / Buffered(1).
        out = _spatial_attention_call(x, w1, b1, w2, b2,
                                      single_buf_weights=False, **kwargs)
    return out.reshape(b, 1, hh, ww)


def _reference(x_nchw, w1, b1, w2, b2):
    """Pure-JAX reference matching the PyTorch forward (f32)."""
    x = jnp.transpose(x_nchw, (0, 2, 3, 1)).astype(jnp.float32)   # (b,h,w,c)
    h = jnp.maximum(x @ w1.T + b1[:, 0], 0.0)                     # conv1 + ReLU
    s = h @ w2 + b2[0, 0]                                         # conv2
    s = jnp.where(s > 20.0, s, jnp.log1p(jnp.exp(jnp.minimum(s, 20.0))))
    return jnp.transpose(s, (0, 3, 1, 2))                         # (b,1,h,w)


if __name__ == "__main__":
    key = jax.random.PRNGKey(0)
    kx, k1, kb1, k2, kb2, kx2 = jax.random.split(key, 6)

    b, c = 2, 4
    w1 = jax.random.normal(k1, (HIDDEN, c), dtype=jnp.float32) * 0.1
    b1 = jax.random.normal(kb1, (HIDDEN, 1), dtype=jnp.float32) * 0.1
    w2 = jax.random.normal(k2, (HIDDEN, 1), dtype=jnp.float32) * 0.1
    b2 = jax.random.normal(kb2, (1, 1), dtype=jnp.float32) * 0.1

    # 1) Exact-tile case: 16x16 spatial (H*W is a multiple of 128).
    x = jax.random.normal(kx, (b, c, 16, 16), dtype=jnp.float32)
    ref = _reference(x, w1, b1, w2, b2)
    out = jax.block_until_ready(spatial_attention_2d(x, w1, b1, w2, b2))
    assert out.shape == (b, 1, 16, 16), out.shape
    assert jnp.allclose(out, ref, atol=1e-4, rtol=1e-4), float(
        jnp.max(jnp.abs(out - ref)))

    # 2) Ragged-tile case: 10x10 spatial (H*W = 100 is NOT a multiple of 128);
    #    exercises the padding-free boundary handling (masked last-block DMA).
    x_r = jax.random.normal(kx2, (b, c, 10, 10), dtype=jnp.float32)
    ref_r = _reference(x_r, w1, b1, w2, b2)
    out_r = jax.block_until_ready(spatial_attention_2d(x_r, w1, b1, w2, b2))
    assert out_r.shape == (b, 1, 10, 10), out_r.shape
    assert jnp.allclose(out_r, ref_r, atol=1e-4, rtol=1e-4), float(
        jnp.max(jnp.abs(out_r - ref_r)))

    # 3) bf16-MXU perf mode (f32 accumulation; X still streams at native width).
    out_bf16 = jax.block_until_ready(
        spatial_attention_2d(x, w1, b1, w2, b2, mxu_bf16=True))
    assert out_bf16.shape == (b, 1, 16, 16), out_bf16.shape
    assert jnp.allclose(out_bf16, ref, atol=5e-2, rtol=5e-2), float(
        jnp.max(jnp.abs(out_bf16 - ref)))

    print("KERNEL_OK")
</pallas_src>

<mosaic_0001>
module attributes {stable_mosaic.version = 11 : i64} {
  func.func @kernel(%arg0: i32, %arg1: i32, %arg2: memref<1x4x256xf32, #tpu.memory_space<vmem>>, %arg3: memref<512x4xf32, #tpu.memory_space<vmem>>, %arg4: memref<512x1xf32, #tpu.memory_space<vmem>>, %arg5: memref<512x1xf32, #tpu.memory_space<vmem>>, %arg6: memref<1x1xf32, #tpu.memory_space<smem>>, %arg7: memref<1x1x256xf32, #tpu.memory_space<vmem>>) attributes {dimension_semantics = [#tpu.dimension_semantics<parallel>, #tpu.dimension_semantics<parallel>], iteration_bounds = array<i64: 2, 1>, scalar_prefetch = 0 : i64, scratch_operands = 0 : i64, tpu.core_type = #tpu.core_type<tc>, window_params = [{transform_indices = @transform_0, window_bounds = array<i64: 1, 4, 256>}, {pipeline_mode = #tpu.pipeline_mode<synchronous>, transform_indices = @transform_1, window_bounds = array<i64: 512, 4>}, {pipeline_mode = #tpu.pipeline_mode<synchronous>, transform_indices = @transform_2, window_bounds = array<i64: 512, 1>}, {pipeline_mode = #tpu.pipeline_mode<synchronous>, transform_indices = @transform_3, window_bounds = array<i64: 512, 1>}, {transform_indices = @transform_4, window_bounds = array<i64: 1, 1>}, {transform_indices = @transform_5, window_bounds = array<i64: 1, 1, 256>}]} {
    %c0 = arith.constant 0 : index
    %c0_0 = arith.constant 0 : index
    %c0_1 = arith.constant 0 : index
    %0 = vector.load %arg2[%c0, %c0_0, %c0_1] : memref<1x4x256xf32, #tpu.memory_space<vmem>>, vector<1x4x256xf32>
    %1 = vector.shape_cast %0 : vector<1x4x256xf32> to vector<4x256xf32>
    %cst = arith.constant 0.000000e+00 : f32
    %2 = vector.broadcast %cst : f32 to vector<1x256xf32>
    %c0_2 = arith.constant 0 : index
    %c0_3 = arith.constant 0 : index
    %3 = vector.load %arg3[%c0_2, %c0_3] : memref<512x4xf32, #tpu.memory_space<vmem>>, vector<128x4xf32>
    %cst_4 = arith.constant dense<0.000000e+00> : vector<128x256xf32>
    %4 = tpu.matmul %3, %1, %cst_4 {dimension_numbers = #tpu.dot_dimension_numbers<[1], [0], [0], [1], [0, 0, 1, 1], [], []>} : vector<128x4xf32>, vector<4x256xf32>, vector<128x256xf32> -> vector<128x256xf32>
    %c0_5 = arith.constant 0 : index
    %c0_6 = arith.constant 0 : index
    %5 = vector.load %arg4[%c0_5, %c0_6] : memref<512x1xf32, #tpu.memory_space<vmem>>, vector<128x1xf32>
    %6 = vector.broadcast %5 : vector<128x1xf32> to vector<128x256xf32>
    %7 = arith.addf %4, %6 : vector<128x256xf32>
    %cst_7 = arith.constant 0.000000e+00 : f32
    %8 = vector.broadcast %cst_7 : f32 to vector<128x256xf32>
    %9 = arith.maximumf %7, %8 : vector<128x256xf32>
    %c0_8 = arith.constant 0 : index
    %c0_9 = arith.constant 0 : index
    %10 = vector.load %arg5[%c0_8, %c0_9] : memref<512x1xf32, #tpu.memory_space<vmem>>, vector<128x1xf32>
    %11 = vector.broadcast %10 : vector<128x1xf32> to vector<128x256xf32>
    %12 = arith.mulf %9, %11 : vector<128x256xf32>
    %cst_10 = arith.constant dense<0.000000e+00> : vector<256xf32>
    %13 = vector.multi_reduction <add>, %12, %cst_10 [0] : vector<128x256xf32> to vector<256xf32>
    %14 = vector.shape_cast %13 : vector<256xf32> to vector<1x256xf32>
    %15 = arith.addf %2, %14 : vector<1x256xf32>
    %c128 = arith.constant 128 : index
    %c0_11 = arith.constant 0 : index
    %16 = vector.load %arg3[%c128, %c0_11] : memref<512x4xf32, #tpu.memory_space<vmem>>, vector<128x4xf32>
    %cst_12 = arith.constant dense<0.000000e+00> : vector<128x256xf32>
    %17 = tpu.matmul %16, %1, %cst_12 {dimension_numbers = #tpu.dot_dimension_numbers<[1], [0], [0], [1], [0, 0, 1, 1], [], []>} : vector<128x4xf32>, vector<4x256xf32>, vector<128x256xf32> -> vector<128x256xf32>
    %c128_13 = arith.constant 128 : index
    %c0_14 = arith.constant 0 : index
    %18 = vector.load %arg4[%c128_13, %c0_14] : memref<512x1xf32, #tpu.memory_space<vmem>>, vector<128x1xf32>
    %19 = vector.broadcast %18 : vector<128x1xf32> to vector<128x256xf32>
    %20 = arith.addf %17, %19 : vector<128x256xf32>
    %cst_15 = arith.constant 0.000000e+00 : f32
    %21 = vector.broadcast %cst_15 : f32 to vector<128x256xf32>
    %22 = arith.maximumf %20, %21 : vector<128x256xf32>
    %c128_16 = arith.constant 128 : index
    %c0_17 = arith.constant 0 : index
    %23 = vector.load %arg5[%c128_16, %c0_17] : memref<512x1xf32, #tpu.memory_space<vmem>>, vector<128x1xf32>
    %24 = vector.broadcast %23 : vector<128x1xf32> to vector<128x256xf32>
    %25 = arith.mulf %22, %24 : vector<128x256xf32>
    %cst_18 = arith.constant dense<0.000000e+00> : vector<256xf32>
    %26 = vector.multi_reduction <add>, %25, %cst_18 [0] : vector<128x256xf32> to vector<256xf32>
    %27 = vector.shape_cast %26 : vector<256xf32> to vector<1x256xf32>
    %28 = arith.addf %15, %27 : vector<1x256xf32>
    %c256 = arith.constant 256 : index
    %c0_19 = arith.constant 0 : index
    %29 = vector.load %arg3[%c256, %c0_19] : memref<512x4xf32, #tpu.memory_space<vmem>>, vector<128x4xf32>
    %cst_20 = arith.constant dense<0.000000e+00> : vector<128x256xf32>
    %30 = tpu.matmul %29, %1, %cst_20 {dimension_numbers = #tpu.dot_dimension_numbers<[1], [0], [0], [1], [0, 0, 1, 1], [], []>} : vector<128x4xf32>, vector<4x256xf32>, vector<128x256xf32> -> vector<128x256xf32>
    %c256_21 = arith.constant 256 : index
    %c0_22 = arith.constant 0 : index
    %31 = vector.load %arg4[%c256_21, %c0_22] : memref<512x1xf32, #tpu.memory_space<vmem>>, vector<128x1xf32>
    %32 = vector.broadcast %31 : vector<128x1xf32> to vector<128x256xf32>
    %33 = arith.addf %30, %32 : vector<128x256xf32>
    %cst_23 = arith.constant 0.000000e+00 : f32
    %34 = vector.broadcast %cst_23 : f32 to vector<128x256xf32>
    %35 = arith.maximumf %33, %34 : vector<128x256xf32>
    %c256_24 = arith.constant 256 : index
    %c0_25 = arith.constant 0 : index
    %36 = vector.load %arg5[%c256_24, %c0_25] : memref<512x1xf32, #tpu.memory_space<vmem>>, vector<128x1xf32>
    %37 = vector.broadcast %36 : vector<128x1xf32> to vector<128x256xf32>
    %38 = arith.mulf %35, %37 : vector<128x256xf32>
    %cst_26 = arith.constant dense<0.000000e+00> : vector<256xf32>
    %39 = vector.multi_reduction <add>, %38, %cst_26 [0] : vector<128x256xf32> to vector<256xf32>
    %40 = vector.shape_cast %39 : vector<256xf32> to vector<1x256xf32>
    %41 = arith.addf %28, %40 : vector<1x256xf32>
    %c384 = arith.constant 384 : index
    %c0_27 = arith.constant 0 : index
    %42 = vector.load %arg3[%c384, %c0_27] : memref<512x4xf32, #tpu.memory_space<vmem>>, vector<128x4xf32>
    %cst_28 = arith.constant dense<0.000000e+00> : vector<128x256xf32>
    %43 = tpu.matmul %42, %1, %cst_28 {dimension_numbers = #tpu.dot_dimension_numbers<[1], [0], [0], [1], [0, 0, 1, 1], [], []>} : vector<128x4xf32>, vector<4x256xf32>, vector<128x256xf32> -> vector<128x256xf32>
    %c384_29 = arith.constant 384 : index
    %c0_30 = arith.constant 0 : index
    %44 = vector.load %arg4[%c384_29, %c0_30] : memref<512x1xf32, #tpu.memory_space<vmem>>, vector<128x1xf32>
    %45 = vector.broadcast %44 : vector<128x1xf32> to vector<128x256xf32>
    %46 = arith.addf %43, %45 : vector<128x256xf32>
    %cst_31 = arith.constant 0.000000e+00 : f32
    %47 = vector.broadcast %cst_31 : f32 to vector<128x256xf32>
    %48 = arith.maximumf %46, %47 : vector<128x256xf32>
    %c384_32 = arith.constant 384 : index
    %c0_33 = arith.constant 0 : index
    %49 = vector.load %arg5[%c384_32, %c0_33] : memref<512x1xf32, #tpu.memory_space<vmem>>, vector<128x1xf32>
    %50 = vector.broadcast %49 : vector<128x1xf32> to vector<128x256xf32>
    %51 = arith.mulf %48, %50 : vector<128x256xf32>
    %cst_34 = arith.constant dense<0.000000e+00> : vector<256xf32>
    %52 = vector.multi_reduction <add>, %51, %cst_34 [0] : vector<128x256xf32> to vector<256xf32>
    %53 = vector.shape_cast %52 : vector<256xf32> to vector<1x256xf32>
    %54 = arith.addf %41, %53 : vector<1x256xf32>
    %c0_35 = arith.constant 0 : index
    %c0_36 = arith.constant 0 : index
    %55 = memref.load %arg6[%c0_35, %c0_36] : memref<1x1xf32, #tpu.memory_space<smem>>
    %56 = vector.broadcast %55 : f32 to vector<1x256xf32>
    %57 = arith.addf %54, %56 : vector<1x256xf32>
    %cst_37 = arith.constant 2.000000e+01 : f32
    %58 = vector.broadcast %cst_37 : f32 to vector<1x256xf32>
    %59 = arith.cmpf ogt, %57, %58 : vector<1x256xf32>
    %cst_38 = arith.constant 2.000000e+01 : f32
    %60 = vector.broadcast %cst_38 : f32 to vector<1x256xf32>
    %61 = arith.minimumf %57, %60 : vector<1x256xf32>
    %62 = math.exp %61 : vector<1x256xf32>
    %63 = math.log1p %62 : vector<1x256xf32>
    %64 = arith.select %59, %57, %63 : vector<1x256xi1>, vector<1x256xf32>
    %c0_39 = arith.constant 0 : index
    %c0_40 = arith.constant 0 : index
    %c0_41 = arith.constant 0 : index
    %65 = vector.load %arg7[%c0_39, %c0_40, %c0_41] : memref<1x1x256xf32, #tpu.memory_space<vmem>>, vector<1x1x256xf32>
    %66 = vector.shape_cast %65 : vector<1x1x256xf32> to vector<1x256xf32>
    %67 = vector.shape_cast %64 : vector<1x256xf32> to vector<1x1x256xf32>
    tpu.vector_store %arg7[%c0_39, %c0_40, %c0_41], %67 {strides = array<i32>} : memref<1x1x256xf32, #tpu.memory_space<vmem>>, vector<1x1x256xf32>,
    return
  }
  func.func @transform_0(%arg0: i32, %arg1: i32) -> (i32, i32, i32) {
    %c0_i32 = arith.constant 0 : i32
    %c0_i32_0 = arith.constant 0 : i32
    return %arg0, %c0_i32, %arg1 : i32, i32, i32
  }
  func.func @transform_1(%arg0: i32, %arg1: i32) -> (i32, i32) {
    %c0_i32 = arith.constant 0 : i32
    %c0_i32_0 = arith.constant 0 : i32
    %c0_i32_1 = arith.constant 0 : i32
    return %c0_i32, %c0_i32_0 : i32, i32
  }
  func.func @transform_2(%arg0: i32, %arg1: i32) -> (i32, i32) {
    %c0_i32 = arith.constant 0 : i32
    %c0_i32_0 = arith.constant 0 : i32
    %c0_i32_1 = arith.constant 0 : i32
    return %c0_i32, %c0_i32_0 : i32, i32
  }
  func.func @transform_3(%arg0: i32, %arg1: i32) -> (i32, i32) {
    %c0_i32 = arith.constant 0 : i32
    %c0_i32_0 = arith.constant 0 : i32
    %c0_i32_1 = arith.constant 0 : i32
    return %c0_i32, %c0_i32_0 : i32, i32
  }
  func.func @transform_4(%arg0: i32, %arg1: i32) -> (i32, i32) {
    %c0_i32 = arith.constant 0 : i32
    %c0_i32_0 = arith.constant 0 : i32
    %c0_i32_1 = arith.constant 0 : i32
    return %c0_i32, %c0_i32_0 : i32, i32
  }
  func.func @transform_5(%arg0: i32, %arg1: i32) -> (i32, i32, i32) {
    %c0_i32 = arith.constant 0 : i32
    %c0_i32_0 = arith.constant 0 : i32
    return %arg0, %c0_i32, %arg1 : i32, i32, i32
  }
}

module attributes {stable_mosaic.version = 11 : i64} {
  func.func @kernel(%arg0: i32, %arg1: i32, %arg2: memref<1x4x256xf32, #tpu.memory_space<vmem>>, %arg3: memref<512x4xf32, #tpu.memory_space<vmem>>, %arg4: memref<512x1xf32, #tpu.memory_space<vmem>>, %arg5: memref<512x1xf32, #tpu.memory_space<vmem>>, %arg6: memref<1x1xf32, #tpu.memory_space<smem>>, %arg7: memref<1x1x256xf32, #tpu.memory_space<vmem>>) attributes {dimension_semantics = [#tpu.dimension_semantics<parallel>, #tpu.dimension_semantics<parallel>], iteration_bounds = array<i64: 2, 1>, scalar_prefetch = 0 : i64, scratch_operands = 0 : i64, tpu.core_type = #tpu.core_type<tc>, window_params = [{transform_indices = @transform_0, window_bounds = array<i64: 1, 4, 256>}, {pipeline_mode = #tpu.pipeline_mode<synchronous>, transform_indices = @transform_1, window_bounds = array<i64: 512, 4>}, {pipeline_mode = #tpu.pipeline_mode<synchronous>, transform_indices = @transform_2, window_bounds = array<i64: 512, 1>}, {pipeline_mode = #tpu.pipeline_mode<synchronous>, transform_indices = @transform_3, window_bounds = array<i64: 512, 1>}, {transform_indices = @transform_4, window_bounds = array<i64: 1, 1>}, {transform_indices = @transform_5, window_bounds = array<i64: 1, 1, 256>}]} {
    %c0 = arith.constant 0 : index
    %c0_0 = arith.constant 0 : index
    %c0_1 = arith.constant 0 : index
    %0 = vector.load %arg2[%c0, %c0_0, %c0_1] : memref<1x4x256xf32, #tpu.memory_space<vmem>>, vector<1x4x256xf32>
    %1 = vector.shape_cast %0 : vector<1x4x256xf32> to vector<4x256xf32>
    %cst = arith.constant 0.000000e+00 : f32
    %2 = vector.broadcast %cst : f32 to vector<1x256xf32>
    %c0_2 = arith.constant 0 : index
    %c0_3 = arith.constant 0 : index
    %3 = vector.load %arg3[%c0_2, %c0_3] : memref<512x4xf32, #tpu.memory_space<vmem>>, vector<128x4xf32>
    %cst_4 = arith.constant dense<0.000000e+00> : vector<128x256xf32>
    %4 = tpu.matmul %3, %1, %cst_4 {dimension_numbers = #tpu.dot_dimension_numbers<[1], [0], [0], [1], [0, 0, 1, 1], [], []>} : vector<128x4xf32>, vector<4x256xf32>, vector<128x256xf32> -> vector<128x256xf32>
    %c0_5 = arith.constant 0 : index
    %c0_6 = arith.constant 0 : index
    %5 = vector.load %arg4[%c0_5, %c0_6] : memref<512x1xf32, #tpu.memory_space<vmem>>, vector<128x1xf32>
    %6 = vector.broadcast %5 : vector<128x1xf32> to vector<128x256xf32>
    %7 = arith.addf %4, %6 : vector<128x256xf32>
    %cst_7 = arith.constant 0.000000e+00 : f32
    %8 = vector.broadcast %cst_7 : f32 to vector<128x256xf32>
    %9 = arith.maximumf %7, %8 : vector<128x256xf32>
    %c0_8 = arith.constant 0 : index
    %c0_9 = arith.constant 0 : index
    %10 = vector.load %arg5[%c0_8, %c0_9] : memref<512x1xf32, #tpu.memory_space<vmem>>, vector<128x1xf32>
    %11 = vector.broadcast %10 : vector<128x1xf32> to vector<128x256xf32>
    %12 = arith.mulf %9, %11 : vector<128x256xf32>
    %cst_10 = arith.constant dense<0.000000e+00> : vector<256xf32>
    %13 = vector.multi_reduction <add>, %12, %cst_10 [0] : vector<128x256xf32> to vector<256xf32>
    %14 = vector.shape_cast %13 : vector<256xf32> to vector<1x256xf32>
    %15 = arith.addf %2, %14 : vector<1x256xf32>
    %c128 = arith.constant 128 : index
    %c0_11 = arith.constant 0 : index
    %16 = vector.load %arg3[%c128, %c0_11] : memref<512x4xf32, #tpu.memory_space<vmem>>, vector<128x4xf32>
    %cst_12 = arith.constant dense<0.000000e+00> : vector<128x256xf32>
    %17 = tpu.matmul %16, %1, %cst_12 {dimension_numbers = #tpu.dot_dimension_numbers<[1], [0], [0], [1], [0, 0, 1, 1], [], []>} : vector<128x4xf32>, vector<4x256xf32>, vector<128x256xf32> -> vector<128x256xf32>
    %c128_13 = arith.constant 128 : index
    %c0_14 = arith.constant 0 : index
    %18 = vector.load %arg4[%c128_13, %c0_14] : memref<512x1xf32, #tpu.memory_space<vmem>>, vector<128x1xf32>
    %19 = vector.broadcast %18 : vector<128x1xf32> to vector<128x256xf32>
    %20 = arith.addf %17, %19 : vector<128x256xf32>
    %cst_15 = arith.constant 0.000000e+00 : f32
    %21 = vector.broadcast %cst_15 : f32 to vector<128x256xf32>
    %22 = arith.maximumf %20, %21 : vector<128x256xf32>
    %c128_16 = arith.constant 128 : index
    %c0_17 = arith.constant 0 : index
    %23 = vector.load %arg5[%c128_16, %c0_17] : memref<512x1xf32, #tpu.memory_space<vmem>>, vector<128x1xf32>
    %24 = vector.broadcast %23 : vector<128x1xf32> to vector<128x256xf32>
    %25 = arith.mulf %22, %24 : vector<128x256xf32>
    %cst_18 = arith.constant dense<0.000000e+00> : vector<256xf32>
    %26 = vector.multi_reduction <add>, %25, %cst_18 [0] : vector<128x256xf32> to vector<256xf32>
    %27 = vector.shape_cast %26 : vector<256xf32> to vector<1x256xf32>
    %28 = arith.addf %15, %27 : vector<1x256xf32>
    %c256 = arith.constant 256 : index
    %c0_19 = arith.constant 0 : index
    %29 = vector.load %arg3[%c256, %c0_19] : memref<512x4xf32, #tpu.memory_space<vmem>>, vector<128x4xf32>
    %cst_20 = arith.constant dense<0.000000e+00> : vector<128x256xf32>
    %30 = tpu.matmul %29, %1, %cst_20 {dimension_numbers = #tpu.dot_dimension_numbers<[1], [0], [0], [1], [0, 0, 1, 1], [], []>} : vector<128x4xf32>, vector<4x256xf32>, vector<128x256xf32> -> vector<128x256xf32>
    %c256_21 = arith.constant 256 : index
    %c0_22 = arith.constant 0 : index
    %31 = vector.load %arg4[%c256_21, %c0_22] : memref<512x1xf32, #tpu.memory_space<vmem>>, vector<128x1xf32>
    %32 = vector.broadcast %31 : vector<128x1xf32> to vector<128x256xf32>
    %33 = arith.addf %30, %32 : vector<128x256xf32>
    %cst_23 = arith.constant 0.000000e+00 : f32
    %34 = vector.broadcast %cst_23 : f32 to vector<128x256xf32>
    %35 = arith.maximumf %33, %34 : vector<128x256xf32>
    %c256_24 = arith.constant 256 : index
    %c0_25 = arith.constant 0 : index
    %36 = vector.load %arg5[%c256_24, %c0_25] : memref<512x1xf32, #tpu.memory_space<vmem>>, vector<128x1xf32>
    %37 = vector.broadcast %36 : vector<128x1xf32> to vector<128x256xf32>
    %38 = arith.mulf %35, %37 : vector<128x256xf32>
    %cst_26 = arith.constant dense<0.000000e+00> : vector<256xf32>
    %39 = vector.multi_reduction <add>, %38, %cst_26 [0] : vector<128x256xf32> to vector<256xf32>
    %40 = vector.shape_cast %39 : vector<256xf32> to vector<1x256xf32>
    %41 = arith.addf %28, %40 : vector<1x256xf32>
    %c384 = arith.constant 384 : index
    %c0_27 = arith.constant 0 : index
    %42 = vector.load %arg3[%c384, %c0_27] : memref<512x4xf32, #tpu.memory_space<vmem>>, vector<128x4xf32>
    %cst_28 = arith.constant dense<0.000000e+00> : vector<128x256xf32>
    %43 = tpu.matmul %42, %1, %cst_28 {dimension_numbers = #tpu.dot_dimension_numbers<[1], [0], [0], [1], [0, 0, 1, 1], [], []>} : vector<128x4xf32>, vector<4x256xf32>, vector<128x256xf32> -> vector<128x256xf32>
    %c384_29 = arith.constant 384 : index
    %c0_30 = arith.constant 0 : index
    %44 = vector.load %arg4[%c384_29, %c0_30] : memref<512x1xf32, #tpu.memory_space<vmem>>, vector<128x1xf32>
    %45 = vector.broadcast %44 : vector<128x1xf32> to vector<128x256xf32>
    %46 = arith.addf %43, %45 : vector<128x256xf32>
    %cst_31 = arith.constant 0.000000e+00 : f32
    %47 = vector.broadcast %cst_31 : f32 to vector<128x256xf32>
    %48 = arith.maximumf %46, %47 : vector<128x256xf32>
    %c384_32 = arith.constant 384 : index
    %c0_33 = arith.constant 0 : index
    %49 = vector.load %arg5[%c384_32, %c0_33] : memref<512x1xf32, #tpu.memory_space<vmem>>, vector<128x1xf32>
    %50 = vector.broadcast %49 : vector<128x1xf32> to vector<128x256xf32>
    %51 = arith.mulf %48, %50 : vector<128x256xf32>
    %cst_34 = arith.constant dense<0.000000e+00> : vector<256xf32>
    %52 = vector.multi_reduction <add>, %51, %cst_34 [0] : vector<128x256xf32> to vector<256xf32>
    %53 = vector.shape_cast %52 : vector<256xf32> to vector<1x256xf32>
    %54 = arith.addf %41, %53 : vector<1x256xf32>
    %c0_35 = arith.constant 0 : index
    %c0_36 = arith.constant 0 : index
    %55 = memref.load %arg6[%c0_35, %c0_36] : memref<1x1xf32, #tpu.memory_space<smem>>
    %56 = vector.broadcast %55 : f32 to vector<1x256xf32>
    %57 = arith.addf %54, %56 : vector<1x256xf32>
    %cst_37 = arith.constant 2.000000e+01 : f32
    %58 = vector.broadcast %cst_37 : f32 to vector<1x256xf32>
    %59 = arith.cmpf ogt, %57, %58 : vector<1x256xf32>
    %cst_38 = arith.constant 2.000000e+01 : f32
    %60 = vector.broadcast %cst_38 : f32 to vector<1x256xf32>
    %61 = arith.minimumf %57, %60 : vector<1x256xf32>
    %62 = math.exp %61 : vector<1x256xf32>
    %63 = math.log1p %62 : vector<1x256xf32>
    %64 = arith.select %59, %57, %63 : vector<1x256xi1>, vector<1x256xf32>
    %c0_39 = arith.constant 0 : index
    %c0_40 = arith.constant 0 : index
    %c0_41 = arith.constant 0 : index
    %65 = vector.load %arg7[%c0_39, %c0_40, %c0_41] : memref<1x1x256xf32, #tpu.memory_space<vmem>>, vector<1x1x256xf32>
    %66 = vector.shape_cast %65 : vector<1x1x256xf32> to vector<1x256xf32>
    %67 = vector.shape_cast %64 : vector<1x256xf32> to vector<1x1x256xf32>
    tpu.vector_store %arg7[%c0_39, %c0_40, %c0_41], %67 {strides = array<i32>} : memref<1x1x256xf32, #tpu.memory_space<vmem>>, vector<1x1x256xf32>,
    return
  }
  func.func @transform_0(%arg0: i32, %arg1: i32) -> (i32, i32, i32) {
    %c0_i32 = arith.constant 0 : i32
    %c0_i32_0 = arith.constant 0 : i32
    return %arg0, %c0_i32, %arg1 : i32, i32, i32
  }
  func.func @transform_1(%arg0: i32, %arg1: i32) -> (i32, i32) {
    %c0_i32 = arith.constant 0 : i32
    %c0_i32_0 = arith.constant 0 : i32
    %c0_i32_1 = arith.constant 0 : i32
    return %c0_i32, %c0_i32_0 : i32, i32
  }
  func.func @transform_2(%arg0: i32, %arg1: i32) -> (i32, i32) {
    %c0_i32 = arith.constant 0 : i32
    %c0_i32_0 = arith.constant 0 : i32
    %c0_i32_1 = arith.constant 0 : i32
    return %c0_i32, %c0_i32_0 : i32, i32
  }
  func.func @transform_3(%arg0: i32, %arg1: i32) -> (i32, i32) {
    %c0_i32 = arith.constant 0 : i32
    %c0_i32_0 = arith.constant 0 : i32
    %c0_i32_1 = arith.constant 0 : i32
    return %c0_i32, %c0_i32_0 : i32, i32
  }
  func.func @transform_4(%arg0: i32, %arg1: i32) -> (i32, i32) {
    %c0_i32 = arith.constant 0 : i32
    %c0_i32_0 = arith.constant 0 : i32
    %c0_i32_1 = arith.constant 0 : i32
    return %c0_i32, %c0_i32_0 : i32, i32
  }
  func.func @transform_5(%arg0: i32, %arg1: i32) -> (i32, i32, i32) {
    %c0_i32 = arith.constant 0 : i32
    %c0_i32_0 = arith.constant 0 : i32
    return %arg0, %c0_i32, %arg1 : i32, i32, i32
  }
}

</mosaic_0001>

<llo_original>
// kernel: _spatial_attention_call.1
$region0: #{_spatial_attention_call.1}
  #allocation0 [shape = 'u32[]', space=smem, size = 0x4, offset = 0x4, fixed_abs, tag = 'smem constant byte address 0x4 - core index']
  #allocation1 [shape = 'u32[144,128]{1,0:T(1,128)}', space=vmem, size = 0x12000, scoped, tag = 'internal scratch']
  #allocation2 [shape = 'f32[1,1]{1,0:T(1,128)S(6)}', space=smem, size = 0x200, scoped, tag = 'scoped memory for _spatial_attention_call.1']
  %s0 = inlined_call_operand.vmem [shape: f32[2,4,256], index: 0, kind: input, shape index: {}]
  %s1 = inlined_call_operand.vmem [shape: f32[512,4], index: 1, kind: input, shape index: {}]
  %s2 = inlined_call_operand.vmem [shape: f32[512,1], index: 2, kind: input, shape index: {}]
  %s3 = inlined_call_operand.vmem [shape: f32[512,1], index: 3, kind: input, shape index: {}]
  %s4 = inlined_call_operand.<no memory space> [shape: f32[1,1], index: 4, kind: input, shape index: {}]
  %s5 = inlined_call_operand.hbm [shape: f32[2,1,256], index: 5, kind: output, shape index: {}]
  %s6 = sld [smem:[#allocation0]]
  $region53: #{_spatial_attention_call.1} parent=0
    _
  %s8 = ssub.s32 1, %s6
  %s9 = scalar_select 0, %s8, %s6
  %10 = sst [smem:[#allocation2]] %s4
  $region1: #{_spatial_attention_call.1} parent=0
    #allocation3 [shape = 'u8[2048]{0}', space=vmem, size = 0x800, scoped, tag = 'output window, operand 0']
    #allocation4 [shape = 's32[2]{0}', space=sflag, size = 0x8, scoped, tag = 'scoped memory for _spatial_attention_call.1']
    %11 = vsyncpa [#allocation4], 0
    %s12 = scalar_lea.sflag [#allocation4], 1
    %13 = vsyncpa %s12, 0
    loop: start=0, step=1, limit=4
    $region2: #{_spatial_attention_call.1} parent=1 // loop_pre_header
      _
    $region3: #{_spatial_attention_call.1} parent=1 // loop_header
      %s15 = sphi 0, %s19
      %p16 = scmp.ge.s32.totalorder %s15, 4
      %s22 = sphi 0, %s34
      %s23 = sphi 0, %s30
      %s24 = sphi 0, %s22
      %s25 = sphi 0, %s23
      %s26 = sphi 0, %s24
      %s27 = sphi 0, %s25
      %s39 = sphi 0, %s41
      %s42 = sphi 0, %s39
      %s43 = sphi 0, %s42
      %s59 = sphi 0, %s43
      %s63 = sphi 0, %s63
      %s65 = sphi 0, %s63
      %s66 = sphi 0, %s65
      %s80 = sphi 0, %s66
      %s84 = sphi 0, %s84
      %s86 = sphi 0, %s84
      %s87 = sphi 0, %s86
      %s101 = sphi 0, %s87
      %s105 = sphi 0, %s105
      %s107 = sphi 0, %s105
      %s108 = sphi 0, %s107
      %s122 = sphi 0, %s108
      %s126 = sphi 0, %s126
      %s128 = sphi 0, %s126
      %s129 = sphi 0, %s128
      %s143 = sphi 0, %s129
      %s151 = sphi 0, %s153
      %s154 = sphi 0, %s151
      %s155 = sphi 0, %s154
      %s171 = sphi 0, %s155
    $region4: #{_spatial_attention_call.1} parent=1 // loop_header_branch
      %18 = sbr.rel (%p16) target = $region8
    $region5: #{_spatial_attention_call.1} parent=1 // loop_body
      %s20 = ssub.s32 %s15, 1
      %s21 = ssub.s32 %s15, 2
      %s28 = sadd.s32 1, %s23
      %p29 = scmp.ge.s32.totalorder %s28, 1
      %s30 = scalar_select %p29, 0, %s28
      %s31 = sadd.s32 1, %s22
      %s32 = scalar_select %p29, %s31, %s22
      %p33 = scmp.ge.s32.totalorder %s32, 2
      %s34 = scalar_select %p33, 0, %s32
      %s35 = ssub.s32 %s22, %s34
      %s36 = ssub.s32 %s23, %s30
      %s37 = sor.u32 %s35, %s36
      %p38 = scmp.eq.s32.totalorder %s37, 0
      %s40 = sadd.s32 %s39, 1
      %s41 = scalar_select %p38, %s39, %s40
      %p44 = pneg %p38
      %p45 = scmp.eq.s32.totalorder %s15, 1
      %p46 = por %p44, %p45
      %p47 = scmp.ne.s32.totalorder %s39, %s42
      %p48 = scmp.eq.s32.totalorder %s15, 0
      %p49 = por %p47, %p48
      %p50 = scmp.ne.s32.totalorder %s39, %s42
      %p51 = scmp.eq.s32.totalorder %s20, 1
      %p52 = por %p50, %p51
      %p53 = scmp.ne.s32.totalorder %s42, %s43
      %p54 = scmp.eq.s32.totalorder %s20, 0
      %p55 = por %p53, %p54
      %p56 = scmp.ne.s32.totalorder %s42, %s43
      %p57 = scmp.eq.s32.totalorder %s21, 1
      %p58 = por %p56, %p57
      %p60 = scmp.ne.s32.totalorder %s43, %s59
      %p61 = scmp.eq.s32.totalorder %s21, 0
      %p62 = por %p60, %p61
      %s64 = sadd.s32 %s63, 1
      %p67 = scmp.eq.s32.totalorder %s15, 1
      %p68 = scmp.ne.s32.totalorder %s63, %s65
      %p69 = scmp.eq.s32.totalorder %s15, 0
      %p70 = por %p68, %p69
      %p71 = scmp.ne.s32.totalorder %s63, %s65
      %p72 = scmp.eq.s32.totalorder %s20, 1
      %p73 = por %p71, %p72
      %p74 = scmp.ne.s32.totalorder %s65, %s66
      %p75 = scmp.eq.s32.totalorder %s20, 0
      %p76 = por %p74, %p75
      %p77 = scmp.ne.s32.totalorder %s65, %s66
      %p78 = scmp.eq.s32.totalorder %s21, 1
      %p79 = por %p77, %p78
      %p81 = scmp.ne.s32.totalorder %s66, %s80
      %p82 = scmp.eq.s32.totalorder %s21, 0
      %p83 = por %p81, %p82
      %s85 = sadd.s32 %s84, 1
      %p88 = scmp.eq.s32.totalorder %s15, 1
      %p89 = scmp.ne.s32.totalorder %s84, %s86
      %p90 = scmp.eq.s32.totalorder %s15, 0
      %p91 = por %p89, %p90
      %p92 = scmp.ne.s32.totalorder %s84, %s86
      %p93 = scmp.eq.s32.totalorder %s20, 1
      %p94 = por %p92, %p93
      %p95 = scmp.ne.s32.totalorder %s86, %s87
      %p96 = scmp.eq.s32.totalorder %s20, 0
      %p97 = por %p95, %p96
      %p98 = scmp.ne.s32.totalorder %s86, %s87
      %p99 = scmp.eq.s32.totalorder %s21, 1
      %p100 = por %p98, %p99
      %p102 = scmp.ne.s32.totalorder %s87, %s101
      %p103 = scmp.eq.s32.totalorder %s21, 0
      %p104 = por %p102, %p103
      %s106 = sadd.s32 %s105, 1
      %p109 = scmp.eq.s32.totalorder %s15, 1
      %p110 = scmp.ne.s32.totalorder %s105, %s107
      %p111 = scmp.eq.s32.totalorder %s15, 0
      %p112 = por %p110, %p111
      %p113 = scmp.ne.s32.totalorder %s105, %s107
      %p114 = scmp.eq.s32.totalorder %s20, 1
      %p115 = por %p113, %p114
      %p116 = scmp.ne.s32.totalorder %s107, %s108
      %p117 = scmp.eq.s32.totalorder %s20, 0
      %p118 = por %p116, %p117
      %p119 = scmp.ne.s32.totalorder %s107, %s108
      %p120 = scmp.eq.s32.totalorder %s21, 1
      %p121 = por %p119, %p120
      %p123 = scmp.ne.s32.totalorder %s108, %s122
      %p124 = scmp.eq.s32.totalorder %s21, 0
      %p125 = por %p123, %p124
      %s127 = sadd.s32 %s126, 1
      %p130 = scmp.eq.s32.totalorder %s15, 1
      %p131 = scmp.ne.s32.totalorder %s126, %s128
      %p132 = scmp.eq.s32.totalorder %s15, 0
      %p133 = por %p131, %p132
      %p134 = scmp.ne.s32.totalorder %s126, %s128
      %p135 = scmp.eq.s32.totalorder %s20, 1
      %p136 = por %p134, %p135
      %p137 = scmp.ne.s32.totalorder %s128, %s129
      %p138 = scmp.eq.s32.totalorder %s20, 0
      %p139 = por %p137, %p138
      %p140 = scmp.ne.s32.totalorder %s128, %s129
      %p141 = scmp.eq.s32.totalorder %s21, 1
      %p142 = por %p140, %p141
      %p144 = scmp.ne.s32.totalorder %s129, %s143
      %p145 = scmp.eq.s32.totalorder %s21, 0
      %p146 = por %p144, %p145
      %s147 = ssub.s32 %s22, %s34
      %s148 = ssub.s32 %s23, %s30
      %s149 = sor.u32 %s147, %s148
      %p150 = scmp.eq.s32.totalorder %s149, 0
      %s152 = sadd.s32 %s151, 1
      %s153 = scalar_select %p150, %s151, %s152
      %p156 = pneg %p150
      %p157 = scmp.eq.s32.totalorder %s15, 1
      %p158 = por %p156, %p157
      %p159 = scmp.ne.s32.totalorder %s151, %s154
      %p160 = scmp.eq.s32.totalorder %s15, 0
      %p161 = por %p159, %p160
      %p162 = scmp.ne.s32.totalorder %s151, %s154
      %p163 = scmp.eq.s32.totalorder %s20, 1
      %p164 = por %p162, %p163
      %p165 = scmp.ne.s32.totalorder %s154, %s155
      %p166 = scmp.eq.s32.totalorder %s20, 0
      %p167 = por %p165, %p166
      %p168 = scmp.ne.s32.totalorder %s154, %s155
      %p169 = scmp.eq.s32.totalorder %s21, 1
      %p170 = por %p168, %p169
      %p172 = scmp.ne.s32.totalorder %s155, %s171
      %p173 = scmp.eq.s32.totalorder %s21, 0
      %p174 = por %p172, %p173
      %p175 = scmp.le.s32.totalorder 1, %s15
      %p176 = scmp.lt.s32.totalorder %s15, 3
      %p177 = pnand %p175, %p176
      %p178 = pneg %p177
      // Predicated region
      $region9: #{_spatial_attention_call.1} parent=5 // pred_check
        _
      $region10: #{_spatial_attention_call.1} parent=5 // pred_check_branch
        %180 = sbr.rel (%p177) target = $region12
      $region11: #{_spatial_attention_call.1} parent=5 // pred_region
        %s181 = ssub.s32 %s15, 1
        // Predicated region
        $region13: #{_spatial_attention_call.1} parent=11 // pred_check
          %p182 = pneg %p76
        $region14: #{_spatial_attention_call.1} parent=11 // pred_check_branch
          %184 = sbr.rel (%p182) target = $region16
        $region15: #{_spatial_attention_call.1} parent=11 // pred_region
          _
        $region16: #{_spatial_attention_call.1} parent=11 // pred_fallthru
          _
        // Predicated region
        $region17: #{_spatial_attention_call.1} parent=11 // pred_check
          %p185 = pneg %p97
        $region18: #{_spatial_attention_call.1} parent=11 // pred_check_branch
          %187 = sbr.rel (%p185) target = $region20
        $region19: #{_spatial_attention_call.1} parent=11 // pred_region
          _
        $region20: #{_spatial_attention_call.1} parent=11 // pred_fallthru
          _
        // Predicated region
        $region21: #{_spatial_attention_call.1} parent=11 // pred_check
          %p188 = pneg %p118
        $region22: #{_spatial_attention_call.1} parent=11 // pred_check_branch
          %190 = sbr.rel (%p188) target = $region24
        $region23: #{_spatial_attention_call.1} parent=11 // pred_region
          _
        $region24: #{_spatial_attention_call.1} parent=11 // pred_fallthru
          _
        // Predicated region
        $region25: #{_spatial_attention_call.1} parent=11 // pred_check
          %p191 = pneg %p139
        $region26: #{_spatial_attention_call.1} parent=11 // pred_check_branch
          %193 = sbr.rel (%p191) target = $region28
        $region27: #{_spatial_attention_call.1} parent=11 // pred_region
          _
        $region28: #{_spatial_attention_call.1} parent=11 // pred_fallthru
          _
      $region12: #{_spatial_attention_call.1} parent=5 // pred_fallthru
        _
      %p194 = scmp.lt.s32.totalorder %s15, 2
      // Predicated region
      $region29: #{_spatial_attention_call.1} parent=5 // pred_check
        %p195 = pneg %p194
      $region30: #{_spatial_attention_call.1} parent=5 // pred_check_branch
        %197 = sbr.rel (%p195) target = $region32
      $region31: #{_spatial_attention_call.1} parent=5 // pred_region
        // Predicated region
        $region33: #{_spatial_attention_call.1} parent=31 // pred_check
          %p198 = pneg %p49
        $region34: #{_spatial_attention_call.1} parent=31 // pred_check_branch
          %200 = sbr.rel (%p198) target = $region36
        $region35: #{_spatial_attention_call.1} parent=31 // pred_region
          %s201 = smul.u32 2, %s23
          %p202 = scmp.lt.s32.totalorder %s22, 1
          %s203 = scalar_select %p202, %s22, 1
          %p204 = scmp.lt.s32.totalorder %s201, 1
          %s205 = scalar_select %p204, %s201, 1
          %s206 = smul.addr %s203, 2
          %s207 = sadd.s32 %s205, %s206
          %s208 = smul.addr %s207, 4
          %s209 = scalar_lea.vmem %s0, %s208
          %s210 = smul.u32 2, %s23
        $region36: #{_spatial_attention_call.1} parent=31 // pred_fallthru
          _
      $region32: #{_spatial_attention_call.1} parent=5 // pred_fallthru
        _
      %p211 = scmp.le.s32.totalorder 1, %s15
      %p212 = scmp.lt.s32.totalorder %s15, 3
      %p213 = pnand %p211, %p212
      %p214 = pneg %p213
      // Predicated region
      $region37: #{_spatial_attention_call.1} parent=5 // pred_check
        _
      $region38: #{_spatial_attention_call.1} parent=5 // pred_check_branch
        %216 = sbr.rel (%p213) target = $region40
      $region39: #{_spatial_attention_call.1} parent=5 // pred_region
        %s217 = ssub.s32 %s15, 1
        %s218 = smul.u32 2, %s25
        %p219 = scmp.lt.s32.totalorder %s24, 1
        %s220 = scalar_select %p219, %s24, 1
        %p221 = scmp.lt.s32.totalorder %s218, 1
        %s222 = scalar_select %p221, %s218, 1
        %s223 = smul.addr %s220, 2
        %s224 = sadd.s32 %s222, %s223
        %s225 = smul.addr %s224, 4
        %s226 = scalar_lea.vmem %s0, %s225
        %p227 = pneg %p55
        %p228 = pneg %p52
        %p229 = pneg %p76
        %p230 = pneg %p73
        %p231 = pneg %p97
        %p232 = pneg %p94
        %p233 = pneg %p118
        %p234 = pneg %p115
        %p235 = pneg %p139
        %p236 = pneg %p136
        %p237 = pneg %p167
        %p238 = pneg %p164
        %s239 = sand.u32 %s154, 1
        %s240 = scalar_lea.sflag [#allocation4], %s239
        %s241 = sand.u32 %s154, 1
        %s242 = smul.addr %s241, 2
        %s243 = scalar_lea.vmem [#allocation3], %s242
        %s244 = smul.u32 2, %s25
        %p245 = scmp.lt.s32.totalorder %s24, 1
        %s246 = scalar_select %p245, %s24, 1
        %p247 = scmp.lt.s32.totalorder %s244, 1
        %s248 = scalar_select %p247, %s244, 1
        %s249 = smul.addr %s246, 2
        %s250 = sadd.s32 %s248, %s249
        %s251 = smul.addr %s250, 4
        %s252 = scalar_lea.vmem %s0, %s251
        %s253 = smul.u32 2, %s25
        %s254 = smul.u32 2, %s25
        %v255 = vld [vmem:[%s252] sm:$0xff]
        %v256 = vld [vmem:[%s1] sm:$0xff]
        %v257 = vld [vmem:[%s1 + $0x8] sm:$0xff]
        %v258 = vld [vmem:[%s1 + $0x10] sm:$0xff]
        %v259 = vld [vmem:[%s1 + $0x18] sm:$0xff]
        %v260 = vld [vmem:[%s1 + $0x20] sm:$0xff]
        %v261 = vld [vmem:[%s1 + $0x28] sm:$0xff]
        %v262 = vld [vmem:[%s1 + $0x30] sm:$0xff]
        %v263 = vld [vmem:[%s1 + $0x38] sm:$0xff]
        %v264 = vld [vmem:[%s1 + $0x40] sm:$0xff]
        %v265 = vld [vmem:[%s1 + $0x48] sm:$0xff]
        %v266 = vld [vmem:[%s1 + $0x50] sm:$0xff]
        %v267 = vld [vmem:[%s1 + $0x58] sm:$0xff]
        %v268 = vld [vmem:[%s1 + $0x60] sm:$0xff]
        %v269 = vld [vmem:[%s1 + $0x68] sm:$0xff]
        %v270 = vld [vmem:[%s1 + $0x70] sm:$0xff]
        %v271 = vld [vmem:[%s1 + $0x78] sm:$0xff]
        %v272 = vld [vmem:[%s2] sm:$0xff]
        %v273 = vld [vmem:[%s2 + $0x8] sm:$0xff]
        %v274 = vld [vmem:[%s2 + $0x10] sm:$0xff]
        %v275 = vld [vmem:[%s2 + $0x18] sm:$0xff]
        %v276 = vld [vmem:[%s2 + $0x20] sm:$0xff]
        %v277 = vld [vmem:[%s2 + $0x28] sm:$0xff]
        %v278 = vld [vmem:[%s2 + $0x30] sm:$0xff]
        %v279 = vld [vmem:[%s2 + $0x38] sm:$0xff]
        %v280 = vld [vmem:[%s2 + $0x40] sm:$0xff]
        %v281 = vld [vmem:[%s2 + $0x48] sm:$0xff]
        %v282 = vld [vmem:[%s2 + $0x50] sm:$0xff]
        %v283 = vld [vmem:[%s2 + $0x58] sm:$0xff]
        %v284 = vld [vmem:[%s2 + $0x60] sm:$0xff]
        %v285 = vld [vmem:[%s2 + $0x68] sm:$0xff]
        %v286 = vld [vmem:[%s2 + $0x70] sm:$0xff]
        %v287 = vld [vmem:[%s2 + $0x78] sm:$0xff]
        %289 = vset.pattern.permute.xlu0 0
        %290 = vperm.xlu0 %289, %v272
        %v291 = vpop.permute.xlu0 %290
        %294 = vset.pattern.permute.xlu0 0
        %295 = vperm.xlu0 %294, %v273
        %v296 = vpop.permute.xlu0 %295
        %299 = vset.pattern.permute.xlu0 0
        %300 = vperm.xlu0 %299, %v274
        %v301 = vpop.permute.xlu0 %300
        %304 = vset.pattern.permute.xlu0 0
        %305 = vperm.xlu0 %304, %v275
        %v306 = vpop.permute.xlu0 %305
        %309 = vset.pattern.permute.xlu0 0
        %310 = vperm.xlu0 %309, %v276
        %v311 = vpop.permute.xlu0 %310
        %314 = vset.pattern.permute.xlu0 0
        %315 = vperm.xlu0 %314, %v277
        %v316 = vpop.permute.xlu0 %315
        %319 = vset.pattern.permute.xlu0 0
        %320 = vperm.xlu0 %319, %v278
        %v321 = vpop.permute.xlu0 %320
        %324 = vset.pattern.permute.xlu0 0
        %325 = vperm.xlu0 %324, %v279
        %v326 = vpop.permute.xlu0 %325
        %329 = vset.pattern.permute.xlu0 0
        %330 = vperm.xlu0 %329, %v280
        %v331 = vpop.permute.xlu0 %330
        %334 = vset.pattern.permute.xlu0 0
        %335 = vperm.xlu0 %334, %v281
        %v336 = vpop.permute.xlu0 %335
        %339 = vset.pattern.permute.xlu0 0
        %340 = vperm.xlu0 %339, %v282
        %v341 = vpop.permute.xlu0 %340
        %344 = vset.pattern.permute.xlu0 0
        %345 = vperm.xlu0 %344, %v283
        %v346 = vpop.permute.xlu0 %345
        %349 = vset.pattern.permute.xlu0 0
        %350 = vperm.xlu0 %349, %v284
        %v351 = vpop.permute.xlu0 %350
        %354 = vset.pattern.permute.xlu0 0
        %355 = vperm.xlu0 %354, %v285
        %v356 = vpop.permute.xlu0 %355
        %359 = vset.pattern.permute.xlu0 0
        %360 = vperm.xlu0 %359, %v286
        %v361 = vpop.permute.xlu0 %360
        %364 = vset.pattern.permute.xlu0 0
        %365 = vperm.xlu0 %364, %v287
        %v366 = vpop.permute.xlu0 %365
        %v369 = vcombine.high %v255, %v255
        %vm370 = vcmask 31744
        %v372 = vsel %vm370, %v256, 0
        %v375 = vsel %vm370, %v257, 0
        %v378 = vsel %vm370, %v258, 0
        %v381 = vsel %vm370, %v259, 0
        %v384 = vsel %vm370, %v260, 0
        %v387 = vsel %vm370, %v261, 0
        %v390 = vsel %vm370, %v262, 0
        %v393 = vsel %vm370, %v263, 0
        %v396 = vsel %vm370, %v264, 0
        %v399 = vsel %vm370, %v265, 0
        %v402 = vsel %vm370, %v266, 0
        %v405 = vsel %vm370, %v267, 0
        %v408 = vsel %vm370, %v268, 0
        %v411 = vsel %vm370, %v269, 0
        %v414 = vsel %vm370, %v270, 0
        %v417 = vsel %vm370, %v271, 0
        %vm419 = vcmask 1043456
        %v420 = vsel %vm419, %v255, 0
        %v422 = vsel %vm419, %v369, 0
        %424 = vmatprep.subr.mxu0 %v422
        %425 = vmatpush1.msra.mxu0 %v420
        %426 = vmatprep.subr.mxu0 0.0
        %427 = vmatpush1.msra.mxu0 0.0
        %428 = vmatprep.subr.mxu0 0.0
        %429 = vmatpush1.msra.mxu0 0.0
        %430 = vmatprep.subr.mxu0 0.0
        %431 = vmatpush1.msra.mxu0 0.0
        %432 = vmatprep.subr.mxu0 0.0
        %433 = vmatpush1.msra.mxu0 0.0
        %434 = vmatprep.subr.mxu0 0.0
        %435 = vmatpush1.msra.mxu0 0.0
        %436 = vmatprep.subr.mxu0 0.0
        %437 = vmatpush1.msra.mxu0 0.0
        %438 = vmatprep.subr.mxu0 0.0
        %439 = vmatpush1.msra.mxu0 0.0
        %440 = vmatprep.subr.mxu0 0.0
        %441 = vmatpush1.msra.mxu0 0.0
        %442 = vmatprep.subr.mxu0 0.0
        %443 = vmatpush1.msra.mxu0 0.0
        %444 = vmatprep.subr.mxu0 0.0
        %445 = vmatpush1.msra.mxu0 0.0
        %446 = vmatprep.subr.mxu0 0.0
        %447 = vmatpush1.msra.mxu0 0.0
        %448 = vmatprep.subr.mxu0 0.0
        %449 = vmatpush1.msra.mxu0 0.0
        %450 = vmatprep.subr.mxu0 0.0
        %451 = vmatpush1.msra.mxu0 0.0
        %452 = vmatprep.subr.mxu0 0.0
        %453 = vmatpush1.msra.mxu0 0.0
        %454 = vmatprep.subr.mxu0 0.0
        %455 = vmatpush1.msra.mxu0 0.0
        %456 = vmatprep.subr.mxu0 0.0
        %457 = vmatpush1.msra.mxu0 0.0
        %458 = vmatprep.subr.mxu0 0.0
        %459 = vmatpush1.msra.mxu0 0.0
        %460 = vmatprep.subr.mxu0 0.0
        %461 = vmatpush1.msra.mxu0 0.0
        %462 = vmatprep.subr.mxu0 0.0
        %463 = vmatpush1.msra.mxu0 0.0
        %464 = vmatprep.subr.mxu0 0.0
        %465 = vmatpush1.msra.mxu0 0.0
        %466 = vmatprep.subr.mxu0 0.0
        %467 = vmatpush1.msra.mxu0 0.0
        %468 = vmatprep.subr.mxu0 0.0
        %469 = vmatpush1.msra.mxu0 0.0
        %470 = vmatprep.subr.mxu0 0.0
        %471 = vmatpush1.msra.mxu0 0.0
        %472 = vmatprep.subr.mxu0 0.0
        %473 = vmatpush1.msra.mxu0 0.0
        %474 = vmatprep.subr.mxu0 0.0
        %475 = vmatpush1.msra.mxu0 0.0
        %476 = vmatprep.subr.mxu0 0.0
        %477 = vmatpush1.msra.mxu0 0.0
        %478 = vmatprep.subr.mxu0 0.0
        %479 = vmatpush1.msra.mxu0 0.0
        %480 = vmatprep.subr.mxu0 0.0
        %481 = vmatpush1.msra.mxu0 0.0
        %482 = vmatprep.subr.mxu0 0.0
        %483 = vmatpush1.msra.mxu0 0.0
        %484 = vmatprep.subr.mxu0 0.0
        %485 = vmatpush1.msra.mxu0 0.0
        %486 = vmatprep.subr.mxu0 0.0
        %487 = vmatpush1.msra.mxu0 0.0
        %488 = vmatprep.mubr.f32.mxu0 0.0
        %489 = vmatmul.mubr.f32.gmra.mrb[0].mxu0 %v372
        %v490 = vpop.f32.mrb[0].mxu0
        %v491 = vadd.f32 %v291, %v490
        %v492 = vpop.f32.mrb[0].mxu0
        %v493 = vadd.f32 %v291, %v492
        %494 = vmatprep.mubr.f32.mxu0 0.0
        %495 = vmatmul.mubr.f32.gmra.mrb[0].mxu0 %v375
        %v496 = vpop.f32.mrb[0].mxu0
        %v497 = vadd.f32 %v296, %v496
        %v498 = vpop.f32.mrb[0].mxu0
        %v499 = vadd.f32 %v296, %v498
        %500 = vmatprep.mubr.f32.mxu0 0.0
        %501 = vmatmul.mubr.f32.gmra.mrb[0].mxu0 %v378
        %v502 = vpop.f32.mrb[0].mxu0
        %v503 = vadd.f32 %v301, %v502
        %v504 = vpop.f32.mrb[0].mxu0
        %v505 = vadd.f32 %v301, %v504
        %506 = vmatprep.mubr.f32.mxu0 0.0
        %507 = vmatmul.mubr.f32.gmra.mrb[0].mxu0 %v381
        %v508 = vpop.f32.mrb[0].mxu0
        %v509 = vadd.f32 %v306, %v508
        %v510 = vpop.f32.mrb[0].mxu0
        %v511 = vadd.f32 %v306, %v510
        %512 = vmatprep.mubr.f32.mxu0 0.0
        %513 = vmatmul.mubr.f32.gmra.mrb[0].mxu0 %v384
        %v514 = vpop.f32.mrb[0].mxu0
        %v515 = vadd.f32 %v311, %v514
        %v516 = vpop.f32.mrb[0].mxu0
        %v517 = vadd.f32 %v311, %v516
        %518 = vmatprep.mubr.f32.mxu0 0.0
        %519 = vmatmul.mubr.f32.gmra.mrb[0].mxu0 %v387
        %v520 = vpop.f32.mrb[0].mxu0
        %v521 = vadd.f32 %v316, %v520
        %v522 = vpop.f32.mrb[0].mxu0
        %v523 = vadd.f32 %v316, %v522
        %524 = vmatprep.mubr.f32.mxu0 0.0
        %525 = vmatmul.mubr.f32.gmra.mrb[0].mxu0 %v390
        %v526 = vpop.f32.mrb[0].mxu0
        %v527 = vadd.f32 %v321, %v526
        %v528 = vpop.f32.mrb[0].mxu0
        %v529 = vadd.f32 %v321, %v528
        %530 = vmatprep.mubr.f32.mxu0 0.0
        %531 = vmatmul.mubr.f32.gmra.mrb[0].mxu0 %v393
        %v532 = vpop.f32.mrb[0].mxu0
        %v533 = vadd.f32 %v326, %v532
        %v534 = vpop.f32.mrb[0].mxu0
        %v535 = vadd.f32 %v326, %v534
        %536 = vmatprep.mubr.f32.mxu0 0.0
        %537 = vmatmul.mubr.f32.gmra.mrb[0].mxu0 %v396
        %v538 = vpop.f32.mrb[0].mxu0
        %v539 = vadd.f32 %v331, %v538
        %v540 = vpop.f32.mrb[0].mxu0
        %v541 = vadd.f32 %v331, %v540
        %542 = vmatprep.mubr.f32.mxu0 0.0
        %543 = vmatmul.mubr.f32.gmra.mrb[0].mxu0 %v399
        %v544 = vpop.f32.mrb[0].mxu0
        %v545 = vadd.f32 %v336, %v544
        %v546 = vpop.f32.mrb[0].mxu0
        %v547 = vadd.f32 %v336, %v546
        %548 = vmatprep.mubr.f32.mxu0 0.0
        %549 = vmatmul.mubr.f32.gmra.mrb[0].mxu0 %v402
        %v550 = vpop.f32.mrb[0].mxu0
        %v551 = vadd.f32 %v341, %v550
        %v552 = vpop.f32.mrb[0].mxu0
        %v553 = vadd.f32 %v341, %v552
        %554 = vmatprep.mubr.f32.mxu0 0.0
        %555 = vmatmul.mubr.f32.gmra.mrb[0].mxu0 %v405
        %v556 = vpop.f32.mrb[0].mxu0
        %v557 = vadd.f32 %v346, %v556
        %v558 = vpop.f32.mrb[0].mxu0
        %v559 = vadd.f32 %v346, %v558
        %560 = vmatprep.mubr.f32.mxu0 0.0
        %561 = vmatmul.mubr.f32.gmra.mrb[0].mxu0 %v408
        %v562 = vpop.f32.mrb[0].mxu0
        %v563 = vadd.f32 %v351, %v562
        %v564 = vpop.f32.mrb[0].mxu0
        %v565 = vadd.f32 %v351, %v564
        %566 = vmatprep.mubr.f32.mxu0 0.0
        %567 = vmatmul.mubr.f32.gmra.mrb[0].mxu0 %v411
        %v568 = vpop.f32.mrb[0].mxu0
        %v569 = vadd.f32 %v356, %v568
        %v570 = vpop.f32.mrb[0].mxu0
        %v571 = vadd.f32 %v356, %v570
        %572 = vmatprep.mubr.f32.mxu0 0.0
        %573 = vmatmul.mubr.f32.gmra.mrb[0].mxu0 %v414
        %v574 = vpop.f32.mrb[0].mxu0
        %v575 = vadd.f32 %v361, %v574
        %v576 = vpop.f32.mrb[0].mxu0
        %v577 = vadd.f32 %v361, %v576
        %578 = vmatprep.mubr.f32.mxu0 0.0
        %579 = vmatmul.mubr.f32.gmra.mrb[0].mxu0 %v417
        %v580 = vpop.f32.mrb[0].mxu0
        %v581 = vadd.f32 %v366, %v580
        %v582 = vpop.f32.mrb[0].mxu0
        %v583 = vadd.f32 %v366, %v582
        %584 = vdwg.mxu0
        %v585 = vmax.f32 %v491, 0.0
        %v586 = vmax.f32 %v493, 0.0
        %v587 = vmax.f32 %v497, 0.0
        %v588 = vmax.f32 %v499, 0.0
        %v589 = vmax.f32 %v503, 0.0
        %v590 = vmax.f32 %v505, 0.0
        %v591 = vmax.f32 %v509, 0.0
        %v592 = vmax.f32 %v511, 0.0
        %v593 = vmax.f32 %v515, 0.0
        %v594 = vmax.f32 %v517, 0.0
        %v595 = vmax.f32 %v521, 0.0
        %v596 = vmax.f32 %v523, 0.0
        %v597 = vmax.f32 %v527, 0.0
        %v598 = vmax.f32 %v529, 0.0
        %v599 = vmax.f32 %v533, 0.0
        %v600 = vmax.f32 %v535, 0.0
        %v601 = vmax.f32 %v539, 0.0
        %v602 = vmax.f32 %v541, 0.0
        %v603 = vmax.f32 %v545, 0.0
        %v604 = vmax.f32 %v547, 0.0
        %v605 = vmax.f32 %v551, 0.0
        %v606 = vmax.f32 %v553, 0.0
        %v607 = vmax.f32 %v557, 0.0
        %v608 = vmax.f32 %v559, 0.0
        %v609 = vmax.f32 %v563, 0.0
        %v610 = vmax.f32 %v565, 0.0
        %v611 = vmax.f32 %v569, 0.0
        %v612 = vmax.f32 %v571, 0.0
        %v613 = vmax.f32 %v575, 0.0
        %v614 = vmax.f32 %v577, 0.0
        %v615 = vmax.f32 %v581, 0.0
        %v616 = vmax.f32 %v583, 0.0
        %v617 = vld [vmem:[%s3] sm:$0xff]
        %v618 = vld [vmem:[%s3 + $0x8] sm:$0xff]
        %v619 = vld [vmem:[%s3 + $0x10] sm:$0xff]
        %v620 = vld [vmem:[%s3 + $0x18] sm:$0xff]
        %v621 = vld [vmem:[%s3 + $0x20] sm:$0xff]
        %v622 = vld [vmem:[%s3 + $0x28] sm:$0xff]
        %v623 = vld [vmem:[%s3 + $0x30] sm:$0xff]
        %v624 = vld [vmem:[%s3 + $0x38] sm:$0xff]
        %v625 = vld [vmem:[%s3 + $0x40] sm:$0xff]
        %v626 = vld [vmem:[%s3 + $0x48] sm:$0xff]
        %v627 = vld [vmem:[%s3 + $0x50] sm:$0xff]
        %v628 = vld [vmem:[%s3 + $0x58] sm:$0xff]
        %v629 = vld [vmem:[%s3 + $0x60] sm:$0xff]
        %v630 = vld [vmem:[%s3 + $0x68] sm:$0xff]
        %v631 = vld [vmem:[%s3 + $0x70] sm:$0xff]
        %v632 = vld [vmem:[%s3 + $0x78] sm:$0xff]
        %634 = vset.pattern.permute.xlu0 0
        %635 = vperm.xlu0 %634, %v617
        %v636 = vpop.permute.xlu0 %635
        %639 = vset.pattern.permute.xlu0 0
        %640 = vperm.xlu0 %639, %v618
        %v641 = vpop.permute.xlu0 %640
        %644 = vset.pattern.permute.xlu0 0
        %645 = vperm.xlu0 %644, %v619
        %v646 = vpop.permute.xlu0 %645
        %649 = vset.pattern.permute.xlu0 0
        %650 = vperm.xlu0 %649, %v620
        %v651 = vpop.permute.xlu0 %650
        %654 = vset.pattern.permute.xlu0 0
        %655 = vperm.xlu0 %654, %v621
        %v656 = vpop.permute.xlu0 %655
        %659 = vset.pattern.permute.xlu0 0
        %660 = vperm.xlu0 %659, %v622
        %v661 = vpop.permute.xlu0 %660
        %664 = vset.pattern.permute.xlu0 0
        %665 = vperm.xlu0 %664, %v623
        %v666 = vpop.permute.xlu0 %665
        %669 = vset.pattern.permute.xlu0 0
        %670 = vperm.xlu0 %669, %v624
        %v671 = vpop.permute.xlu0 %670
        %674 = vset.pattern.permute.xlu0 0
        %675 = vperm.xlu0 %674, %v625
        %v676 = vpop.permute.xlu0 %675
        %679 = vset.pattern.permute.xlu0 0
        %680 = vperm.xlu0 %679, %v626
        %v681 = vpop.permute.xlu0 %680
        %684 = vset.pattern.permute.xlu0 0
        %685 = vperm.xlu0 %684, %v627
        %v686 = vpop.permute.xlu0 %685
        %689 = vset.pattern.permute.xlu0 0
        %690 = vperm.xlu0 %689, %v628
        %v691 = vpop.permute.xlu0 %690
        %694 = vset.pattern.permute.xlu0 0
        %695 = vperm.xlu0 %694, %v629
        %v696 = vpop.permute.xlu0 %695
        %699 = vset.pattern.permute.xlu0 0
        %700 = vperm.xlu0 %699, %v630
        %v701 = vpop.permute.xlu0 %700
        %704 = vset.pattern.permute.xlu0 0
        %705 = vperm.xlu0 %704, %v631
        %v706 = vpop.permute.xlu0 %705
        %709 = vset.pattern.permute.xlu0 0
        %710 = vperm.xlu0 %709, %v632
        %v711 = vpop.permute.xlu0 %710
        %v713 = vmul.f32 %v585, %v636
        %v714 = vmul.f32 %v586, %v636
        %v715 = vmul.f32 %v587, %v641
        %v716 = vmul.f32 %v588, %v641
        %v717 = vmul.f32 %v589, %v646
        %v718 = vmul.f32 %v590, %v646
        %v719 = vmul.f32 %v591, %v651
        %v720 = vmul.f32 %v592, %v651
        %v721 = vmul.f32 %v593, %v656
        %v722 = vmul.f32 %v594, %v656
        %v723 = vmul.f32 %v595, %v661
        %v724 = vmul.f32 %v596, %v661
        %v725 = vmul.f32 %v597, %v666
        %v726 = vmul.f32 %v598, %v666
        %v727 = vmul.f32 %v599, %v671
        %v728 = vmul.f32 %v600, %v671
        %v729 = vmul.f32 %v601, %v676
        %v730 = vmul.f32 %v602, %v676
        %v731 = vmul.f32 %v603, %v681
        %v732 = vmul.f32 %v604, %v681
        %v733 = vmul.f32 %v605, %v686
        %v734 = vmul.f32 %v606, %v686
        %v735 = vmul.f32 %v607, %v691
        %v736 = vmul.f32 %v608, %v691
        %v737 = vmul.f32 %v609, %v696
        %v738 = vmul.f32 %v610, %v696
        %v739 = vmul.f32 %v611, %v701
        %v740 = vmul.f32 %v612, %v701
        %v741 = vmul.f32 %v613, %v706
        %v742 = vmul.f32 %v614, %v706
        %v743 = vmul.f32 %v615, %v711
        %v744 = vmul.f32 %v616, %v711
        %v745 = vadd.f32 %v713, %v715
        %v746 = vadd.f32 %v745, %v717
        %v747 = vadd.f32 %v746, %v719
        %v748 = vadd.f32 %v747, %v721
        %v749 = vadd.f32 %v748, %v723
        %v750 = vadd.f32 %v749, %v725
        %v751 = vadd.f32 %v750, %v727
        %v752 = vadd.f32 %v751, %v729
        %v753 = vadd.f32 %v752, %v731
        %v754 = vadd.f32 %v753, %v733
        %v755 = vadd.f32 %v754, %v735
        %v756 = vadd.f32 %v755, %v737
        %v757 = vadd.f32 %v756, %v739
        %v758 = vadd.f32 %v757, %v741
        %v759 = vadd.f32 %v758, %v743
        %v760 = vrot.slane %v759, 4
        %v761 = vadd.f32 %v759, %v760
        %v762 = vrot.slane %v761, 2
        %v763 = vadd.f32 %v761, %v762
        %v764 = vrot.slane %v763, 1
        %v765 = vadd.f32 %v763, %v764
        %v766 = vadd.f32 %v714, %v716
        %v767 = vadd.f32 %v766, %v718
        %v768 = vadd.f32 %v767, %v720
        %v769 = vadd.f32 %v768, %v722
        %v770 = vadd.f32 %v769, %v724
        %v771 = vadd.f32 %v770, %v726
        %v772 = vadd.f32 %v771, %v728
        %v773 = vadd.f32 %v772, %v730
        %v774 = vadd.f32 %v773, %v732
        %v775 = vadd.f32 %v774, %v734
        %v776 = vadd.f32 %v775, %v736
        %v777 = vadd.f32 %v776, %v738
        %v778 = vadd.f32 %v777, %v740
        %v779 = vadd.f32 %v778, %v742
        %v780 = vadd.f32 %v779, %v744
        %v781 = vrot.slane %v780, 4
        %v782 = vadd.f32 %v780, %v781
        %v783 = vrot.slane %v782, 2
        %v784 = vadd.f32 %v782, %v783
        %v785 = vrot.slane %v784, 1
        %v786 = vadd.f32 %v784, %v785
        %v787 = vadd.f32 %v765, 0.0
        %v788 = vadd.f32 %v786, 0.0
        %v789 = vld [vmem:[%s1 + $0x80] sm:$0xff]
        %v790 = vld [vmem:[%s1 + $0x88] sm:$0xff]
        %v791 = vld [vmem:[%s1 + $0x90] sm:$0xff]
        %v792 = vld [vmem:[%s1 + $0x98] sm:$0xff]
        %v793 = vld [vmem:[%s1 + $0xa0] sm:$0xff]
        %v794 = vld [vmem:[%s1 + $0xa8] sm:$0xff]
        %v795 = vld [vmem:[%s1 + $0xb0] sm:$0xff]
        %v796 = vld [vmem:[%s1 + $0xb8] sm:$0xff]
        %v797 = vld [vmem:[%s1 + $0xc0] sm:$0xff]
        %v798 = vld [vmem:[%s1 + $0xc8] sm:$0xff]
        %v799 = vld [vmem:[%s1 + $0xd0] sm:$0xff]
        %v800 = vld [vmem:[%s1 + $0xd8] sm:$0xff]
        %v801 = vld [vmem:[%s1 + $0xe0] sm:$0xff]
        %v802 = vld [vmem:[%s1 + $0xe8] sm:$0xff]
        %v803 = vld [vmem:[%s1 + $0xf0] sm:$0xff]
        %v804 = vld [vmem:[%s1 + $0xf8] sm:$0xff]
        %v805 = vld [vmem:[%s2 + $0x80] sm:$0xff]
        %v806 = vld [vmem:[%s2 + $0x88] sm:$0xff]
        %v807 = vld [vmem:[%s2 + $0x90] sm:$0xff]
        %v808 = vld [vmem:[%s2 + $0x98] sm:$0xff]
        %v809 = vld [vmem:[%s2 + $0xa0] sm:$0xff]
        %v810 = vld [vmem:[%s2 + $0xa8] sm:$0xff]
        %v811 = vld [vmem:[%s2 + $0xb0] sm:$0xff]
        %v812 = vld [vmem:[%s2 + $0xb8] sm:$0xff]
        %v813 = vld [vmem:[%s2 + $0xc0] sm:$0xff]
        %v814 = vld [vmem:[%s2 + $0xc8] sm:$0xff]
        %v815 = vld [vmem:[%s2 + $0xd0] sm:$0xff]
        %v816 = vld [vmem:[%s2 + $0xd8] sm:$0xff]
        %v817 = vld [vmem:[%s2 + $0xe0] sm:$0xff]
        %v818 = vld [vmem:[%s2 + $0xe8] sm:$0xff]
        %v819 = vld [vmem:[%s2 + $0xf0] sm:$0xff]
        %v820 = vld [vmem:[%s2 + $0xf8] sm:$0xff]
        %822 = vset.pattern.permute.xlu0 0
        %823 = vperm.xlu0 %822, %v805
        %v824 = vpop.permute.xlu0 %823
        %827 = vset.pattern.permute.xlu0 0
        %828 = vperm.xlu0 %827, %v806
        %v829 = vpop.permute.xlu0 %828
        %832 = vset.pattern.permute.xlu0 0
        %833 = vperm.xlu0 %832, %v807
        %v834 = vpop.permute.xlu0 %833
        %837 = vset.pattern.permute.xlu0 0
        %838 = vperm.xlu0 %837, %v808
        %v839 = vpop.permute.xlu0 %838
        %842 = vset.pattern.permute.xlu0 0
        %843 = vperm.xlu0 %842, %v809
        %v844 = vpop.permute.xlu0 %843
        %847 = vset.pattern.permute.xlu0 0
        %848 = vperm.xlu0 %847, %v810
        %v849 = vpop.permute.xlu0 %848
        %852 = vset.pattern.permute.xlu0 0
        %853 = vperm.xlu0 %852, %v811
        %v854 = vpop.permute.xlu0 %853
        %857 = vset.pattern.permute.xlu0 0
        %858 = vperm.xlu0 %857, %v812
        %v859 = vpop.permute.xlu0 %858
        %862 = vset.pattern.permute.xlu0 0
        %863 = vperm.xlu0 %862, %v813
        %v864 = vpop.permute.xlu0 %863
        %867 = vset.pattern.permute.xlu0 0
        %868 = vperm.xlu0 %867, %v814
        %v869 = vpop.permute.xlu0 %868
        %872 = vset.pattern.permute.xlu0 0
        %873 = vperm.xlu0 %872, %v815
        %v874 = vpop.permute.xlu0 %873
        %877 = vset.pattern.permute.xlu0 0
        %878 = vperm.xlu0 %877, %v816
        %v879 = vpop.permute.xlu0 %878
        %882 = vset.pattern.permute.xlu0 0
        %883 = vperm.xlu0 %882, %v817
        %v884 = vpop.permute.xlu0 %883
        %887 = vset.pattern.permute.xlu0 0
        %888 = vperm.xlu0 %887, %v818
        %v889 = vpop.permute.xlu0 %888
        %892 = vset.pattern.permute.xlu0 0
        %893 = vperm.xlu0 %892, %v819
        %v894 = vpop.permute.xlu0 %893
        %897 = vset.pattern.permute.xlu0 0
        %898 = vperm.xlu0 %897, %v820
        %v899 = vpop.permute.xlu0 %898
        %v902 = vsel %vm370, %v789, 0
        %v905 = vsel %vm370, %v790, 0
        %v908 = vsel %vm370, %v791, 0
        %v911 = vsel %vm370, %v792, 0
        %v914 = vsel %vm370, %v793, 0
        %v917 = vsel %vm370, %v794, 0
        %v920 = vsel %vm370, %v795, 0
        %v923 = vsel %vm370, %v796, 0
        %v926 = vsel %vm370, %v797, 0
        %v929 = vsel %vm370, %v798, 0
        %v932 = vsel %vm370, %v799, 0
        %v935 = vsel %vm370, %v800, 0
        %v938 = vsel %vm370, %v801, 0
        %v941 = vsel %vm370, %v802, 0
        %v944 = vsel %vm370, %v803, 0
        %v947 = vsel %vm370, %v804, 0
        %949 = vmatprep.subr.mxu0 %v422
        %950 = vmatpush1.msra.mxu0 %v420
        %951 = vmatprep.subr.mxu0 0.0
        %952 = vmatpush1.msra.mxu0 0.0
        %953 = vmatprep.subr.mxu0 0.0
        %954 = vmatpush1.msra.mxu0 0.0
        %955 = vmatprep.subr.mxu0 0.0
        %956 = vmatpush1.msra.mxu0 0.0
        %957 = vmatprep.subr.mxu0 0.0
        %958 = vmatpush1.msra.mxu0 0.0
        %959 = vmatprep.subr.mxu0 0.0
        %960 = vmatpush1.msra.mxu0 0.0
        %961 = vmatprep.subr.mxu0 0.0
        %962 = vmatpush1.msra.mxu0 0.0
        %963 = vmatprep.subr.mxu0 0.0
        %964 = vmatpush1.msra.mxu0 0.0
        %965 = vmatprep.subr.mxu0 0.0
        %966 = vmatpush1.msra.mxu0 0.0
        %967 = vmatprep.subr.mxu0 0.0
        %968 = vmatpush1.msra.mxu0 0.0
        %969 = vmatprep.subr.mxu0 0.0
        %970 = vmatpush1.msra.mxu0 0.0
        %971 = vmatprep.subr.mxu0 0.0
        %972 = vmatpush1.msra.mxu0 0.0
        %973 = vmatprep.subr.mxu0 0.0
        %974 = vmatpush1.msra.mxu0 0.0
        %975 = vmatprep.subr.mxu0 0.0
        %976 = vmatpush1.msra.mxu0 0.0
        %977 = vmatprep.subr.mxu0 0.0
        %978 = vmatpush1.msra.mxu0 0.0
        %979 = vmatprep.subr.mxu0 0.0
        %980 = vmatpush1.msra.mxu0 0.0
        %981 = vmatprep.subr.mxu0 0.0
        %982 = vmatpush1.msra.mxu0 0.0
        %983 = vmatprep.subr.mxu0 0.0
        %984 = vmatpush1.msra.mxu0 0.0
        %985 = vmatprep.subr.mxu0 0.0
        %986 = vmatpush1.msra.mxu0 0.0
        %987 = vmatprep.subr.mxu0 0.0
        %988 = vmatpush1.msra.mxu0 0.0
        %989 = vmatprep.subr.mxu0 0.0
        %990 = vmatpush1.msra.mxu0 0.0
        %991 = vmatprep.subr.mxu0 0.0
        %992 = vmatpush1.msra.mxu0 0.0
        %993 = vmatprep.subr.mxu0 0.0
        %994 = vmatpush1.msra.mxu0 0.0
        %995 = vmatprep.subr.mxu0 0.0
        %996 = vmatpush1.msra.mxu0 0.0
        %997 = vmatprep.subr.mxu0 0.0
        %998 = vmatpush1.msra.mxu0 0.0
        %999 = vmatprep.subr.mxu0 0.0
        %1000 = vmatpush1.msra.mxu0 0.0
        %1001 = vmatprep.subr.mxu0 0.0
        %1002 = vmatpush1.msra.mxu0 0.0
        %1003 = vmatprep.subr.mxu0 0.0
        %1004 = vmatpush1.msra.mxu0 0.0
        %1005 = vmatprep.subr.mxu0 0.0
        %1006 = vmatpush1.msra.mxu0 0.0
        %1007 = vmatprep.subr.mxu0 0.0
        %1008 = vmatpush1.msra.mxu0 0.0
        %1009 = vmatprep.subr.mxu0 0.0
        %1010 = vmatpush1.msra.mxu0 0.0
        %1011 = vmatprep.subr.mxu0 0.0
        %1012 = vmatpush1.msra.mxu0 0.0
        %1013 = vmatprep.mubr.f32.mxu0 0.0
        %1014 = vmatmul.mubr.f32.gmra.mrb[0].mxu0 %v902
        %v1015 = vpop.f32.mrb[0].mxu0
        %v1016 = vadd.f32 %v824, %v1015
        %v1017 = vpop.f32.mrb[0].mxu0
        %v1018 = vadd.f32 %v824, %v1017
        %1019 = vmatprep.mubr.f32.mxu0 0.0
        %1020 = vmatmul.mubr.f32.gmra.mrb[0].mxu0 %v905
        %v1021 = vpop.f32.mrb[0].mxu0
        %v1022 = vadd.f32 %v829, %v1021
        %v1023 = vpop.f32.mrb[0].mxu0
        %v1024 = vadd.f32 %v829, %v1023
        %1025 = vmatprep.mubr.f32.mxu0 0.0
        %1026 = vmatmul.mubr.f32.gmra.mrb[0].mxu0 %v908
        %v1027 = vpop.f32.mrb[0].mxu0
        %v1028 = vadd.f32 %v834, %v1027
        %v1029 = vpop.f32.mrb[0].mxu0
        %v1030 = vadd.f32 %v834, %v1029
        %1031 = vmatprep.mubr.f32.mxu0 0.0
        %1032 = vmatmul.mubr.f32.gmra.mrb[0].mxu0 %v911
        %v1033 = vpop.f32.mrb[0].mxu0
        %v1034 = vadd.f32 %v839, %v1033
        %v1035 = vpop.f32.mrb[0].mxu0
        %v1036 = vadd.f32 %v839, %v1035
        %1037 = vmatprep.mubr.f32.mxu0 0.0
        %1038 = vmatmul.mubr.f32.gmra.mrb[0].mxu0 %v914
        %v1039 = vpop.f32.mrb[0].mxu0
        %v1040 = vadd.f32 %v844, %v1039
        %v1041 = vpop.f32.mrb[0].mxu0
        %v1042 = vadd.f32 %v844, %v1041
        %1043 = vmatprep.mubr.f32.mxu0 0.0
        %1044 = vmatmul.mubr.f32.gmra.mrb[0].mxu0 %v917
        %v1045 = vpop.f32.mrb[0].mxu0
        %v1046 = vadd.f32 %v849, %v1045
        %v1047 = vpop.f32.mrb[0].mxu0
        %v1048 = vadd.f32 %v849, %v1047
        %1049 = vmatprep.mubr.f32.mxu0 0.0
        %1050 = vmatmul.mubr.f32.gmra.mrb[0].mxu0 %v920
        %v1051 = vpop.f32.mrb[0].mxu0
        %v1052 = vadd.f32 %v854, %v1051
        %v1053 = vpop.f32.mrb[0].mxu0
        %v1054 = vadd.f32 %v854, %v1053
        %1055 = vmatprep.mubr.f32.mxu0 0.0
        %1056 = vmatmul.mubr.f32.gmra.mrb[0].mxu0 %v923
        %v1057 = vpop.f32.mrb[0].mxu0
        %v1058 = vadd.f32 %v859, %v1057
        %v1059 = vpop.f32.mrb[0].mxu0
        %v1060 = vadd.f32 %v859, %v1059
        %1061 = vmatprep.mubr.f32.mxu0 0.0
        %1062 = vmatmul.mubr.f32.gmra.mrb[0].mxu0 %v926
        %v1063 = vpop.f32.mrb[0].mxu0
        %v1064 = vadd.f32 %v864, %v1063
        %v1065 = vpop.f32.mrb[0].mxu0
        %v1066 = vadd.f32 %v864, %v1065
        %1067 = vmatprep.mubr.f32.mxu0 0.0
        %1068 = vmatmul.mubr.f32.gmra.mrb[0].mxu0 %v929
        %v1069 = vpop.f32.mrb[0].mxu0
        %v1070 = vadd.f32 %v869, %v1069
        %v1071 = vpop.f32.mrb[0].mxu0
        %v1072 = vadd.f32 %v869, %v1071
        %1073 = vmatprep.mubr.f32.mxu0 0.0
        %1074 = vmatmul.mubr.f32.gmra.mrb[0].mxu0 %v932
        %v1075 = vpop.f32.mrb[0].mxu0
        %v1076 = vadd.f32 %v874, %v1075
        %v1077 = vpop.f32.mrb[0].mxu0
        %v1078 = vadd.f32 %v874, %v1077
        %1079 = vmatprep.mubr.f32.mxu0 0.0
        %1080 = vmatmul.mubr.f32.gmra.mrb[0].mxu0 %v935
        %v1081 = vpop.f32.mrb[0].mxu0
        %v1082 = vadd.f32 %v879, %v1081
        %v1083 = vpop.f32.mrb[0].mxu0
        %v1084 = vadd.f32 %v879, %v1083
        %1085 = vmatprep.mubr.f32.mxu0 0.0
        %1086 = vmatmul.mubr.f32.gmra.mrb[0].mxu0 %v938
        %v1087 = vpop.f32.mrb[0].mxu0
        %v1088 = vadd.f32 %v884, %v1087
        %v1089 = vpop.f32.mrb[0].mxu0
        %v1090 = vadd.f32 %v884, %v1089
        %1091 = vmatprep.mubr.f32.mxu0 0.0
        %1092 = vmatmul.mubr.f32.gmra.mrb[0].mxu0 %v941
        %v1093 = vpop.f32.mrb[0].mxu0
        %v1094 = vadd.f32 %v889, %v1093
        %v1095 = vpop.f32.mrb[0].mxu0
        %v1096 = vadd.f32 %v889, %v1095
        %1097 = vmatprep.mubr.f32.mxu0 0.0
        %1098 = vmatmul.mubr.f32.gmra.mrb[0].mxu0 %v944
        %v1099 = vpop.f32.mrb[0].mxu0
        %v1100 = vadd.f32 %v894, %v1099
        %v1101 = vpop.f32.mrb[0].mxu0
        %v1102 = vadd.f32 %v894, %v1101
        %1103 = vmatprep.mubr.f32.mxu0 0.0
        %1104 = vmatmul.mubr.f32.gmra.mrb[0].mxu0 %v947
        %v1105 = vpop.f32.mrb[0].mxu0
        %v1106 = vadd.f32 %v899, %v1105
        %v1107 = vpop.f32.mrb[0].mxu0
        %v1108 = vadd.f32 %v899, %v1107
        %1109 = vdwg.mxu0
        %v1110 = vmax.f32 %v1016, 0.0
        %v1111 = vmax.f32 %v1018, 0.0
        %v1112 = vmax.f32 %v1022, 0.0
        %v1113 = vmax.f32 %v1024, 0.0
        %v1114 = vmax.f32 %v1028, 0.0
        %v1115 = vmax.f32 %v1030, 0.0
        %v1116 = vmax.f32 %v1034, 0.0
        %v1117 = vmax.f32 %v1036, 0.0
        %v1118 = vmax.f32 %v1040, 0.0
        %v1119 = vmax.f32 %v1042, 0.0
        %v1120 = vmax.f32 %v1046, 0.0
        %v1121 = vmax.f32 %v1048, 0.0
        %v1122 = vmax.f32 %v1052, 0.0
        %v1123 = vmax.f32 %v1054, 0.0
        %v1124 = vmax.f32 %v1058, 0.0
        %v1125 = vmax.f32 %v1060, 0.0
        %v1126 = vmax.f32 %v1064, 0.0
        %v1127 = vmax.f32 %v1066, 0.0
        %v1128 = vmax.f32 %v1070, 0.0
        %v1129 = vmax.f32 %v1072, 0.0
        %v1130 = vmax.f32 %v1076, 0.0
        %v1131 = vmax.f32 %v1078, 0.0
        %v1132 = vmax.f32 %v1082, 0.0
        %v1133 = vmax.f32 %v1084, 0.0
        %v1134 = vmax.f32 %v1088, 0.0
        %v1135 = vmax.f32 %v1090, 0.0
        %v1136 = vmax.f32 %v1094, 0.0
        %v1137 = vmax.f32 %v1096, 0.0
        %v1138 = vmax.f32 %v1100, 0.0
        %v1139 = vmax.f32 %v1102, 0.0
        %v1140 = vmax.f32 %v1106, 0.0
        %v1141 = vmax.f32 %v1108, 0.0
        %v1142 = vld [vmem:[%s3 + $0x80] sm:$0xff]
        %v1143 = vld [vmem:[%s3 + $0x88] sm:$0xff]
        %v1144 = vld [vmem:[%s3 + $0x90] sm:$0xff]
        %v1145 = vld [vmem:[%s3 + $0x98] sm:$0xff]
        %v1146 = vld [vmem:[%s3 + $0xa0] sm:$0xff]
        %v1147 = vld [vmem:[%s3 + $0xa8] sm:$0xff]
        %v1148 = vld [vmem:[%s3 + $0xb0] sm:$0xff]
        %v1149 = vld [vmem:[%s3 + $0xb8] sm:$0xff]
        %v1150 = vld [vmem:[%s3 + $0xc0] sm:$0xff]
        %v1151 = vld [vmem:[%s3 + $0xc8] sm:$0xff]
        %v1152 = vld [vmem:[%s3 + $0xd0] sm:$0xff]
        %v1153 = vld [vmem:[%s3 + $0xd8] sm:$0xff]
        %v1154 = vld [vmem:[%s3 + $0xe0] sm:$0xff]
        %v1155 = vld [vmem:[%s3 + $0xe8] sm:$0xff]
        %v1156 = vld [vmem:[%s3 + $0xf0] sm:$0xff]
        %v1157 = vld [vmem:[%s3 + $0xf8] sm:$0xff]
        %1159 = vset.pattern.permute.xlu0 0
        %1160 = vperm.xlu0 %1159, %v1142
        %v1161 = vpop.permute.xlu0 %1160
        %1164 = vset.pattern.permute.xlu0 0
        %1165 = vperm.xlu0 %1164, %v1143
        %v1166 = vpop.permute.xlu0 %1165
        %1169 = vset.pattern.permute.xlu0 0
        %1170 = vperm.xlu0 %1169, %v1144
        %v1171 = vpop.permute.xlu0 %1170
        %1174 = vset.pattern.permute.xlu0 0
        %1175 = vperm.xlu0 %1174, %v1145
        %v1176 = vpop.permute.xlu0 %1175
        %1179 = vset.pattern.permute.xlu0 0
        %1180 = vperm.xlu0 %1179, %v1146
        %v1181 = vpop.permute.xlu0 %1180
        %1184 = vset.pattern.permute.xlu0 0
        %1185 = vperm.xlu0 %1184, %v1147
        %v1186 = vpop.permute.xlu0 %1185
        %1189 = vset.pattern.permute.xlu0 0
        %1190 = vperm.xlu0 %1189, %v1148
        %v1191 = vpop.permute.xlu0 %1190
        %1194 = vset.pattern.permute.xlu0 0
        %1195 = vperm.xlu0 %1194, %v1149
        %v1196 = vpop.permute.xlu0 %1195
        %1199 = vset.pattern.permute.xlu0 0
        %1200 = vperm.xlu0 %1199, %v1150
        %v1201 = vpop.permute.xlu0 %1200
        %1204 = vset.pattern.permute.xlu0 0
        %1205 = vperm.xlu0 %1204, %v1151
        %v1206 = vpop.permute.xlu0 %1205
        %1209 = vset.pattern.permute.xlu0 0
        %1210 = vperm.xlu0 %1209, %v1152
        %v1211 = vpop.permute.xlu0 %1210
        %1214 = vset.pattern.permute.xlu0 0
        %1215 = vperm.xlu0 %1214, %v1153
        %v1216 = vpop.permute.xlu0 %1215
        %1219 = vset.pattern.permute.xlu0 0
        %1220 = vperm.xlu0 %1219, %v1154
        %v1221 = vpop.permute.xlu0 %1220
        %1224 = vset.pattern.permute.xlu0 0
        %1225 = vperm.xlu0 %1224, %v1155
        %v1226 = vpop.permute.xlu0 %1225
        %1229 = vset.pattern.permute.xlu0 0
        %1230 = vperm.xlu0 %1229, %v1156
        %v1231 = vpop.permute.xlu0 %1230
        %1234 = vset.pattern.permute.xlu0 0
        %1235 = vperm.xlu0 %1234, %v1157
        %v1236 = vpop.permute.xlu0 %1235
        %v1238 = vmul.f32 %v1110, %v1161
        %v1239 = vmul.f32 %v1111, %v1161
        %v1240 = vmul.f32 %v1112, %v1166
        %v1241 = vmul.f32 %v1113, %v1166
        %v1242 = vmul.f32 %v1114, %v1171
        %v1243 = vmul.f32 %v1115, %v1171
        %v1244 = vmul.f32 %v1116, %v1176
        %v1245 = vmul.f32 %v1117, %v1176
        %v1246 = vmul.f32 %v1118, %v1181
        %v1247 = vmul.f32 %v1119, %v1181
        %v1248 = vmul.f32 %v1120, %v1186
        %v1249 = vmul.f32 %v1121, %v1186
        %v1250 = vmul.f32 %v1122, %v1191
        %v1251 = vmul.f32 %v1123, %v1191
        %v1252 = vmul.f32 %v1124, %v1196
        %v1253 = vmul.f32 %v1125, %v1196
        %v1254 = vmul.f32 %v1126, %v1201
        %v1255 = vmul.f32 %v1127, %v1201
        %v1256 = vmul.f32 %v1128, %v1206
        %v1257 = vmul.f32 %v1129, %v1206
        %v1258 = vmul.f32 %v1130, %v1211
        %v1259 = vmul.f32 %v1131, %v1211
        %v1260 = vmul.f32 %v1132, %v1216
        %v1261 = vmul.f32 %v1133, %v1216
        %v1262 = vmul.f32 %v1134, %v1221
        %v1263 = vmul.f32 %v1135, %v1221
        %v1264 = vmul.f32 %v1136, %v1226
        %v1265 = vmul.f32 %v1137, %v1226
        %v1266 = vmul.f32 %v1138, %v1231
        %v1267 = vmul.f32 %v1139, %v1231
        %v1268 = vmul.f32 %v1140, %v1236
        %v1269 = vmul.f32 %v1141, %v1236
        %v1270 = vadd.f32 %v1238, %v1240
        %v1271 = vadd.f32 %v1270, %v1242
        %v1272 = vadd.f32 %v1271, %v1244
        %v1273 = vadd.f32 %v1272, %v1246
        %v1274 = vadd.f32 %v1273, %v1248
        %v1275 = vadd.f32 %v1274, %v1250
        %v1276 = vadd.f32 %v1275, %v1252
        %v1277 = vadd.f32 %v1276, %v1254
        %v1278 = vadd.f32 %v1277, %v1256
        %v1279 = vadd.f32 %v1278, %v1258
        %v1280 = vadd.f32 %v1279, %v1260
        %v1281 = vadd.f32 %v1280, %v1262
        %v1282 = vadd.f32 %v1281, %v1264
        %v1283 = vadd.f32 %v1282, %v1266
        %v1284 = vadd.f32 %v1283, %v1268
        %v1285 = vrot.slane %v1284, 4
        %v1286 = vadd.f32 %v1284, %v1285
        %v1287 = vrot.slane %v1286, 2
        %v1288 = vadd.f32 %v1286, %v1287
        %v1289 = vrot.slane %v1288, 1
        %v1290 = vadd.f32 %v1288, %v1289
        %v1291 = vadd.f32 %v1239, %v1241
        %v1292 = vadd.f32 %v1291, %v1243
        %v1293 = vadd.f32 %v1292, %v1245
        %v1294 = vadd.f32 %v1293, %v1247
        %v1295 = vadd.f32 %v1294, %v1249
        %v1296 = vadd.f32 %v1295, %v1251
        %v1297 = vadd.f32 %v1296, %v1253
        %v1298 = vadd.f32 %v1297, %v1255
        %v1299 = vadd.f32 %v1298, %v1257
        %v1300 = vadd.f32 %v1299, %v1259
        %v1301 = vadd.f32 %v1300, %v1261
        %v1302 = vadd.f32 %v1301, %v1263
        %v1303 = vadd.f32 %v1302, %v1265
        %v1304 = vadd.f32 %v1303, %v1267
        %v1305 = vadd.f32 %v1304, %v1269
        %v1306 = vrot.slane %v1305, 4
        %v1307 = vadd.f32 %v1305, %v1306
        %v1308 = vrot.slane %v1307, 2
        %v1309 = vadd.f32 %v1307, %v1308
        %v1310 = vrot.slane %v1309, 1
        %v1311 = vadd.f32 %v1309, %v1310
        %v1312 = vadd.f32 %v787, %v1290
        %v1313 = vadd.f32 %v788, %v1311
        %v1314 = vld [vmem:[%s1 + $0x100] sm:$0xff]
        %v1315 = vld [vmem:[%s1 + $0x108] sm:$0xff]
        %v1316 = vld [vmem:[%s1 + $0x110] sm:$0xff]
        %v1317 = vld [vmem:[%s1 + $0x118] sm:$0xff]
        %v1318 = vld [vmem:[%s1 + $0x120] sm:$0xff]
        %v1319 = vld [vmem:[%s1 + $0x128] sm:$0xff]
        %v1320 = vld [vmem:[%s1 + $0x130] sm:$0xff]
        %v1321 = vld [vmem:[%s1 + $0x138] sm:$0xff]
        %v1322 = vld [vmem:[%s1 + $0x140] sm:$0xff]
        %v1323 = vld [vmem:[%s1 + $0x148] sm:$0xff]
        %v1324 = vld [vmem:[%s1 + $0x150] sm:$0xff]
        %v1325 = vld [vmem:[%s1 + $0x158] sm:$0xff]
        %v1326 = vld [vmem:[%s1 + $0x160] sm:$0xff]
        %v1327 = vld [vmem:[%s1 + $0x168] sm:$0xff]
        %v1328 = vld [vmem:[%s1 + $0x170] sm:$0xff]
        %v1329 = vld [vmem:[%s1 + $0x178] sm:$0xff]
        %v1330 = vld [vmem:[%s2 + $0x100] sm:$0xff]
        %v1331 = vld [vmem:[%s2 + $0x108] sm:$0xff]
        %v1332 = vld [vmem:[%s2 + $0x110] sm:$0xff]
        %v1333 = vld [vmem:[%s2 + $0x118] sm:$0xff]
        %v1334 = vld [vmem:[%s2 + $0x120] sm:$0xff]
        %v1335 = vld [vmem:[%s2 + $0x128] sm:$0xff]
        %v1336 = vld [vmem:[%s2 + $0x130] sm:$0xff]
        %v1337 = vld [vmem:[%s2 + $0x138] sm:$0xff]
        %v1338 = vld [vmem:[%s2 + $0x140] sm:$0xff]
        %v1339 = vld [vmem:[%s2 + $0x148] sm:$0xff]
        %v1340 = vld [vmem:[%s2 + $0x150] sm:$0xff]
        %v1341 = vld [vmem:[%s2 + $0x158] sm:$0xff]
        %v1342 = vld [vmem:[%s2 + $0x160] sm:$0xff]
        %v1343 = vld [vmem:[%s2 + $0x168] sm:$0xff]
        %v1344 = vld [vmem:[%s2 + $0x170] sm:$0xff]
        %v1345 = vld [vmem:[%s2 + $0x178] sm:$0xff]
        %1347 = vset.pattern.permute.xlu0 0
        %1348 = vperm.xlu0 %1347, %v1330
        %v1349 = vpop.permute.xlu0 %1348
        %1352 = vset.pattern.permute.xlu0 0
        %1353 = vperm.xlu0 %1352, %v1331
        %v1354 = vpop.permute.xlu0 %1353
        %1357 = vset.pattern.permute.xlu0 0
        %1358 = vperm.xlu0 %1357, %v1332
        %v1359 = vpop.permute.xlu0 %1358
        %1362 = vset.pattern.permute.xlu0 0
        %1363 = vperm.xlu0 %1362, %v1333
        %v1364 = vpop.permute.xlu0 %1363
        %1367 = vset.pattern.permute.xlu0 0
        %1368 = vperm.xlu0 %1367, %v1334
        %v1369 = vpop.permute.xlu0 %1368
        %1372 = vset.pattern.permute.xlu0 0
        %1373 = vperm.xlu0 %1372, %v1335
        %v1374 = vpop.permute.xlu0 %1373
        %1377 = vset.pattern.permute.xlu0 0
        %1378 = vperm.xlu0 %1377, %v1336
        %v1379 = vpop.permute.xlu0 %1378
        %1382 = vset.pattern.permute.xlu0 0
        %1383 = vperm.xlu0 %1382, %v1337
        %v1384 = vpop.permute.xlu0 %1383
        %1387 = vset.pattern.permute.xlu0 0
        %1388 = vperm.xlu0 %1387, %v1338
        %v1389 = vpop.permute.xlu0 %1388
        %1392 = vset.pattern.permute.xlu0 0
        %1393 = vperm.xlu0 %1392, %v1339
        %v1394 = vpop.permute.xlu0 %1393
        %1397 = vset.pattern.permute.xlu0 0
        %1398 = vperm.xlu0 %1397, %v1340
        %v1399 = vpop.permute.xlu0 %1398
        %1402 = vset.pattern.permute.xlu0 0
        %1403 = vperm.xlu0 %1402, %v1341
        %v1404 = vpop.permute.xlu0 %1403
        %1407 = vset.pattern.permute.xlu0 0
        %1408 = vperm.xlu0 %1407, %v1342
        %v1409 = vpop.permute.xlu0 %1408
        %1412 = vset.pattern.permute.xlu0 0
        %1413 = vperm.xlu0 %1412, %v1343
        %v1414 = vpop.permute.xlu0 %1413
        %1417 = vset.pattern.permute.xlu0 0
        %1418 = vperm.xlu0 %1417, %v1344
        %v1419 = vpop.permute.xlu0 %1418
        %1422 = vset.pattern.permute.xlu0 0
        %1423 = vperm.xlu0 %1422, %v1345
        %v1424 = vpop.permute.xlu0 %1423
        %v1427 = vsel %vm370, %v1314, 0
        %v1430 = vsel %vm370, %v1315, 0
        %v1433 = vsel %vm370, %v1316, 0
        %v1436 = vsel %vm370, %v1317, 0
        %v1439 = vsel %vm370, %v1318, 0
        %v1442 = vsel %vm370, %v1319, 0
        %v1445 = vsel %vm370, %v1320, 0
        %v1448 = vsel %vm370, %v1321, 0
        %v1451 = vsel %vm370, %v1322, 0
        %v1454 = vsel %vm370, %v1323, 0
        %v1457 = vsel %vm370, %v1324, 0
        %v1460 = vsel %vm370, %v1325, 0
        %v1463 = vsel %vm370, %v1326, 0
        %v1466 = vsel %vm370, %v1327, 0
        %v1469 = vsel %vm370, %v1328, 0
        %v1472 = vsel %vm370, %v1329, 0
        %1474 = vmatprep.subr.mxu0 %v422
        %1475 = vmatpush1.msra.mxu0 %v420
        %1476 = vmatprep.subr.mxu0 0.0
        %1477 = vmatpush1.msra.mxu0 0.0
        %1478 = vmatprep.subr.mxu0 0.0
        %1479 = vmatpush1.msra.mxu0 0.0
        %1480 = vmatprep.subr.mxu0 0.0
        %1481 = vmatpush1.msra.mxu0 0.0
        %1482 = vmatprep.subr.mxu0 0.0
        %1483 = vmatpush1.msra.mxu0 0.0
        %1484 = vmatprep.subr.mxu0 0.0
        %1485 = vmatpush1.msra.mxu0 0.0
        %1486 = vmatprep.subr.mxu0 0.0
        %1487 = vmatpush1.msra.mxu0 0.0
        %1488 = vmatprep.subr.mxu0 0.0
        %1489 = vmatpush1.msra.mxu0 0.0
        %1490 = vmatprep.subr.mxu0 0.0
        %1491 = vmatpush1.msra.mxu0 0.0
        %1492 = vmatprep.subr.mxu0 0.0
        %1493 = vmatpush1.msra.mxu0 0.0
        %1494 = vmatprep.subr.mxu0 0.0
        %1495 = vmatpush1.msra.mxu0 0.0
        %1496 = vmatprep.subr.mxu0 0.0
        %1497 = vmatpush1.msra.mxu0 0.0
        %1498 = vmatprep.subr.mxu0 0.0
        %1499 = vmatpush1.msra.mxu0 0.0
        %1500 = vmatprep.subr.mxu0 0.0
        %1501 = vmatpush1.msra.mxu0 0.0
        %1502 = vmatprep.subr.mxu0 0.0
        %1503 = vmatpush1.msra.mxu0 0.0
        %1504 = vmatprep.subr.mxu0 0.0
        %1505 = vmatpush1.msra.mxu0 0.0
        %1506 = vmatprep.subr.mxu0 0.0
        %1507 = vmatpush1.msra.mxu0 0.0
        %1508 = vmatprep.subr.mxu0 0.0
        %1509 = vmatpush1.msra.mxu0 0.0
        %1510 = vmatprep.subr.mxu0 0.0
        %1511 = vmatpush1.msra.mxu0 0.0
        %1512 = vmatprep.subr.mxu0 0.0
        %1513 = vmatpush1.msra.mxu0 0.0
        %1514 = vmatprep.subr.mxu0 0.0
        %1515 = vmatpush1.msra.mxu0 0.0
        %1516 = vmatprep.subr.mxu0 0.0
        %1517 = vmatpush1.msra.mxu0 0.0
        %1518 = vmatprep.subr.mxu0 0.0
        %1519 = vmatpush1.msra.mxu0 0.0
        %1520 = vmatprep.subr.mxu0 0.0
        %1521 = vmatpush1.msra.mxu0 0.0
        %1522 = vmatprep.subr.mxu0 0.0
        %1523 = vmatpush1.msra.mxu0 0.0
        %1524 = vmatprep.subr.mxu0 0.0
        %1525 = vmatpush1.msra.mxu0 0.0
        %1526 = vmatprep.subr.mxu0 0.0
        %1527 = vmatpush1.msra.mxu0 0.0
        %1528 = vmatprep.subr.mxu0 0.0
        %1529 = vmatpush1.msra.mxu0 0.0
        %1530 = vmatprep.subr.mxu0 0.0
        %1531 = vmatpush1.msra.mxu0 0.0
        %1532 = vmatprep.subr.mxu0 0.0
        %1533 = vmatpush1.msra.mxu0 0.0
        %1534 = vmatprep.subr.mxu0 0.0
        %1535 = vmatpush1.msra.mxu0 0.0
        %1536 = vmatprep.subr.mxu0 0.0
        %1537 = vmatpush1.msra.mxu0 0.0
        %1538 = vmatprep.mubr.f32.mxu0 0.0
        %1539 = vmatmul.mubr.f32.gmra.mrb[0].mxu0 %v1427
        %v1540 = vpop.f32.mrb[0].mxu0
        %v1541 = vadd.f32 %v1349, %v1540
        %v1542 = vpop.f32.mrb[0].mxu0
        %v1543 = vadd.f32 %v1349, %v1542
        %1544 = vmatprep.mubr.f32.mxu0 0.0
        %1545 = vmatmul.mubr.f32.gmra.mrb[0].mxu0 %v1430
        %v1546 = vpop.f32.mrb[0].mxu0
        %v1547 = vadd.f32 %v1354, %v1546
        %v1548 = vpop.f32.mrb[0].mxu0
        %v1549 = vadd.f32 %v1354, %v1548
        %1550 = vmatprep.mubr.f32.mxu0 0.0
        %1551 = vmatmul.mubr.f32.gmra.mrb[0].mxu0 %v1433
        %v1552 = vpop.f32.mrb[0].mxu0
        %v1553 = vadd.f32 %v1359, %v1552
        %v1554 = vpop.f32.mrb[0].mxu0
        %v1555 = vadd.f32 %v1359, %v1554
        %1556 = vmatprep.mubr.f32.mxu0 0.0
        %1557 = vmatmul.mubr.f32.gmra.mrb[0].mxu0 %v1436
        %v1558 = vpop.f32.mrb[0].mxu0
        %v1559 = vadd.f32 %v1364, %v1558
        %v1560 = vpop.f32.mrb[0].mxu0
        %v1561 = vadd.f32 %v1364, %v1560
        %1562 = vmatprep.mubr.f32.mxu0 0.0
        %1563 = vmatmul.mubr.f32.gmra.mrb[0].mxu0 %v1439
        %v1564 = vpop.f32.mrb[0].mxu0
        %v1565 = vadd.f32 %v1369, %v1564
        %v1566 = vpop.f32.mrb[0].mxu0
        %v1567 = vadd.f32 %v1369, %v1566
        %1568 = vmatprep.mubr.f32.mxu0 0.0
        %1569 = vmatmul.mubr.f32.gmra.mrb[0].mxu0 %v1442
        %v1570 = vpop.f32.mrb[0].mxu0
        %v1571 = vadd.f32 %v1374, %v1570
        %v1572 = vpop.f32.mrb[0].mxu0
        %v1573 = vadd.f32 %v1374, %v1572
        %1574 = vmatprep.mubr.f32.mxu0 0.0
        %1575 = vmatmul.mubr.f32.gmra.mrb[0].mxu0 %v1445
        %v1576 = vpop.f32.mrb[0].mxu0
        %v1577 = vadd.f32 %v1379, %v1576
        %v1578 = vpop.f32.mrb[0].mxu0
        %v1579 = vadd.f32 %v1379, %v1578
        %1580 = vmatprep.mubr.f32.mxu0 0.0
        %1581 = vmatmul.mubr.f32.gmra.mrb[0].mxu0 %v1448
        %v1582 = vpop.f32.mrb[0].mxu0
        %v1583 = vadd.f32 %v1384, %v1582
        %v1584 = vpop.f32.mrb[0].mxu0
        %v1585 = vadd.f32 %v1384, %v1584
        %1586 = vmatprep.mubr.f32.mxu0 0.0
        %1587 = vmatmul.mubr.f32.gmra.mrb[0].mxu0 %v1451
        %v1588 = vpop.f32.mrb[0].mxu0
        %v1589 = vadd.f32 %v1389, %v1588
        %v1590 = vpop.f32.mrb[0].mxu0
        %v1591 = vadd.f32 %v1389, %v1590
        %1592 = vmatprep.mubr.f32.mxu0 0.0
        %1593 = vmatmul.mubr.f32.gmra.mrb[0].mxu0 %v1454
        %v1594 = vpop.f32.mrb[0].mxu0
        %v1595 = vadd.f32 %v1394, %v1594
        %v1596 = vpop.f32.mrb[0].mxu0
        %v1597 = vadd.f32 %v1394, %v1596
        %1598 = vmatprep.mubr.f32.mxu0 0.0
        %1599 = vmatmul.mubr.f32.gmra.mrb[0].mxu0 %v1457
        %v1600 = vpop.f32.mrb[0].mxu0
        %v1601 = vadd.f32 %v1399, %v1600
        %v1602 = vpop.f32.mrb[0].mxu0
        %v1603 = vadd.f32 %v1399, %v1602
        %1604 = vmatprep.mubr.f32.mxu0 0.0
        %1605 = vmatmul.mubr.f32.gmra.mrb[0].mxu0 %v1460
        %v1606 = vpop.f32.mrb[0].mxu0
        %v1607 = vadd.f32 %v1404, %v1606
        %v1608 = vpop.f32.mrb[0].mxu0
        %v1609 = vadd.f32 %v1404, %v1608
        %1610 = vmatprep.mubr.f32.mxu0 0.0
        %1611 = vmatmul.mubr.f32.gmra.mrb[0].mxu0 %v1463
        %v1612 = vpop.f32.mrb[0].mxu0
        %v1613 = vadd.f32 %v1409, %v1612
        %v1614 = vpop.f32.mrb[0].mxu0
        %v1615 = vadd.f32 %v1409, %v1614
        %1616 = vmatprep.mubr.f32.mxu0 0.0
        %1617 = vmatmul.mubr.f32.gmra.mrb[0].mxu0 %v1466
        %v1618 = vpop.f32.mrb[0].mxu0
        %v1619 = vadd.f32 %v1414, %v1618
        %v1620 = vpop.f32.mrb[0].mxu0
        %v1621 = vadd.f32 %v1414, %v1620
        %1622 = vmatprep.mubr.f32.mxu0 0.0
        %1623 = vmatmul.mubr.f32.gmra.mrb[0].mxu0 %v1469
        %v1624 = vpop.f32.mrb[0].mxu0
        %v1625 = vadd.f32 %v1419, %v1624
        %v1626 = vpop.f32.mrb[0].mxu0
        %v1627 = vadd.f32 %v1419, %v1626
        %1628 = vmatprep.mubr.f32.mxu0 0.0
        %1629 = vmatmul.mubr.f32.gmra.mrb[0].mxu0 %v1472
        %v1630 = vpop.f32.mrb[0].mxu0
        %v1631 = vadd.f32 %v1424, %v1630
        %v1632 = vpop.f32.mrb[0].mxu0
        %v1633 = vadd.f32 %v1424, %v1632
        %1634 = vdwg.mxu0
        %v1635 = vmax.f32 %v1541, 0.0
        %v1636 = vmax.f32 %v1543, 0.0
        %v1637 = vmax.f32 %v1547, 0.0
        %v1638 = vmax.f32 %v1549, 0.0
        %v1639 = vmax.f32 %v1553, 0.0
        %v1640 = vmax.f32 %v1555, 0.0
        %v1641 = vmax.f32 %v1559, 0.0
        %v1642 = vmax.f32 %v1561, 0.0
        %v1643 = vmax.f32 %v1565, 0.0
        %v1644 = vmax.f32 %v1567, 0.0
        %v1645 = vmax.f32 %v1571, 0.0
        %v1646 = vmax.f32 %v1573, 0.0
        %v1647 = vmax.f32 %v1577, 0.0
        %v1648 = vmax.f32 %v1579, 0.0
        %v1649 = vmax.f32 %v1583, 0.0
        %v1650 = vmax.f32 %v1585, 0.0
        %v1651 = vmax.f32 %v1589, 0.0
        %v1652 = vmax.f32 %v1591, 0.0
        %v1653 = vmax.f32 %v1595, 0.0
        %v1654 = vmax.f32 %v1597, 0.0
        %v1655 = vmax.f32 %v1601, 0.0
        %v1656 = vmax.f32 %v1603, 0.0
        %v1657 = vmax.f32 %v1607, 0.0
        %v1658 = vmax.f32 %v1609, 0.0
        %v1659 = vmax.f32 %v1613, 0.0
        %v1660 = vmax.f32 %v1615, 0.0
        %v1661 = vmax.f32 %v1619, 0.0
        %v1662 = vmax.f32 %v1621, 0.0
        %v1663 = vmax.f32 %v1625, 0.0
        %v1664 = vmax.f32 %v1627, 0.0
        %v1665 = vmax.f32 %v1631, 0.0
        %v1666 = vmax.f32 %v1633, 0.0
        %v1667 = vld [vmem:[%s3 + $0x100] sm:$0xff]
        %v1668 = vld [vmem:[%s3 + $0x108] sm:$0xff]
        %v1669 = vld [vmem:[%s3 + $0x110] sm:$0xff]
        %v1670 = vld [vmem:[%s3 + $0x118] sm:$0xff]
        %v1671 = vld [vmem:[%s3 + $0x120] sm:$0xff]
        %v1672 = vld [vmem:[%s3 + $0x128] sm:$0xff]
        %v1673 = vld [vmem:[%s3 + $0x130] sm:$0xff]
        %v1674 = vld [vmem:[%s3 + $0x138] sm:$0xff]
        %v1675 = vld [vmem:[%s3 + $0x140] sm:$0xff]
        %v1676 = vld [vmem:[%s3 + $0x148] sm:$0xff]
        %v1677 = vld [vmem:[%s3 + $0x150] sm:$0xff]
        %v1678 = vld [vmem:[%s3 + $0x158] sm:$0xff]
        %v1679 = vld [vmem:[%s3 + $0x160] sm:$0xff]
        %v1680 = vld [vmem:[%s3 + $0x168] sm:$0xff]
        %v1681 = vld [vmem:[%s3 + $0x170] sm:$0xff]
        %v1682 = vld [vmem:[%s3 + $0x178] sm:$0xff]
        %1684 = vset.pattern.permute.xlu0 0
        %1685 = vperm.xlu0 %1684, %v1667
        %v1686 = vpop.permute.xlu0 %1685
        %1689 = vset.pattern.permute.xlu0 0
        %1690 = vperm.xlu0 %1689, %v1668
        %v1691 = vpop.permute.xlu0 %1690
        %1694 = vset.pattern.permute.xlu0 0
        %1695 = vperm.xlu0 %1694, %v1669
        %v1696 = vpop.permute.xlu0 %1695
        %1699 = vset.pattern.permute.xlu0 0
        %1700 = vperm.xlu0 %1699, %v1670
        %v1701 = vpop.permute.xlu0 %1700
        %1704 = vset.pattern.permute.xlu0 0
        %1705 = vperm.xlu0 %1704, %v1671
        %v1706 = vpop.permute.xlu0 %1705
        %1709 = vset.pattern.permute.xlu0 0
        %1710 = vperm.xlu0 %1709, %v1672
        %v1711 = vpop.permute.xlu0 %1710
        %1714 = vset.pattern.permute.xlu0 0
        %1715 = vperm.xlu0 %1714, %v1673
        %v1716 = vpop.permute.xlu0 %1715
        %1719 = vset.pattern.permute.xlu0 0
        %1720 = vperm.xlu0 %1719, %v1674
        %v1721 = vpop.permute.xlu0 %1720
        %1724 = vset.pattern.permute.xlu0 0
        %1725 = vperm.xlu0 %1724, %v1675
        %v1726 = vpop.permute.xlu0 %1725
        %1729 = vset.pattern.permute.xlu0 0
        %1730 = vperm.xlu0 %1729, %v1676
        %v1731 = vpop.permute.xlu0 %1730
        %1734 = vset.pattern.permute.xlu0 0
        %1735 = vperm.xlu0 %1734, %v1677
        %v1736 = vpop.permute.xlu0 %1735
        %1739 = vset.pattern.permute.xlu0 0
        %1740 = vperm.xlu0 %1739, %v1678
        %v1741 = vpop.permute.xlu0 %1740
        %1744 = vset.pattern.permute.xlu0 0
        %1745 = vperm.xlu0 %1744, %v1679
        %v1746 = vpop.permute.xlu0 %1745
        %1749 = vset.pattern.permute.xlu0 0
        %1750 = vperm.xlu0 %1749, %v1680
        %v1751 = vpop.permute.xlu0 %1750
        %1754 = vset.pattern.permute.xlu0 0
        %1755 = vperm.xlu0 %1754, %v1681
        %v1756 = vpop.permute.xlu0 %1755
        %1759 = vset.pattern.permute.xlu0 0
        %1760 = vperm.xlu0 %1759, %v1682
        %v1761 = vpop.permute.xlu0 %1760
        %v1763 = vmul.f32 %v1635, %v1686
        %v1764 = vmul.f32 %v1636, %v1686
        %v1765 = vmul.f32 %v1637, %v1691
        %v1766 = vmul.f32 %v1638, %v1691
        %v1767 = vmul.f32 %v1639, %v1696
        %v1768 = vmul.f32 %v1640, %v1696
        %v1769 = vmul.f32 %v1641, %v1701
        %v1770 = vmul.f32 %v1642, %v1701
        %v1771 = vmul.f32 %v1643, %v1706
        %v1772 = vmul.f32 %v1644, %v1706
        %v1773 = vmul.f32 %v1645, %v1711
        %v1774 = vmul.f32 %v1646, %v1711
        %v1775 = vmul.f32 %v1647, %v1716
        %v1776 = vmul.f32 %v1648, %v1716
        %v1777 = vmul.f32 %v1649, %v1721
        %v1778 = vmul.f32 %v1650, %v1721
        %v1779 = vmul.f32 %v1651, %v1726
        %v1780 = vmul.f32 %v1652, %v1726
        %v1781 = vmul.f32 %v1653, %v1731
        %v1782 = vmul.f32 %v1654, %v1731
        %v1783 = vmul.f32 %v1655, %v1736
        %v1784 = vmul.f32 %v1656, %v1736
        %v1785 = vmul.f32 %v1657, %v1741
        %v1786 = vmul.f32 %v1658, %v1741
        %v1787 = vmul.f32 %v1659, %v1746
        %v1788 = vmul.f32 %v1660, %v1746
        %v1789 = vmul.f32 %v1661, %v1751
        %v1790 = vmul.f32 %v1662, %v1751
        %v1791 = vmul.f32 %v1663, %v1756
        %v1792 = vmul.f32 %v1664, %v1756
        %v1793 = vmul.f32 %v1665, %v1761
        %v1794 = vmul.f32 %v1666, %v1761
        %v1795 = vadd.f32 %v1763, %v1765
        %v1796 = vadd.f32 %v1795, %v1767
        %v1797 = vadd.f32 %v1796, %v1769
        %v1798 = vadd.f32 %v1797, %v1771
        %v1799 = vadd.f32 %v1798, %v1773
        %v1800 = vadd.f32 %v1799, %v1775
        %v1801 = vadd.f32 %v1800, %v1777
        %v1802 = vadd.f32 %v1801, %v1779
        %v1803 = vadd.f32 %v1802, %v1781
        %v1804 = vadd.f32 %v1803, %v1783
        %v1805 = vadd.f32 %v1804, %v1785
        %v1806 = vadd.f32 %v1805, %v1787
        %v1807 = vadd.f32 %v1806, %v1789
        %v1808 = vadd.f32 %v1807, %v1791
        %v1809 = vadd.f32 %v1808, %v1793
        %v1810 = vrot.slane %v1809, 4
        %v1811 = vadd.f32 %v1809, %v1810
        %v1812 = vrot.slane %v1811, 2
        %v1813 = vadd.f32 %v1811, %v1812
        %v1814 = vrot.slane %v1813, 1
        %v1815 = vadd.f32 %v1813, %v1814
        %v1816 = vadd.f32 %v1764, %v1766
        %v1817 = vadd.f32 %v1816, %v1768
        %v1818 = vadd.f32 %v1817, %v1770
        %v1819 = vadd.f32 %v1818, %v1772
        %v1820 = vadd.f32 %v1819, %v1774
        %v1821 = vadd.f32 %v1820, %v1776
        %v1822 = vadd.f32 %v1821, %v1778
        %v1823 = vadd.f32 %v1822, %v1780
        %v1824 = vadd.f32 %v1823, %v1782
        %v1825 = vadd.f32 %v1824, %v1784
        %v1826 = vadd.f32 %v1825, %v1786
        %v1827 = vadd.f32 %v1826, %v1788
        %v1828 = vadd.f32 %v1827, %v1790
        %v1829 = vadd.f32 %v1828, %v1792
        %v1830 = vadd.f32 %v1829, %v1794
        %v1831 = vrot.slane %v1830, 4
        %v1832 = vadd.f32 %v1830, %v1831
        %v1833 = vrot.slane %v1832, 2
        %v1834 = vadd.f32 %v1832, %v1833
        %v1835 = vrot.slane %v1834, 1
        %v1836 = vadd.f32 %v1834, %v1835
        %v1837 = vadd.f32 %v1312, %v1815
        %v1838 = vadd.f32 %v1313, %v1836
        %v1839 = vld [vmem:[%s1 + $0x180] sm:$0xff]
        %v1840 = vld [vmem:[%s1 + $0x188] sm:$0xff]
        %v1841 = vld [vmem:[%s1 + $0x190] sm:$0xff]
        %v1842 = vld [vmem:[%s1 + $0x198] sm:$0xff]
        %v1843 = vld [vmem:[%s1 + $0x1a0] sm:$0xff]
        %v1844 = vld [vmem:[%s1 + $0x1a8] sm:$0xff]
        %v1845 = vld [vmem:[%s1 + $0x1b0] sm:$0xff]
        %v1846 = vld [vmem:[%s1 + $0x1b8] sm:$0xff]
        %v1847 = vld [vmem:[%s1 + $0x1c0] sm:$0xff]
        %v1848 = vld [vmem:[%s1 + $0x1c8] sm:$0xff]
        %v1849 = vld [vmem:[%s1 + $0x1d0] sm:$0xff]
        %v1850 = vld [vmem:[%s1 + $0x1d8] sm:$0xff]
        %v1851 = vld [vmem:[%s1 + $0x1e0] sm:$0xff]
        %v1852 = vld [vmem:[%s1 + $0x1e8] sm:$0xff]
        %v1853 = vld [vmem:[%s1 + $0x1f0] sm:$0xff]
        %v1854 = vld [vmem:[%s1 + $0x1f8] sm:$0xff]
        %v1855 = vld [vmem:[%s2 + $0x180] sm:$0xff]
        %v1856 = vld [vmem:[%s2 + $0x188] sm:$0xff]
        %v1857 = vld [vmem:[%s2 + $0x190] sm:$0xff]
        %v1858 = vld [vmem:[%s2 + $0x198] sm:$0xff]
        %v1859 = vld [vmem:[%s2 + $0x1a0] sm:$0xff]
        %v1860 = vld [vmem:[%s2 + $0x1a8] sm:$0xff]
        %v1861 = vld [vmem:[%s2 + $0x1b0] sm:$0xff]
        %v1862 = vld [vmem:[%s2 + $0x1b8] sm:$0xff]
        %v1863 = vld [vmem:[%s2 + $0x1c0] sm:$0xff]
        %v1864 = vld [vmem:[%s2 + $0x1c8] sm:$0xff]
        %v1865 = vld [vmem:[%s2 + $0x1d0] sm:$0xff]
        %v1866 = vld [vmem:[%s2 + $0x1d8] sm:$0xff]
        %v1867 = vld [vmem:[%s2 + $0x1e0] sm:$0xff]
        %v1868 = vld [vmem:[%s2 + $0x1e8] sm:$0xff]
        %v1869 = vld [vmem:[%s2 + $0x1f0] sm:$0xff]
        %v1870 = vld [vmem:[%s2 + $0x1f8] sm:$0xff]
        %1872 = vset.pattern.permute.xlu0 0
        %1873 = vperm.xlu0 %1872, %v1855
        %v1874 = vpop.permute.xlu0 %1873
        %1877 = vset.pattern.permute.xlu0 0
        %1878 = vperm.xlu0 %1877, %v1856
        %v1879 = vpop.permute.xlu0 %1878
        %1882 = vset.pattern.permute.xlu0 0
        %1883 = vperm.xlu0 %1882, %v1857
        %v1884 = vpop.permute.xlu0 %1883
        %1887 = vset.pattern.permute.xlu0 0
        %1888 = vperm.xlu0 %1887, %v1858
        %v1889 = vpop.permute.xlu0 %1888
        %1892 = vset.pattern.permute.xlu0 0
        %1893 = vperm.xlu0 %1892, %v1859
        %v1894 = vpop.permute.xlu0 %1893
        %1897 = vset.pattern.permute.xlu0 0
        %1898 = vperm.xlu0 %1897, %v1860
        %v1899 = vpop.permute.xlu0 %1898
        %1902 = vset.pattern.permute.xlu0 0
        %1903 = vperm.xlu0 %1902, %v1861
        %v1904 = vpop.permute.xlu0 %1903
        %1907 = vset.pattern.permute.xlu0 0
        %1908 = vperm.xlu0 %1907, %v1862
        %v1909 = vpop.permute.xlu0 %1908
        %1912 = vset.pattern.permute.xlu0 0
        %1913 = vperm.xlu0 %1912, %v1863
        %v1914 = vpop.permute.xlu0 %1913
        %1917 = vset.pattern.permute.xlu0 0
        %1918 = vperm.xlu0 %1917, %v1864
        %v1919 = vpop.permute.xlu0 %1918
        %1922 = vset.pattern.permute.xlu0 0
        %1923 = vperm.xlu0 %1922, %v1865
        %v1924 = vpop.permute.xlu0 %1923
        %1927 = vset.pattern.permute.xlu0 0
        %1928 = vperm.xlu0 %1927, %v1866
        %v1929 = vpop.permute.xlu0 %1928
        %1932 = vset.pattern.permute.xlu0 0
        %1933 = vperm.xlu0 %1932, %v1867
        %v1934 = vpop.permute.xlu0 %1933
        %1937 = vset.pattern.permute.xlu0 0
        %1938 = vperm.xlu0 %1937, %v1868
        %v1939 = vpop.permute.xlu0 %1938
        %1942 = vset.pattern.permute.xlu0 0
        %1943 = vperm.xlu0 %1942, %v1869
        %v1944 = vpop.permute.xlu0 %1943
        %1947 = vset.pattern.permute.xlu0 0
        %1948 = vperm.xlu0 %1947, %v1870
        %v1949 = vpop.permute.xlu0 %1948
        %v1952 = vsel %vm370, %v1839, 0
        %v1955 = vsel %vm370, %v1840, 0
        %v1958 = vsel %vm370, %v1841, 0
        %v1961 = vsel %vm370, %v1842, 0
        %v1964 = vsel %vm370, %v1843, 0
        %v1967 = vsel %vm370, %v1844, 0
        %v1970 = vsel %vm370, %v1845, 0
        %v1973 = vsel %vm370, %v1846, 0
        %v1976 = vsel %vm370, %v1847, 0
        %v1979 = vsel %vm370, %v1848, 0
        %v1982 = vsel %vm370, %v1849, 0
        %v1985 = vsel %vm370, %v1850, 0
        %v1988 = vsel %vm370, %v1851, 0
        %v1991 = vsel %vm370, %v1852, 0
        %v1994 = vsel %vm370, %v1853, 0
        %v1997 = vsel %vm370, %v1854, 0
        %1999 = vmatprep.subr.mxu0 %v422
        %2000 = vmatpush1.msra.mxu0 %v420
        %2001 = vmatprep.subr.mxu0 0.0
        %2002 = vmatpush1.msra.mxu0 0.0
        %2003 = vmatprep.subr.mxu0 0.0
        %2004 = vmatpush1.msra.mxu0 0.0
        %2005 = vmatprep.subr.mxu0 0.0
        %2006 = vmatpush1.msra.mxu0 0.0
        %2007 = vmatprep.subr.mxu0 0.0
        %2008 = vmatpush1.msra.mxu0 0.0
        %2009 = vmatprep.subr.mxu0 0.0
        %2010 = vmatpush1.msra.mxu0 0.0
        %2011 = vmatprep.subr.mxu0 0.0
        %2012 = vmatpush1.msra.mxu0 0.0
        %2013 = vmatprep.subr.mxu0 0.0
        %2014 = vmatpush1.msra.mxu0 0.0
        %2015 = vmatprep.subr.mxu0 0.0
        %2016 = vmatpush1.msra.mxu0 0.0
        %2017 = vmatprep.subr.mxu0 0.0
        %2018 = vmatpush1.msra.mxu0 0.0
        %2019 = vmatprep.subr.mxu0 0.0
        %2020 = vmatpush1.msra.mxu0 0.0
        %2021 = vmatprep.subr.mxu0 0.0
        %2022 = vmatpush1.msra.mxu0 0.0
        %2023 = vmatprep.subr.mxu0 0.0
        %2024 = vmatpush1.msra.mxu0 0.0
        %2025 = vmatprep.subr.mxu0 0.0
        %2026 = vmatpush1.msra.mxu0 0.0
        %2027 = vmatprep.subr.mxu0 0.0
        %2028 = vmatpush1.msra.mxu0 0.0
        %2029 = vmatprep.subr.mxu0 0.0
        %2030 = vmatpush1.msra.mxu0 0.0
        %2031 = vmatprep.subr.mxu0 0.0
        %2032 = vmatpush1.msra.mxu0 0.0
        %2033 = vmatprep.subr.mxu0 0.0
        %2034 = vmatpush1.msra.mxu0 0.0
        %2035 = vmatprep.subr.mxu0 0.0
        %2036 = vmatpush1.msra.mxu0 0.0
        %2037 = vmatprep.subr.mxu0 0.0
        %2038 = vmatpush1.msra.mxu0 0.0
        %2039 = vmatprep.subr.mxu0 0.0
        %2040 = vmatpush1.msra.mxu0 0.0
        %2041 = vmatprep.subr.mxu0 0.0
        %2042 = vmatpush1.msra.mxu0 0.0
        %2043 = vmatprep.subr.mxu0 0.0
        %2044 = vmatpush1.msra.mxu0 0.0
        %2045 = vmatprep.subr.mxu0 0.0
        %2046 = vmatpush1.msra.mxu0 0.0
        %2047 = vmatprep.subr.mxu0 0.0
        %2048 = vmatpush1.msra.mxu0 0.0
        %2049 = vmatprep.subr.mxu0 0.0
        %2050 = vmatpush1.msra.mxu0 0.0
        %2051 = vmatprep.subr.mxu0 0.0
        %2052 = vmatpush1.msra.mxu0 0.0
        %2053 = vmatprep.subr.mxu0 0.0
        %2054 = vmatpush1.msra.mxu0 0.0
        %2055 = vmatprep.subr.mxu0 0.0
        %2056 = vmatpush1.msra.mxu0 0.0
        %2057 = vmatprep.subr.mxu0 0.0
        %2058 = vmatpush1.msra.mxu0 0.0
        %2059 = vmatprep.subr.mxu0 0.0
        %2060 = vmatpush1.msra.mxu0 0.0
        %2061 = vmatprep.subr.mxu0 0.0
        %2062 = vmatpush1.msra.mxu0 0.0
        %2063 = vmatprep.mubr.f32.mxu0 0.0
        %2064 = vmatmul.mubr.f32.gmra.mrb[0].mxu0 %v1952
        %v2065 = vpop.f32.mrb[0].mxu0
        %v2066 = vadd.f32 %v1874, %v2065
        %v2067 = vpop.f32.mrb[0].mxu0
        %v2068 = vadd.f32 %v1874, %v2067
        %2069 = vmatprep.mubr.f32.mxu0 0.0
        %2070 = vmatmul.mubr.f32.gmra.mrb[0].mxu0 %v1955
        %v2071 = vpop.f32.mrb[0].mxu0
        %v2072 = vadd.f32 %v1879, %v2071
        %v2073 = vpop.f32.mrb[0].mxu0
        %v2074 = vadd.f32 %v1879, %v2073
        %2075 = vmatprep.mubr.f32.mxu0 0.0
        %2076 = vmatmul.mubr.f32.gmra.mrb[0].mxu0 %v1958
        %v2077 = vpop.f32.mrb[0].mxu0
        %v2078 = vadd.f32 %v1884, %v2077
        %v2079 = vpop.f32.mrb[0].mxu0
        %v2080 = vadd.f32 %v1884, %v2079
        %2081 = vmatprep.mubr.f32.mxu0 0.0
        %2082 = vmatmul.mubr.f32.gmra.mrb[0].mxu0 %v1961
        %v2083 = vpop.f32.mrb[0].mxu0
        %v2084 = vadd.f32 %v1889, %v2083
        %v2085 = vpop.f32.mrb[0].mxu0
        %v2086 = vadd.f32 %v1889, %v2085
        %2087 = vmatprep.mubr.f32.mxu0 0.0
        %2088 = vmatmul.mubr.f32.gmra.mrb[0].mxu0 %v1964
        %v2089 = vpop.f32.mrb[0].mxu0
        %v2090 = vadd.f32 %v1894, %v2089
        %v2091 = vpop.f32.mrb[0].mxu0
        %v2092 = vadd.f32 %v1894, %v2091
        %2093 = vmatprep.mubr.f32.mxu0 0.0
        %2094 = vmatmul.mubr.f32.gmra.mrb[0].mxu0 %v1967
        %v2095 = vpop.f32.mrb[0].mxu0
        %v2096 = vadd.f32 %v1899, %v2095
        %v2097 = vpop.f32.mrb[0].mxu0
        %v2098 = vadd.f32 %v1899, %v2097
        %2099 = vmatprep.mubr.f32.mxu0 0.0
        %2100 = vmatmul.mubr.f32.gmra.mrb[0].mxu0 %v1970
        %v2101 = vpop.f32.mrb[0].mxu0
        %v2102 = vadd.f32 %v1904, %v2101
        %v2103 = vpop.f32.mrb[0].mxu0
        %v2104 = vadd.f32 %v1904, %v2103
        %2105 = vmatprep.mubr.f32.mxu0 0.0
        %2106 = vmatmul.mubr.f32.gmra.mrb[0].mxu0 %v1973
        %v2107 = vpop.f32.mrb[0].mxu0
        %v2108 = vadd.f32 %v1909, %v2107
        %v2109 = vpop.f32.mrb[0].mxu0
        %v2110 = vadd.f32 %v1909, %v2109
        %2111 = vmatprep.mubr.f32.mxu0 0.0
        %2112 = vmatmul.mubr.f32.gmra.mrb[0].mxu0 %v1976
        %v2113 = vpop.f32.mrb[0].mxu0
        %v2114 = vadd.f32 %v1914, %v2113
        %v2115 = vpop.f32.mrb[0].mxu0
        %v2116 = vadd.f32 %v1914, %v2115
        %2117 = vmatprep.mubr.f32.mxu0 0.0
        %2118 = vmatmul.mubr.f32.gmra.mrb[0].mxu0 %v1979
        %v2119 = vpop.f32.mrb[0].mxu0
        %v2120 = vadd.f32 %v1919, %v2119
        %v2121 = vpop.f32.mrb[0].mxu0
        %v2122 = vadd.f32 %v1919, %v2121
        %2123 = vmatprep.mubr.f32.mxu0 0.0
        %2124 = vmatmul.mubr.f32.gmra.mrb[0].mxu0 %v1982
        %v2125 = vpop.f32.mrb[0].mxu0
        %v2126 = vadd.f32 %v1924, %v2125
        %v2127 = vpop.f32.mrb[0].mxu0
        %v2128 = vadd.f32 %v1924, %v2127
        %2129 = vmatprep.mubr.f32.mxu0 0.0
        %2130 = vmatmul.mubr.f32.gmra.mrb[0].mxu0 %v1985
        %v2131 = vpop.f32.mrb[0].mxu0
        %v2132 = vadd.f32 %v1929, %v2131
        %v2133 = vpop.f32.mrb[0].mxu0
        %v2134 = vadd.f32 %v1929, %v2133
        %2135 = vmatprep.mubr.f32.mxu0 0.0
        %2136 = vmatmul.mubr.f32.gmra.mrb[0].mxu0 %v1988
        %v2137 = vpop.f32.mrb[0].mxu0
        %v2138 = vadd.f32 %v1934, %v2137
        %v2139 = vpop.f32.mrb[0].mxu0
        %v2140 = vadd.f32 %v1934, %v2139
        %2141 = vmatprep.mubr.f32.mxu0 0.0
        %2142 = vmatmul.mubr.f32.gmra.mrb[0].mxu0 %v1991
        %v2143 = vpop.f32.mrb[0].mxu0
        %v2144 = vadd.f32 %v1939, %v2143
        %v2145 = vpop.f32.mrb[0].mxu0
        %v2146 = vadd.f32 %v1939, %v2145
        %2147 = vmatprep.mubr.f32.mxu0 0.0
        %2148 = vmatmul.mubr.f32.gmra.mrb[0].mxu0 %v1994
        %v2149 = vpop.f32.mrb[0].mxu0
        %v2150 = vadd.f32 %v1944, %v2149
        %v2151 = vpop.f32.mrb[0].mxu0
        %v2152 = vadd.f32 %v1944, %v2151
        %2153 = vmatprep.mubr.f32.mxu0 0.0
        %2154 = vmatmul.mubr.f32.gmra.mrb[0].mxu0 %v1997
        %v2155 = vpop.f32.mrb[0].mxu0
        %v2156 = vadd.f32 %v1949, %v2155
        %v2157 = vpop.f32.mrb[0].mxu0
        %v2158 = vadd.f32 %v1949, %v2157
        %2159 = vdwg.mxu0
        %v2160 = vmax.f32 %v2066, 0.0
        %v2161 = vmax.f32 %v2068, 0.0
        %v2162 = vmax.f32 %v2072, 0.0
        %v2163 = vmax.f32 %v2074, 0.0
        %v2164 = vmax.f32 %v2078, 0.0
        %v2165 = vmax.f32 %v2080, 0.0
        %v2166 = vmax.f32 %v2084, 0.0
        %v2167 = vmax.f32 %v2086, 0.0
        %v2168 = vmax.f32 %v2090, 0.0
        %v2169 = vmax.f32 %v2092, 0.0
        %v2170 = vmax.f32 %v2096, 0.0
        %v2171 = vmax.f32 %v2098, 0.0
        %v2172 = vmax.f32 %v2102, 0.0
        %v2173 = vmax.f32 %v2104, 0.0
        %v2174 = vmax.f32 %v2108, 0.0
        %v2175 = vmax.f32 %v2110, 0.0
        %v2176 = vmax.f32 %v2114, 0.0
        %v2177 = vmax.f32 %v2116, 0.0
        %v2178 = vmax.f32 %v2120, 0.0
        %v2179 = vmax.f32 %v2122, 0.0
        %v2180 = vmax.f32 %v2126, 0.0
        %v2181 = vmax.f32 %v2128, 0.0
        %v2182 = vmax.f32 %v2132, 0.0
        %v2183 = vmax.f32 %v2134, 0.0
        %v2184 = vmax.f32 %v2138, 0.0
        %v2185 = vmax.f32 %v2140, 0.0
        %v2186 = vmax.f32 %v2144, 0.0
        %v2187 = vmax.f32 %v2146, 0.0
        %v2188 = vmax.f32 %v2150, 0.0
        %v2189 = vmax.f32 %v2152, 0.0
        %v2190 = vmax.f32 %v2156, 0.0
        %v2191 = vmax.f32 %v2158, 0.0
        %v2192 = vld [vmem:[%s3 + $0x180] sm:$0xff]
        %v2193 = vld [vmem:[%s3 + $0x188] sm:$0xff]
        %v2194 = vld [vmem:[%s3 + $0x190] sm:$0xff]
        %v2195 = vld [vmem:[%s3 + $0x198] sm:$0xff]
        %v2196 = vld [vmem:[%s3 + $0x1a0] sm:$0xff]
        %v2197 = vld [vmem:[%s3 + $0x1a8] sm:$0xff]
        %v2198 = vld [vmem:[%s3 + $0x1b0] sm:$0xff]
        %v2199 = vld [vmem:[%s3 + $0x1b8] sm:$0xff]
        %v2200 = vld [vmem:[%s3 + $0x1c0] sm:$0xff]
        %v2201 = vld [vmem:[%s3 + $0x1c8] sm:$0xff]
        %v2202 = vld [vmem:[%s3 + $0x1d0] sm:$0xff]
        %v2203 = vld [vmem:[%s3 + $0x1d8] sm:$0xff]
        %v2204 = vld [vmem:[%s3 + $0x1e0] sm:$0xff]
        %v2205 = vld [vmem:[%s3 + $0x1e8] sm:$0xff]
        %v2206 = vld [vmem:[%s3 + $0x1f0] sm:$0xff]
        %v2207 = vld [vmem:[%s3 + $0x1f8] sm:$0xff]
        %2209 = vset.pattern.permute.xlu0 0
        %2210 = vperm.xlu0 %2209, %v2192
        %v2211 = vpop.permute.xlu0 %2210
        %2214 = vset.pattern.permute.xlu0 0
        %2215 = vperm.xlu0 %2214, %v2193
        %v2216 = vpop.permute.xlu0 %2215
        %2219 = vset.pattern.permute.xlu0 0
        %2220 = vperm.xlu0 %2219, %v2194
        %v2221 = vpop.permute.xlu0 %2220
        %2224 = vset.pattern.permute.xlu0 0
        %2225 = vperm.xlu0 %2224, %v2195
        %v2226 = vpop.permute.xlu0 %2225
        %2229 = vset.pattern.permute.xlu0 0
        %2230 = vperm.xlu0 %2229, %v2196
        %v2231 = vpop.permute.xlu0 %2230
        %2234 = vset.pattern.permute.xlu0 0
        %2235 = vperm.xlu0 %2234, %v2197
        %v2236 = vpop.permute.xlu0 %2235
        %2239 = vset.pattern.permute.xlu0 0
        %2240 = vperm.xlu0 %2239, %v2198
        %v2241 = vpop.permute.xlu0 %2240
        %2244 = vset.pattern.permute.xlu0 0
        %2245 = vperm.xlu0 %2244, %v2199
        %v2246 = vpop.permute.xlu0 %2245
        %2249 = vset.pattern.permute.xlu0 0
        %2250 = vperm.xlu0 %2249, %v2200
        %v2251 = vpop.permute.xlu0 %2250
        %2254 = vset.pattern.permute.xlu0 0
        %2255 = vperm.xlu0 %2254, %v2201
        %v2256 = vpop.permute.xlu0 %2255
        %2259 = vset.pattern.permute.xlu0 0
        %2260 = vperm.xlu0 %2259, %v2202
        %v2261 = vpop.permute.xlu0 %2260
        %2264 = vset.pattern.permute.xlu0 0
        %2265 = vperm.xlu0 %2264, %v2203
        %v2266 = vpop.permute.xlu0 %2265
        %2269 = vset.pattern.permute.xlu0 0
        %2270 = vperm.xlu0 %2269, %v2204
        %v2271 = vpop.permute.xlu0 %2270
        %2274 = vset.pattern.permute.xlu0 0
        %2275 = vperm.xlu0 %2274, %v2205
        %v2276 = vpop.permute.xlu0 %2275
        %2279 = vset.pattern.permute.xlu0 0
        %2280 = vperm.xlu0 %2279, %v2206
        %v2281 = vpop.permute.xlu0 %2280
        %2284 = vset.pattern.permute.xlu0 0
        %2285 = vperm.xlu0 %2284, %v2207
        %v2286 = vpop.permute.xlu0 %2285
        %v2288 = vmul.f32 %v2160, %v2211
        %v2289 = vmul.f32 %v2161, %v2211
        %v2290 = vmul.f32 %v2162, %v2216
        %v2291 = vmul.f32 %v2163, %v2216
        %v2292 = vmul.f32 %v2164, %v2221
        %v2293 = vmul.f32 %v2165, %v2221
        %v2294 = vmul.f32 %v2166, %v2226
        %v2295 = vmul.f32 %v2167, %v2226
        %v2296 = vmul.f32 %v2168, %v2231
        %v2297 = vmul.f32 %v2169, %v2231
        %v2298 = vmul.f32 %v2170, %v2236
        %v2299 = vmul.f32 %v2171, %v2236
        %v2300 = vmul.f32 %v2172, %v2241
        %v2301 = vmul.f32 %v2173, %v2241
        %v2302 = vmul.f32 %v2174, %v2246
        %v2303 = vmul.f32 %v2175, %v2246
        %v2304 = vmul.f32 %v2176, %v2251
        %v2305 = vmul.f32 %v2177, %v2251
        %v2306 = vmul.f32 %v2178, %v2256
        %v2307 = vmul.f32 %v2179, %v2256
        %v2308 = vmul.f32 %v2180, %v2261
        %v2309 = vmul.f32 %v2181, %v2261
        %v2310 = vmul.f32 %v2182, %v2266
        %v2311 = vmul.f32 %v2183, %v2266
        %v2312 = vmul.f32 %v2184, %v2271
        %v2313 = vmul.f32 %v2185, %v2271
        %v2314 = vmul.f32 %v2186, %v2276
        %v2315 = vmul.f32 %v2187, %v2276
        %v2316 = vmul.f32 %v2188, %v2281
        %v2317 = vmul.f32 %v2189, %v2281
        %v2318 = vmul.f32 %v2190, %v2286
        %v2319 = vmul.f32 %v2191, %v2286
        %v2320 = vadd.f32 %v2288, %v2290
        %v2321 = vadd.f32 %v2320, %v2292
        %v2322 = vadd.f32 %v2321, %v2294
        %v2323 = vadd.f32 %v2322, %v2296
        %v2324 = vadd.f32 %v2323, %v2298
        %v2325 = vadd.f32 %v2324, %v2300
        %v2326 = vadd.f32 %v2325, %v2302
        %v2327 = vadd.f32 %v2326, %v2304
        %v2328 = vadd.f32 %v2327, %v2306
        %v2329 = vadd.f32 %v2328, %v2308
        %v2330 = vadd.f32 %v2329, %v2310
        %v2331 = vadd.f32 %v2330, %v2312
        %v2332 = vadd.f32 %v2331, %v2314
        %v2333 = vadd.f32 %v2332, %v2316
        %v2334 = vadd.f32 %v2333, %v2318
        %v2335 = vrot.slane %v2334, 4
        %v2336 = vadd.f32 %v2334, %v2335
        %v2337 = vrot.slane %v2336, 2
        %v2338 = vadd.f32 %v2336, %v2337
        %v2339 = vrot.slane %v2338, 1
        %v2340 = vadd.f32 %v2338, %v2339
        %v2341 = vadd.f32 %v2289, %v2291
        %v2342 = vadd.f32 %v2341, %v2293
        %v2343 = vadd.f32 %v2342, %v2295
        %v2344 = vadd.f32 %v2343, %v2297
        %v2345 = vadd.f32 %v2344, %v2299
        %v2346 = vadd.f32 %v2345, %v2301
        %v2347 = vadd.f32 %v2346, %v2303
        %v2348 = vadd.f32 %v2347, %v2305
        %v2349 = vadd.f32 %v2348, %v2307
        %v2350 = vadd.f32 %v2349, %v2309
        %v2351 = vadd.f32 %v2350, %v2311
        %v2352 = vadd.f32 %v2351, %v2313
        %v2353 = vadd.f32 %v2352, %v2315
        %v2354 = vadd.f32 %v2353, %v2317
        %v2355 = vadd.f32 %v2354, %v2319
        %v2356 = vrot.slane %v2355, 4
        %v2357 = vadd.f32 %v2355, %v2356
        %v2358 = vrot.slane %v2357, 2
        %v2359 = vadd.f32 %v2357, %v2358
        %v2360 = vrot.slane %v2359, 1
        %v2361 = vadd.f32 %v2359, %v2360
        %v2362 = vadd.f32 %v1837, %v2340
        %v2363 = vadd.f32 %v1838, %v2361
        %s2364 = sld [smem:[#allocation2]]
        %v2365 = vstv %s2364
        %v2366 = vadd.f32 %v2362, %v2365
        %v2367 = vadd.f32 %v2363, %v2365
        %vm2368 = vcmp.gt.f32.partialorder %v2366, 20.0
        %vm2369 = vcmp.gt.f32.partialorder %v2367, 20.0
        %v2370 = vmin.f32 %v2366, 20.0
        %v2371 = vmin.f32 %v2367, 20.0
        %v2372 = vmul.f32 %v2370, 1.442695
        %v2373 = vpow.pop %v2372
        %v2374 = vmul.f32 %v2371, 1.442695
        %v2375 = vpow.pop %v2374
        %v2376 = vadd.f32 %v2373, 1.0
        %v2377 = vlog2.pop %v2376
        %v2378 = vmul.f32 %v2377, 0.6931472
        %v2379 = vmul.f32 -0.5, %v2373
        %v2380 = vadd.f32 %v2379, 1.0
        %v2381 = vmul.f32 %v2380, %v2373
        %v2382 = vand.u32 2147483647, %v2373
        %vm2383 = vcmp.lt.f32.partialorder %v2382, 0.0004427343
        %v2384 = vsel %vm2383, %v2381, %v2378
        %v2385 = vadd.f32 %v2375, 1.0
        %v2386 = vlog2.pop %v2385
        %v2387 = vmul.f32 %v2386, 0.6931472
        %v2388 = vmul.f32 -0.5, %v2375
        %v2389 = vadd.f32 %v2388, 1.0
        %v2390 = vmul.f32 %v2389, %v2375
        %v2391 = vand.u32 2147483647, %v2375
        %vm2392 = vcmp.lt.f32.partialorder %v2391, 0.0004427343
        %v2393 = vsel %vm2392, %v2390, %v2387
        %v2394 = vsel %vm2368, %v2366, %v2384
        %v2395 = vsel %vm2369, %v2367, %v2393
        %v2398 = vcombine.low %v2394, %v2395
        %v2400 = vunpack.c.l.s4 1966171168
        %v2401 = vunpack.c.0.s8 %v2400
        %v2402 = vlaneseq
        %v2403 = vshrl.u32 %v2402, 7
        %v2404 = vsub.s32 %v2401, %v2403
        %v2405 = vrot.slane %v2398, %v2404
        %v2407 = vunpack.c.l.s4 1966171168
        %v2408 = vunpack.c.0.s8 %v2407
        %v2409 = vlaneseq
        %v2410 = vshrl.u32 %v2409, 7
        %v2411 = vsub.s32 %v2408, %v2410
        %v2412 = vrot.slane %v2405, %v2411
        %v2414 = vlaneseq
        %vm2415 = vcmp.ge.s32.totalorder %v2414, 0
        %vm2416 = vcmp.lt.s32.totalorder %v2414, 256
        %vm2417 = vmand %vm2415, %vm2416
        %2418 = vst.msk [vmem:[%s243] sm:$0x3] %vm2417, %v2412
        %s2419 = sand.u32 %s154, 1
        %s2420 = scalar_lea.sflag [#allocation4], %s2419
        %s2421 = sand.u32 %s154, 1
        %s2422 = smul.addr %s2421, 2
        %s2423 = scalar_lea.vmem [#allocation3], %s2422
        // Predicated region
        $region41: #{_spatial_attention_call.1} parent=39 // pred_check
          %p2424 = pneg %p164
        $region42: #{_spatial_attention_call.1} parent=39 // pred_check_branch
          %2426 = sbr.rel (%p2424) target = $region44
        $region43: #{_spatial_attention_call.1} parent=39 // pred_region
          %s2427 = smul.u32 2, %s25
          %s2429 = ssub.s32 32, 32
          %2430 = vsyncadd %s2420, %s2429
          %s2431 = smul.addr %s24, 2
          %s2432 = sadd.s32 %s2427, %s2431
          %s2433 = smul.addr %s2432, 16
          %s2434 = scalar_lea.hbm %s5, %s2433
          %s2436 = sshll.u32 %s2423, 4
          %s2437 = int_to_ptr.vmem [resolvable:$true] %s2436
          %2439 = dma.vmem_to_hbm [thread:$0]  %s2437, 32, %s2434, %s2420
        $region44: #{_spatial_attention_call.1} parent=39 // pred_fallthru
          _
      $region40: #{_spatial_attention_call.1} parent=5 // pred_fallthru
        _
      %p2440 = scmp.le.s32.totalorder 2, %s15
      // Predicated region
      $region45: #{_spatial_attention_call.1} parent=5 // pred_check
        %p2441 = pneg %p2440
      $region46: #{_spatial_attention_call.1} parent=5 // pred_check_branch
        %2443 = sbr.rel (%p2441) target = $region48
      $region47: #{_spatial_attention_call.1} parent=5 // pred_region
        %s2444 = ssub.s32 %s15, 2
        // Predicated region
        $region49: #{_spatial_attention_call.1} parent=47 // pred_check
          %p2445 = pneg %p170
        $region50: #{_spatial_attention_call.1} parent=47 // pred_check_branch
          %2447 = sbr.rel (%p2445) target = $region52
        $region51: #{_spatial_attention_call.1} parent=47 // pred_region
          %s2448 = sand.u32 %s155, 1
          %s2449 = scalar_lea.sflag [#allocation4], %s2448
          %s2450 = sand.u32 %s155, 1
          %s2451 = smul.addr %s2450, 2
          %s2452 = scalar_lea.vmem [#allocation3], %s2451
          %2453 = dma.done %s2449, 32
        $region52: #{_spatial_attention_call.1} parent=47 // pred_fallthru
          _
      $region48: #{_spatial_attention_call.1} parent=5 // pred_fallthru
        _
    $region6: #{_spatial_attention_call.1} parent=1 // loop_footer
      %s19 = sadd.s32 1, %s15
    $region7: #{_spatial_attention_call.1} parent=1 // loop_footer_branch
      %14 = sbr.rel target = $region3
    $region8: #{_spatial_attention_call.1} parent=1 // loop_exit
      _
    %2454 = vsyncpa [#allocation4], 1
    %s2455 = scalar_lea.sflag [#allocation4], 1
    %2456 = vsyncpa %s2455, 1

// kernel: _spatial_attention_call.1
$region0: #{_spatial_attention_call.1}
  #allocation0 [shape = 'u32[]', space=smem, size = 0x4, offset = 0x4, fixed_abs, tag = 'smem constant byte address 0x4 - core index']
  #allocation1 [shape = 'u32[144,128]{1,0:T(1,128)}', space=vmem, size = 0x12000, scoped, tag = 'internal scratch']
  #allocation2 [shape = 'f32[1,1]{1,0:T(1,128)S(6)}', space=smem, size = 0x200, scoped, tag = 'scoped memory for _spatial_attention_call.1']
  %s0 = inlined_call_operand.vmem [shape: f32[2,4,256], index: 0, kind: input, shape index: {}]
  %s1 = inlined_call_operand.vmem [shape: f32[512,4], index: 1, kind: input, shape index: {}]
  %s2 = inlined_call_operand.vmem [shape: f32[512,1], index: 2, kind: input, shape index: {}]
  %s3 = inlined_call_operand.vmem [shape: f32[512,1], index: 3, kind: input, shape index: {}]
  %s4 = inlined_call_operand.<no memory space> [shape: f32[1,1], index: 4, kind: input, shape index: {}]
  %s5 = inlined_call_operand.hbm [shape: f32[2,1,256], index: 5, kind: output, shape index: {}]
  %s6 = sld [smem:[#allocation0]]
  $region53: #{_spatial_attention_call.1} parent=0
    _
  %s8 = ssub.s32 1, %s6
  %s9 = scalar_select 0, %s8, %s6
  %10 = sst [smem:[#allocation2]] %s4
  $region1: #{_spatial_attention_call.1} parent=0
    #allocation3 [shape = 'u8[2048]{0}', space=vmem, size = 0x800, scoped, tag = 'output window, operand 0']
    #allocation4 [shape = 's32[2]{0}', space=sflag, size = 0x8, scoped, tag = 'scoped memory for _spatial_attention_call.1']
    %11 = vsyncpa [#allocation4], 0
    %s12 = scalar_lea.sflag [#allocation4], 1
    %13 = vsyncpa %s12, 0
    loop: start=0, step=1, limit=4
    $region2: #{_spatial_attention_call.1} parent=1 // loop_pre_header
      _
    $region3: #{_spatial_attention_call.1} parent=1 // loop_header
      %s15 = sphi 0, %s19
      %p16 = scmp.ge.s32.totalorder %s15, 4
      %s22 = sphi 0, %s34
      %s23 = sphi 0, %s30
      %s24 = sphi 0, %s22
      %s25 = sphi 0, %s23
      %s26 = sphi 0, %s24
      %s27 = sphi 0, %s25
      %s39 = sphi 0, %s41
      %s42 = sphi 0, %s39
      %s43 = sphi 0, %s42
      %s59 = sphi 0, %s43
      %s63 = sphi 0, %s63
      %s65 = sphi 0, %s63
      %s66 = sphi 0, %s65
      %s80 = sphi 0, %s66
      %s84 = sphi 0, %s84
      %s86 = sphi 0, %s84
      %s87 = sphi 0, %s86
      %s101 = sphi 0, %s87
      %s105 = sphi 0, %s105
      %s107 = sphi 0, %s105
      %s108 = sphi 0, %s107
      %s122 = sphi 0, %s108
      %s126 = sphi 0, %s126
      %s128 = sphi 0, %s126
      %s129 = sphi 0, %s128
      %s143 = sphi 0, %s129
      %s151 = sphi 0, %s153
      %s154 = sphi 0, %s151
      %s155 = sphi 0, %s154
      %s171 = sphi 0, %s155
    $region4: #{_spatial_attention_call.1} parent=1 // loop_header_branch
      %18 = sbr.rel (%p16) target = $region8
    $region5: #{_spatial_attention_call.1} parent=1 // loop_body
      %s20 = ssub.s32 %s15, 1
      %s21 = ssub.s32 %s15, 2
      %s28 = sadd.s32 1, %s23
      %p29 = scmp.ge.s32.totalorder %s28, 1
      %s30 = scalar_select %p29, 0, %s28
      %s31 = sadd.s32 1, %s22
      %s32 = scalar_select %p29, %s31, %s22
      %p33 = scmp.ge.s32.totalorder %s32, 2
      %s34 = scalar_select %p33, 0, %s32
      %s35 = ssub.s32 %s22, %s34
      %s36 = ssub.s32 %s23, %s30
      %s37 = sor.u32 %s35, %s36
      %p38 = scmp.eq.s32.totalorder %s37, 0
      %s40 = sadd.s32 %s39, 1
      %s41 = scalar_select %p38, %s39, %s40
      %p44 = pneg %p38
      %p45 = scmp.eq.s32.totalorder %s15, 1
      %p46 = por %p44, %p45
      %p47 = scmp.ne.s32.totalorder %s39, %s42
      %p48 = scmp.eq.s32.totalorder %s15, 0
      %p49 = por %p47, %p48
      %p50 = scmp.ne.s32.totalorder %s39, %s42
      %p51 = scmp.eq.s32.totalorder %s20, 1
      %p52 = por %p50, %p51
      %p53 = scmp.ne.s32.totalorder %s42, %s43
      %p54 = scmp.eq.s32.totalorder %s20, 0
      %p55 = por %p53, %p54
      %p56 = scmp.ne.s32.totalorder %s42, %s43
      %p57 = scmp.eq.s32.totalorder %s21, 1
      %p58 = por %p56, %p57
      %p60 = scmp.ne.s32.totalorder %s43, %s59
      %p61 = scmp.eq.s32.totalorder %s21, 0
      %p62 = por %p60, %p61
      %s64 = sadd.s32 %s63, 1
      %p67 = scmp.eq.s32.totalorder %s15, 1
      %p68 = scmp.ne.s32.totalorder %s63, %s65
      %p69 = scmp.eq.s32.totalorder %s15, 0
      %p70 = por %p68, %p69
      %p71 = scmp.ne.s32.totalorder %s63, %s65
      %p72 = scmp.eq.s32.totalorder %s20, 1
      %p73 = por %p71, %p72
      %p74 = scmp.ne.s32.totalorder %s65, %s66
      %p75 = scmp.eq.s32.totalorder %s20, 0
      %p76 = por %p74, %p75
      %p77 = scmp.ne.s32.totalorder %s65, %s66
      %p78 = scmp.eq.s32.totalorder %s21, 1
      %p79 = por %p77, %p78
      %p81 = scmp.ne.s32.totalorder %s66, %s80
      %p82 = scmp.eq.s32.totalorder %s21, 0
      %p83 = por %p81, %p82
      %s85 = sadd.s32 %s84, 1
      %p88 = scmp.eq.s32.totalorder %s15, 1
      %p89 = scmp.ne.s32.totalorder %s84, %s86
      %p90 = scmp.eq.s32.totalorder %s15, 0
      %p91 = por %p89, %p90
      %p92 = scmp.ne.s32.totalorder %s84, %s86
      %p93 = scmp.eq.s32.totalorder %s20, 1
      %p94 = por %p92, %p93
      %p95 = scmp.ne.s32.totalorder %s86, %s87
      %p96 = scmp.eq.s32.totalorder %s20, 0
      %p97 = por %p95, %p96
      %p98 = scmp.ne.s32.totalorder %s86, %s87
      %p99 = scmp.eq.s32.totalorder %s21, 1
      %p100 = por %p98, %p99
      %p102 = scmp.ne.s32.totalorder %s87, %s101
      %p103 = scmp.eq.s32.totalorder %s21, 0
      %p104 = por %p102, %p103
      %s106 = sadd.s32 %s105, 1
      %p109 = scmp.eq.s32.totalorder %s15, 1
      %p110 = scmp.ne.s32.totalorder %s105, %s107
      %p111 = scmp.eq.s32.totalorder %s15, 0
      %p112 = por %p110, %p111
      %p113 = scmp.ne.s32.totalorder %s105, %s107
      %p114 = scmp.eq.s32.totalorder %s20, 1
      %p115 = por %p113, %p114
      %p116 = scmp.ne.s32.totalorder %s107, %s108
      %p117 = scmp.eq.s32.totalorder %s20, 0
      %p118 = por %p116, %p117
      %p119 = scmp.ne.s32.totalorder %s107, %s108
      %p120 = scmp.eq.s32.totalorder %s21, 1
      %p121 = por %p119, %p120
      %p123 = scmp.ne.s32.totalorder %s108, %s122
      %p124 = scmp.eq.s32.totalorder %s21, 0
      %p125 = por %p123, %p124
      %s127 = sadd.s32 %s126, 1
      %p130 = scmp.eq.s32.totalorder %s15, 1
      %p131 = scmp.ne.s32.totalorder %s126, %s128
      %p132 = scmp.eq.s32.totalorder %s15, 0
      %p133 = por %p131, %p132
      %p134 = scmp.ne.s32.totalorder %s126, %s128
      %p135 = scmp.eq.s32.totalorder %s20, 1
      %p136 = por %p134, %p135
      %p137 = scmp.ne.s32.totalorder %s128, %s129
      %p138 = scmp.eq.s32.totalorder %s20, 0
      %p139 = por %p137, %p138
      %p140 = scmp.ne.s32.totalorder %s128, %s129
      %p141 = scmp.eq.s32.totalorder %s21, 1
      %p142 = por %p140, %p141
      %p144 = scmp.ne.s32.totalorder %s129, %s143
      %p145 = scmp.eq.s32.totalorder %s21, 0
      %p146 = por %p144, %p145
      %s147 = ssub.s32 %s22, %s34
      %s148 = ssub.s32 %s23, %s30
      %s149 = sor.u32 %s147, %s148
      %p150 = scmp.eq.s32.totalorder %s149, 0
      %s152 = sadd.s32 %s151, 1
      %s153 = scalar_select %p150, %s151, %s152
      %p156 = pneg %p150
      %p157 = scmp.eq.s32.totalorder %s15, 1
      %p158 = por %p156, %p157
      %p159 = scmp.ne.s32.totalorder %s151, %s154
      %p160 = scmp.eq.s32.totalorder %s15, 0
      %p161 = por %p159, %p160
      %p162 = scmp.ne.s32.totalorder %s151, %s154
      %p163 = scmp.eq.s32.totalorder %s20, 1
      %p164 = por %p162, %p163
      %p165 = scmp.ne.s32.totalorder %s154, %s155
      %p166 = scmp.eq.s32.totalorder %s20, 0
      %p167 = por %p165, %p166
      %p168 = scmp.ne.s32.totalorder %s154, %s155
      %p169 = scmp.eq.s32.totalorder %s21, 1
      %p170 = por %p168, %p169
      %p172 = scmp.ne.s32.totalorder %s155, %s171
      %p173 = scmp.eq.s32.totalorder %s21, 0
      %p174 = por %p172, %p173
      %p175 = scmp.le.s32.totalorder 1, %s15
      %p176 = scmp.lt.s32.totalorder %s15, 3
      %p177 = pnand %p175, %p176
      %p178 = pneg %p177
      // Predicated region
      $region9: #{_spatial_attention_call.1} parent=5 // pred_check
        _
      $region10: #{_spatial_attention_call.1} parent=5 // pred_check_branch
        %180 = sbr.rel (%p177) target = $region12
      $region11: #{_spatial_attention_call.1} parent=5 // pred_region
        %s181 = ssub.s32 %s15, 1
        // Predicated region
        $region13: #{_spatial_attention_call.1} parent=11 // pred_check
          %p182 = pneg %p76
        $region14: #{_spatial_attention_call.1} parent=11 // pred_check_branch
          %184 = sbr.rel (%p182) target = $region16
        $region15: #{_spatial_attention_call.1} parent=11 // pred_region
          _
        $region16: #{_spatial_attention_call.1} parent=11 // pred_fallthru
          _
        // Predicated region
        $region17: #{_spatial_attention_call.1} parent=11 // pred_check
          %p185 = pneg %p97
        $region18: #{_spatial_attention_call.1} parent=11 // pred_check_branch
          %187 = sbr.rel (%p185) target = $region20
        $region19: #{_spatial_attention_call.1} parent=11 // pred_region
          _
        $region20: #{_spatial_attention_call.1} parent=11 // pred_fallthru
          _
        // Predicated region
        $region21: #{_spatial_attention_call.1} parent=11 // pred_check
          %p188 = pneg %p118
        $region22: #{_spatial_attention_call.1} parent=11 // pred_check_branch
          %190 = sbr.rel (%p188) target = $region24
        $region23: #{_spatial_attention_call.1} parent=11 // pred_region
          _
        $region24: #{_spatial_attention_call.1} parent=11 // pred_fallthru
          _
        // Predicated region
        $region25: #{_spatial_attention_call.1} parent=11 // pred_check
          %p191 = pneg %p139
        $region26: #{_spatial_attention_call.1} parent=11 // pred_check_branch
          %193 = sbr.rel (%p191) target = $region28
        $region27: #{_spatial_attention_call.1} parent=11 // pred_region
          _
        $region28: #{_spatial_attention_call.1} parent=11 // pred_fallthru
          _
      $region12: #{_spatial_attention_call.1} parent=5 // pred_fallthru
        _
      %p194 = scmp.lt.s32.totalorder %s15, 2
      // Predicated region
      $region29: #{_spatial_attention_call.1} parent=5 // pred_check
        %p195 = pneg %p194
      $region30: #{_spatial_attention_call.1} parent=5 // pred_check_branch
        %197 = sbr.rel (%p195) target = $region32
      $region31: #{_spatial_attention_call.1} parent=5 // pred_region
        // Predicated region
        $region33: #{_spatial_attention_call.1} parent=31 // pred_check
          %p198 = pneg %p49
        $region34: #{_spatial_attention_call.1} parent=31 // pred_check_branch
          %200 = sbr.rel (%p198) target = $region36
        $region35: #{_spatial_attention_call.1} parent=31 // pred_region
          %s201 = smul.u32 2, %s23
          %p202 = scmp.lt.s32.totalorder %s22, 1
          %s203 = scalar_select %p202, %s22, 1
          %p204 = scmp.lt.s32.totalorder %s201, 1
          %s205 = scalar_select %p204, %s201, 1
          %s206 = smul.addr %s203, 2
          %s207 = sadd.s32 %s205, %s206
          %s208 = smul.addr %s207, 4
          %s209 = scalar_lea.vmem %s0, %s208
          %s210 = smul.u32 2, %s23
        $region36: #{_spatial_attention_call.1} parent=31 // pred_fallthru
          _
      $region32: #{_spatial_attention_call.1} parent=5 // pred_fallthru
        _
      %p211 = scmp.le.s32.totalorder 1, %s15
      %p212 = scmp.lt.s32.totalorder %s15, 3
      %p213 = pnand %p211, %p212
      %p214 = pneg %p213
      // Predicated region
      $region37: #{_spatial_attention_call.1} parent=5 // pred_check
        _
      $region38: #{_spatial_attention_call.1} parent=5 // pred_check_branch
        %216 = sbr.rel (%p213) target = $region40
      $region39: #{_spatial_attention_call.1} parent=5 // pred_region
        %s217 = ssub.s32 %s15, 1
        %s218 = smul.u32 2, %s25
        %p219 = scmp.lt.s32.totalorder %s24, 1
        %s220 = scalar_select %p219, %s24, 1
        %p221 = scmp.lt.s32.totalorder %s218, 1
        %s222 = scalar_select %p221, %s218, 1
        %s223 = smul.addr %s220, 2
        %s224 = sadd.s32 %s222, %s223
        %s225 = smul.addr %s224, 4
        %s226 = scalar_lea.vmem %s0, %s225
        %p227 = pneg %p55
        %p228 = pneg %p52
        %p229 = pneg %p76
        %p230 = pneg %p73
        %p231 = pneg %p97
        %p232 = pneg %p94
        %p233 = pneg %p118
        %p234 = pneg %p115
        %p235 = pneg %p139
        %p236 = pneg %p136
        %p237 = pneg %p167
        %p238 = pneg %p164
        %s239 = sand.u32 %s154, 1
        %s240 = scalar_lea.sflag [#allocation4], %s239
        %s241 = sand.u32 %s154, 1
        %s242 = smul.addr %s241, 2
        %s243 = scalar_lea.vmem [#allocation3], %s242
        %s244 = smul.u32 2, %s25
        %p245 = scmp.lt.s32.totalorder %s24, 1
        %s246 = scalar_select %p245, %s24, 1
        %p247 = scmp.lt.s32.totalorder %s244, 1
        %s248 = scalar_select %p247, %s244, 1
        %s249 = smul.addr %s246, 2
        %s250 = sadd.s32 %s248, %s249
        %s251 = smul.addr %s250, 4
        %s252 = scalar_lea.vmem %s0, %s251
        %s253 = smul.u32 2, %s25
        %s254 = smul.u32 2, %s25
        %v255 = vld [vmem:[%s252] sm:$0xff]
        %v256 = vld [vmem:[%s1] sm:$0xff]
        %v257 = vld [vmem:[%s1 + $0x8] sm:$0xff]
        %v258 = vld [vmem:[%s1 + $0x10] sm:$0xff]
        %v259 = vld [vmem:[%s1 + $0x18] sm:$0xff]
        %v260 = vld [vmem:[%s1 + $0x20] sm:$0xff]
        %v261 = vld [vmem:[%s1 + $0x28] sm:$0xff]
        %v262 = vld [vmem:[%s1 + $0x30] sm:$0xff]
        %v263 = vld [vmem:[%s1 + $0x38] sm:$0xff]
        %v264 = vld [vmem:[%s1 + $0x40] sm:$0xff]
        %v265 = vld [vmem:[%s1 + $0x48] sm:$0xff]
        %v266 = vld [vmem:[%s1 + $0x50] sm:$0xff]
        %v267 = vld [vmem:[%s1 + $0x58] sm:$0xff]
        %v268 = vld [vmem:[%s1 + $0x60] sm:$0xff]
        %v269 = vld [vmem:[%s1 + $0x68] sm:$0xff]
        %v270 = vld [vmem:[%s1 + $0x70] sm:$0xff]
        %v271 = vld [vmem:[%s1 + $0x78] sm:$0xff]
        %v272 = vld [vmem:[%s2] sm:$0xff]
        %v273 = vld [vmem:[%s2 + $0x8] sm:$0xff]
        %v274 = vld [vmem:[%s2 + $0x10] sm:$0xff]
        %v275 = vld [vmem:[%s2 + $0x18] sm:$0xff]
        %v276 = vld [vmem:[%s2 + $0x20] sm:$0xff]
        %v277 = vld [vmem:[%s2 + $0x28] sm:$0xff]
        %v278 = vld [vmem:[%s2 + $0x30] sm:$0xff]
        %v279 = vld [vmem:[%s2 + $0x38] sm:$0xff]
        %v280 = vld [vmem:[%s2 + $0x40] sm:$0xff]
        %v281 = vld [vmem:[%s2 + $0x48] sm:$0xff]
        %v282 = vld [vmem:[%s2 + $0x50] sm:$0xff]
        %v283 = vld [vmem:[%s2 + $0x58] sm:$0xff]
        %v284 = vld [vmem:[%s2 + $0x60] sm:$0xff]
        %v285 = vld [vmem:[%s2 + $0x68] sm:$0xff]
        %v286 = vld [vmem:[%s2 + $0x70] sm:$0xff]
        %v287 = vld [vmem:[%s2 + $0x78] sm:$0xff]
        %289 = vset.pattern.permute.xlu0 0
        %290 = vperm.xlu0 %289, %v272
        %v291 = vpop.permute.xlu0 %290
        %294 = vset.pattern.permute.xlu0 0
        %295 = vperm.xlu0 %294, %v273
        %v296 = vpop.permute.xlu0 %295
        %299 = vset.pattern.permute.xlu0 0
        %300 = vperm.xlu0 %299, %v274
        %v301 = vpop.permute.xlu0 %300
        %304 = vset.pattern.permute.xlu0 0
        %305 = vperm.xlu0 %304, %v275
        %v306 = vpop.permute.xlu0 %305
        %309 = vset.pattern.permute.xlu0 0
        %310 = vperm.xlu0 %309, %v276
        %v311 = vpop.permute.xlu0 %310
        %314 = vset.pattern.permute.xlu0 0
        %315 = vperm.xlu0 %314, %v277
        %v316 = vpop.permute.xlu0 %315
        %319 = vset.pattern.permute.xlu0 0
        %320 = vperm.xlu0 %319, %v278
        %v321 = vpop.permute.xlu0 %320
        %324 = vset.pattern.permute.xlu0 0
        %325 = vperm.xlu0 %324, %v279
        %v326 = vpop.permute.xlu0 %325
        %329 = vset.pattern.permute.xlu0 0
        %330 = vperm.xlu0 %329, %v280
        %v331 = vpop.permute.xlu0 %330
        %334 = vset.pattern.permute.xlu0 0
        %335 = vperm.xlu0 %334, %v281
        %v336 = vpop.permute.xlu0 %335
        %339 = vset.pattern.permute.xlu0 0
        %340 = vperm.xlu0 %339, %v282
        %v341 = vpop.permute.xlu0 %340
        %344 = vset.pattern.permute.xlu0 0
        %345 = vperm.xlu0 %344, %v283
        %v346 = vpop.permute.xlu0 %345
        %349 = vset.pattern.permute.xlu0 0
        %350 = vperm.xlu0 %349, %v284
        %v351 = vpop.permute.xlu0 %350
        %354 = vset.pattern.permute.xlu0 0
        %355 = vperm.xlu0 %354, %v285
        %v356 = vpop.permute.xlu0 %355
        %359 = vset.pattern.permute.xlu0 0
        %360 = vperm.xlu0 %359, %v286
        %v361 = vpop.permute.xlu0 %360
        %364 = vset.pattern.permute.xlu0 0
        %365 = vperm.xlu0 %364, %v287
        %v366 = vpop.permute.xlu0 %365
        %v369 = vcombine.high %v255, %v255
        %vm370 = vcmask 31744
        %v372 = vsel %vm370, %v256, 0
        %v375 = vsel %vm370, %v257, 0
        %v378 = vsel %vm370, %v258, 0
        %v381 = vsel %vm370, %v259, 0
        %v384 = vsel %vm370, %v260, 0
        %v387 = vsel %vm370, %v261, 0
        %v390 = vsel %vm370, %v262, 0
        %v393 = vsel %vm370, %v263, 0
        %v396 = vsel %vm370, %v264, 0
        %v399 = vsel %vm370, %v265, 0
        %v402 = vsel %vm370, %v266, 0
        %v405 = vsel %vm370, %v267, 0
        %v408 = vsel %vm370, %v268, 0
        %v411 = vsel %vm370, %v269, 0
        %v414 = vsel %vm370, %v270, 0
        %v417 = vsel %vm370, %v271, 0
        %vm419 = vcmask 1043456
        %v420 = vsel %vm419, %v255, 0
        %v422 = vsel %vm419, %v369, 0
        %424 = vmatprep.subr.mxu0 %v422
        %425 = vmatpush1.msra.mxu0 %v420
        %426 = vmatprep.subr.mxu0 0.0
        %427 = vmatpush1.msra.mxu0 0.0
        %428 = vmatprep.subr.mxu0 0.0
        %429 = vmatpush1.msra.mxu0 0.0
        %430 = vmatprep.subr.mxu0 0.0
        %431 = vmatpush1.msra.mxu0 0.0
        %432 = vmatprep.subr.mxu0 0.0
        %433 = vmatpush1.msra.mxu0 0.0
        %434 = vmatprep.subr.mxu0 0.0
        %435 = vmatpush1.msra.mxu0 0.0
        %436 = vmatprep.subr.mxu0 0.0
        %437 = vmatpush1.msra.mxu0 0.0
        %438 = vmatprep.subr.mxu0 0.0
        %439 = vmatpush1.msra.mxu0 0.0
        %440 = vmatprep.subr.mxu0 0.0
        %441 = vmatpush1.msra.mxu0 0.0
        %442 = vmatprep.subr.mxu0 0.0
        %443 = vmatpush1.msra.mxu0 0.0
        %444 = vmatprep.subr.mxu0 0.0
        %445 = vmatpush1.msra.mxu0 0.0
        %446 = vmatprep.subr.mxu0 0.0
        %447 = vmatpush1.msra.mxu0 0.0
        %448 = vmatprep.subr.mxu0 0.0
        %449 = vmatpush1.msra.mxu0 0.0
        %450 = vmatprep.subr.mxu0 0.0
        %451 = vmatpush1.msra.mxu0 0.0
        %452 = vmatprep.subr.mxu0 0.0
        %453 = vmatpush1.msra.mxu0 0.0
        %454 = vmatprep.subr.mxu0 0.0
        %455 = vmatpush1.msra.mxu0 0.0
        %456 = vmatprep.subr.mxu0 0.0
        %457 = vmatpush1.msra.mxu0 0.0
        %458 = vmatprep.subr.mxu0 0.0
        %459 = vmatpush1.msra.mxu0 0.0
        %460 = vmatprep.subr.mxu0 0.0
        %461 = vmatpush1.msra.mxu0 0.0
        %462 = vmatprep.subr.mxu0 0.0
        %463 = vmatpush1.msra.mxu0 0.0
        %464 = vmatprep.subr.mxu0 0.0
        %465 = vmatpush1.msra.mxu0 0.0
        %466 = vmatprep.subr.mxu0 0.0
        %467 = vmatpush1.msra.mxu0 0.0
        %468 = vmatprep.subr.mxu0 0.0
        %469 = vmatpush1.msra.mxu0 0.0
        %470 = vmatprep.subr.mxu0 0.0
        %471 = vmatpush1.msra.mxu0 0.0
        %472 = vmatprep.subr.mxu0 0.0
        %473 = vmatpush1.msra.mxu0 0.0
        %474 = vmatprep.subr.mxu0 0.0
        %475 = vmatpush1.msra.mxu0 0.0
        %476 = vmatprep.subr.mxu0 0.0
        %477 = vmatpush1.msra.mxu0 0.0
        %478 = vmatprep.subr.mxu0 0.0
        %479 = vmatpush1.msra.mxu0 0.0
        %480 = vmatprep.subr.mxu0 0.0
        %481 = vmatpush1.msra.mxu0 0.0
        %482 = vmatprep.subr.mxu0 0.0
        %483 = vmatpush1.msra.mxu0 0.0
        %484 = vmatprep.subr.mxu0 0.0
        %485 = vmatpush1.msra.mxu0 0.0
        %486 = vmatprep.subr.mxu0 0.0
        %487 = vmatpush1.msra.mxu0 0.0
        %488 = vmatprep.mubr.f32.mxu0 0.0
        %489 = vmatmul.mubr.f32.gmra.mrb[0].mxu0 %v372
        %v490 = vpop.f32.mrb[0].mxu0
        %v491 = vadd.f32 %v291, %v490
        %v492 = vpop.f32.mrb[0].mxu0
        %v493 = vadd.f32 %v291, %v492
        %494 = vmatprep.mubr.f32.mxu0 0.0
        %495 = vmatmul.mubr.f32.gmra.mrb[0].mxu0 %v375
        %v496 = vpop.f32.mrb[0].mxu0
        %v497 = vadd.f32 %v296, %v496
        %v498 = vpop.f32.mrb[0].mxu0
        %v499 = vadd.f32 %v296, %v498
        %500 = vmatprep.mubr.f32.mxu0 0.0
        %501 = vmatmul.mubr.f32.gmra.mrb[0].mxu0 %v378
        %v502 = vpop.f32.mrb[0].mxu0
        %v503 = vadd.f32 %v301, %v502
        %v504 = vpop.f32.mrb[0].mxu0
        %v505 = vadd.f32 %v301, %v504
        %506 = vmatprep.mubr.f32.mxu0 0.0
        %507 = vmatmul.mubr.f32.gmra.mrb[0].mxu0 %v381
        %v508 = vpop.f32.mrb[0].mxu0
        %v509 = vadd.f32 %v306, %v508
        %v510 = vpop.f32.mrb[0].mxu0
        %v511 = vadd.f32 %v306, %v510
        %512 = vmatprep.mubr.f32.mxu0 0.0
        %513 = vmatmul.mubr.f32.gmra.mrb[0].mxu0 %v384
        %v514 = vpop.f32.mrb[0].mxu0
        %v515 = vadd.f32 %v311, %v514
        %v516 = vpop.f32.mrb[0].mxu0
        %v517 = vadd.f32 %v311, %v516
        %518 = vmatprep.mubr.f32.mxu0 0.0
        %519 = vmatmul.mubr.f32.gmra.mrb[0].mxu0 %v387
        %v520 = vpop.f32.mrb[0].mxu0
        %v521 = vadd.f32 %v316, %v520
        %v522 = vpop.f32.mrb[0].mxu0
        %v523 = vadd.f32 %v316, %v522
        %524 = vmatprep.mubr.f32.mxu0 0.0
        %525 = vmatmul.mubr.f32.gmra.mrb[0].mxu0 %v390
        %v526 = vpop.f32.mrb[0].mxu0
        %v527 = vadd.f32 %v321, %v526
        %v528 = vpop.f32.mrb[0].mxu0
        %v529 = vadd.f32 %v321, %v528
        %530 = vmatprep.mubr.f32.mxu0 0.0
        %531 = vmatmul.mubr.f32.gmra.mrb[0].mxu0 %v393
        %v532 = vpop.f32.mrb[0].mxu0
        %v533 = vadd.f32 %v326, %v532
        %v534 = vpop.f32.mrb[0].mxu0
        %v535 = vadd.f32 %v326, %v534
        %536 = vmatprep.mubr.f32.mxu0 0.0
        %537 = vmatmul.mubr.f32.gmra.mrb[0].mxu0 %v396
        %v538 = vpop.f32.mrb[0].mxu0
        %v539 = vadd.f32 %v331, %v538
        %v540 = vpop.f32.mrb[0].mxu0
        %v541 = vadd.f32 %v331, %v540
        %542 = vmatprep.mubr.f32.mxu0 0.0
        %543 = vmatmul.mubr.f32.gmra.mrb[0].mxu0 %v399
        %v544 = vpop.f32.mrb[0].mxu0
        %v545 = vadd.f32 %v336, %v544
        %v546 = vpop.f32.mrb[0].mxu0
        %v547 = vadd.f32 %v336, %v546
        %548 = vmatprep.mubr.f32.mxu0 0.0
        %549 = vmatmul.mubr.f32.gmra.mrb[0].mxu0 %v402
        %v550 = vpop.f32.mrb[0].mxu0
        %v551 = vadd.f32 %v341, %v550
        %v552 = vpop.f32.mrb[0].mxu0
        %v553 = vadd.f32 %v341, %v552
        %554 = vmatprep.mubr.f32.mxu0 0.0
        %555 = vmatmul.mubr.f32.gmra.mrb[0].mxu0 %v405
        %v556 = vpop.f32.mrb[0].mxu0
        %v557 = vadd.f32 %v346, %v556
        %v558 = vpop.f32.mrb[0].mxu0
        %v559 = vadd.f32 %v346, %v558
        %560 = vmatprep.mubr.f32.mxu0 0.0
        %561 = vmatmul.mubr.f32.gmra.mrb[0].mxu0 %v408
        %v562 = vpop.f32.mrb[0].mxu0
        %v563 = vadd.f32 %v351, %v562
        %v564 = vpop.f32.mrb[0].mxu0
        %v565 = vadd.f32 %v351, %v564
        %566 = vmatprep.mubr.f32.mxu0 0.0
        %567 = vmatmul.mubr.f32.gmra.mrb[0].mxu0 %v411
        %v568 = vpop.f32.mrb[0].mxu0
        %v569 = vadd.f32 %v356, %v568
        %v570 = vpop.f32.mrb[0].mxu0
        %v571 = vadd.f32 %v356, %v570
        %572 = vmatprep.mubr.f32.mxu0 0.0
        %573 = vmatmul.mubr.f32.gmra.mrb[0].mxu0 %v414
        %v574 = vpop.f32.mrb[0].mxu0
        %v575 = vadd.f32 %v361, %v574
        %v576 = vpop.f32.mrb[0].mxu0
        %v577 = vadd.f32 %v361, %v576
        %578 = vmatprep.mubr.f32.mxu0 0.0
        %579 = vmatmul.mubr.f32.gmra.mrb[0].mxu0 %v417
        %v580 = vpop.f32.mrb[0].mxu0
        %v581 = vadd.f32 %v366, %v580
        %v582 = vpop.f32.mrb[0].mxu0
        %v583 = vadd.f32 %v366, %v582
        %584 = vdwg.mxu0
        %v585 = vmax.f32 %v491, 0.0
        %v586 = vmax.f32 %v493, 0.0
        %v587 = vmax.f32 %v497, 0.0
        %v588 = vmax.f32 %v499, 0.0
        %v589 = vmax.f32 %v503, 0.0
        %v590 = vmax.f32 %v505, 0.0
        %v591 = vmax.f32 %v509, 0.0
        %v592 = vmax.f32 %v511, 0.0
        %v593 = vmax.f32 %v515, 0.0
        %v594 = vmax.f32 %v517, 0.0
        %v595 = vmax.f32 %v521, 0.0
        %v596 = vmax.f32 %v523, 0.0
        %v597 = vmax.f32 %v527, 0.0
        %v598 = vmax.f32 %v529, 0.0
        %v599 = vmax.f32 %v533, 0.0
        %v600 = vmax.f32 %v535, 0.0
        %v601 = vmax.f32 %v539, 0.0
        %v602 = vmax.f32 %v541, 0.0
        %v603 = vmax.f32 %v545, 0.0
        %v604 = vmax.f32 %v547, 0.0
        %v605 = vmax.f32 %v551, 0.0
        %v606 = vmax.f32 %v553, 0.0
        %v607 = vmax.f32 %v557, 0.0
        %v608 = vmax.f32 %v559, 0.0
        %v609 = vmax.f32 %v563, 0.0
        %v610 = vmax.f32 %v565, 0.0
        %v611 = vmax.f32 %v569, 0.0
        %v612 = vmax.f32 %v571, 0.0
        %v613 = vmax.f32 %v575, 0.0
        %v614 = vmax.f32 %v577, 0.0
        %v615 = vmax.f32 %v581, 0.0
        %v616 = vmax.f32 %v583, 0.0
        %v617 = vld [vmem:[%s3] sm:$0xff]
        %v618 = vld [vmem:[%s3 + $0x8] sm:$0xff]
        %v619 = vld [vmem:[%s3 + $0x10] sm:$0xff]
        %v620 = vld [vmem:[%s3 + $0x18] sm:$0xff]
        %v621 = vld [vmem:[%s3 + $0x20] sm:$0xff]
        %v622 = vld [vmem:[%s3 + $0x28] sm:$0xff]
        %v623 = vld [vmem:[%s3 + $0x30] sm:$0xff]
        %v624 = vld [vmem:[%s3 + $0x38] sm:$0xff]
        %v625 = vld [vmem:[%s3 + $0x40] sm:$0xff]
        %v626 = vld [vmem:[%s3 + $0x48] sm:$0xff]
        %v627 = vld [vmem:[%s3 + $0x50] sm:$0xff]
        %v628 = vld [vmem:[%s3 + $0x58] sm:$0xff]
        %v629 = vld [vmem:[%s3 + $0x60] sm:$0xff]
        %v630 = vld [vmem:[%s3 + $0x68] sm:$0xff]
        %v631 = vld [vmem:[%s3 + $0x70] sm:$0xff]
        %v632 = vld [vmem:[%s3 + $0x78] sm:$0xff]
        %634 = vset.pattern.permute.xlu0 0
        %635 = vperm.xlu0 %634, %v617
        %v636 = vpop.permute.xlu0 %635
        %639 = vset.pattern.permute.xlu0 0
        %640 = vperm.xlu0 %639, %v618
        %v641 = vpop.permute.xlu0 %640
        %644 = vset.pattern.permute.xlu0 0
        %645 = vperm.xlu0 %644, %v619
        %v646 = vpop.permute.xlu0 %645
        %649 = vset.pattern.permute.xlu0 0
        %650 = vperm.xlu0 %649, %v620
        %v651 = vpop.permute.xlu0 %650
        %654 = vset.pattern.permute.xlu0 0
        %655 = vperm.xlu0 %654, %v621
        %v656 = vpop.permute.xlu0 %655
        %659 = vset.pattern.permute.xlu0 0
        %660 = vperm.xlu0 %659, %v622
        %v661 = vpop.permute.xlu0 %660
        %664 = vset.pattern.permute.xlu0 0
        %665 = vperm.xlu0 %664, %v623
        %v666 = vpop.permute.xlu0 %665
        %669 = vset.pattern.permute.xlu0 0
        %670 = vperm.xlu0 %669, %v624
        %v671 = vpop.permute.xlu0 %670
        %674 = vset.pattern.permute.xlu0 0
        %675 = vperm.xlu0 %674, %v625
        %v676 = vpop.permute.xlu0 %675
        %679 = vset.pattern.permute.xlu0 0
        %680 = vperm.xlu0 %679, %v626
        %v681 = vpop.permute.xlu0 %680
        %684 = vset.pattern.permute.xlu0 0
        %685 = vperm.xlu0 %684, %v627
        %v686 = vpop.permute.xlu0 %685
        %689 = vset.pattern.permute.xlu0 0
        %690 = vperm.xlu0 %689, %v628
        %v691 = vpop.permute.xlu0 %690
        %694 = vset.pattern.permute.xlu0 0
        %695 = vperm.xlu0 %694, %v629
        %v696 = vpop.permute.xlu0 %695
        %699 = vset.pattern.permute.xlu0 0
        %700 = vperm.xlu0 %699, %v630
        %v701 = vpop.permute.xlu0 %700
        %704 = vset.pattern.permute.xlu0 0
        %705 = vperm.xlu0 %704, %v631
        %v706 = vpop.permute.xlu0 %705
        %709 = vset.pattern.permute.xlu0 0
        %710 = vperm.xlu0 %709, %v632
        %v711 = vpop.permute.xlu0 %710
        %v713 = vmul.f32 %v585, %v636
        %v714 = vmul.f32 %v586, %v636
        %v715 = vmul.f32 %v587, %v641
        %v716 = vmul.f32 %v588, %v641
        %v717 = vmul.f32 %v589, %v646
        %v718 = vmul.f32 %v590, %v646
        %v719 = vmul.f32 %v591, %v651
        %v720 = vmul.f32 %v592, %v651
        %v721 = vmul.f32 %v593, %v656
        %v722 = vmul.f32 %v594, %v656
        %v723 = vmul.f32 %v595, %v661
        %v724 = vmul.f32 %v596, %v661
        %v725 = vmul.f32 %v597, %v666
        %v726 = vmul.f32 %v598, %v666
        %v727 = vmul.f32 %v599, %v671
        %v728 = vmul.f32 %v600, %v671
        %v729 = vmul.f32 %v601, %v676
        %v730 = vmul.f32 %v602, %v676
        %v731 = vmul.f32 %v603, %v681
        %v732 = vmul.f32 %v604, %v681
        %v733 = vmul.f32 %v605, %v686
        %v734 = vmul.f32 %v606, %v686
        %v735 = vmul.f32 %v607, %v691
        %v736 = vmul.f32 %v608, %v691
        %v737 = vmul.f32 %v609, %v696
        %v738 = vmul.f32 %v610, %v696
        %v739 = vmul.f32 %v611, %v701
        %v740 = vmul.f32 %v612, %v701
        %v741 = vmul.f32 %v613, %v706
        %v742 = vmul.f32 %v614, %v706
        %v743 = vmul.f32 %v615, %v711
        %v744 = vmul.f32 %v616, %v711
        %v745 = vadd.f32 %v713, %v715
        %v746 = vadd.f32 %v745, %v717
        %v747 = vadd.f32 %v746, %v719
        %v748 = vadd.f32 %v747, %v721
        %v749 = vadd.f32 %v748, %v723
        %v750 = vadd.f32 %v749, %v725
        %v751 = vadd.f32 %v750, %v727
        %v752 = vadd.f32 %v751, %v729
        %v753 = vadd.f32 %v752, %v731
        %v754 = vadd.f32 %v753, %v733
        %v755 = vadd.f32 %v754, %v735
        %v756 = vadd.f32 %v755, %v737
        %v757 = vadd.f32 %v756, %v739
        %v758 = vadd.f32 %v757, %v741
        %v759 = vadd.f32 %v758, %v743
        %v760 = vrot.slane %v759, 4
        %v761 = vadd.f32 %v759, %v760
        %v762 = vrot.slane %v761, 2
        %v763 = vadd.f32 %v761, %v762
        %v764 = vrot.slane %v763, 1
        %v765 = vadd.f32 %v763, %v764
        %v766 = vadd.f32 %v714, %v716
        %v767 = vadd.f32 %v766, %v718
        %v768 = vadd.f32 %v767, %v720
        %v769 = vadd.f32 %v768, %v722
        %v770 = vadd.f32 %v769, %v724
        %v771 = vadd.f32 %v770, %v726
        %v772 = vadd.f32 %v771, %v728
        %v773 = vadd.f32 %v772, %v730
        %v774 = vadd.f32 %v773, %v732
        %v775 = vadd.f32 %v774, %v734
        %v776 = vadd.f32 %v775, %v736
        %v777 = vadd.f32 %v776, %v738
        %v778 = vadd.f32 %v777, %v740
        %v779 = vadd.f32 %v778, %v742
        %v780 = vadd.f32 %v779, %v744
        %v781 = vrot.slane %v780, 4
        %v782 = vadd.f32 %v780, %v781
        %v783 = vrot.slane %v782, 2
        %v784 = vadd.f32 %v782, %v783
        %v785 = vrot.slane %v784, 1
        %v786 = vadd.f32 %v784, %v785
        %v787 = vadd.f32 %v765, 0.0
        %v788 = vadd.f32 %v786, 0.0
        %v789 = vld [vmem:[%s1 + $0x80] sm:$0xff]
        %v790 = vld [vmem:[%s1 + $0x88] sm:$0xff]
        %v791 = vld [vmem:[%s1 + $0x90] sm:$0xff]
        %v792 = vld [vmem:[%s1 + $0x98] sm:$0xff]
        %v793 = vld [vmem:[%s1 + $0xa0] sm:$0xff]
        %v794 = vld [vmem:[%s1 + $0xa8] sm:$0xff]
        %v795 = vld [vmem:[%s1 + $0xb0] sm:$0xff]
        %v796 = vld [vmem:[%s1 + $0xb8] sm:$0xff]
        %v797 = vld [vmem:[%s1 + $0xc0] sm:$0xff]
        %v798 = vld [vmem:[%s1 + $0xc8] sm:$0xff]
        %v799 = vld [vmem:[%s1 + $0xd0] sm:$0xff]
        %v800 = vld [vmem:[%s1 + $0xd8] sm:$0xff]
        %v801 = vld [vmem:[%s1 + $0xe0] sm:$0xff]
        %v802 = vld [vmem:[%s1 + $0xe8] sm:$0xff]
        %v803 = vld [vmem:[%s1 + $0xf0] sm:$0xff]
        %v804 = vld [vmem:[%s1 + $0xf8] sm:$0xff]
        %v805 = vld [vmem:[%s2 + $0x80] sm:$0xff]
        %v806 = vld [vmem:[%s2 + $0x88] sm:$0xff]
        %v807 = vld [vmem:[%s2 + $0x90] sm:$0xff]
        %v808 = vld [vmem:[%s2 + $0x98] sm:$0xff]
        %v809 = vld [vmem:[%s2 + $0xa0] sm:$0xff]
        %v810 = vld [vmem:[%s2 + $0xa8] sm:$0xff]
        %v811 = vld [vmem:[%s2 + $0xb0] sm:$0xff]
        %v812 = vld [vmem:[%s2 + $0xb8] sm:$0xff]
        %v813 = vld [vmem:[%s2 + $0xc0] sm:$0xff]
        %v814 = vld [vmem:[%s2 + $0xc8] sm:$0xff]
        %v815 = vld [vmem:[%s2 + $0xd0] sm:$0xff]
        %v816 = vld [vmem:[%s2 + $0xd8] sm:$0xff]
        %v817 = vld [vmem:[%s2 + $0xe0] sm:$0xff]
        %v818 = vld [vmem:[%s2 + $0xe8] sm:$0xff]
        %v819 = vld [vmem:[%s2 + $0xf0] sm:$0xff]
        %v820 = vld [vmem:[%s2 + $0xf8] sm:$0xff]
        %822 = vset.pattern.permute.xlu0 0
        %823 = vperm.xlu0 %822, %v805
        %v824 = vpop.permute.xlu0 %823
        %827 = vset.pattern.permute.xlu0 0
        %828 = vperm.xlu0 %827, %v806
        %v829 = vpop.permute.xlu0 %828
        %832 = vset.pattern.permute.xlu0 0
        %833 = vperm.xlu0 %832, %v807
        %v834 = vpop.permute.xlu0 %833
        %837 = vset.pattern.permute.xlu0 0
        %838 = vperm.xlu0 %837, %v808
        %v839 = vpop.permute.xlu0 %838
        %842 = vset.pattern.permute.xlu0 0
        %843 = vperm.xlu0 %842, %v809
        %v844 = vpop.permute.xlu0 %843
        %847 = vset.pattern.permute.xlu0 0
        %848 = vperm.xlu0 %847, %v810
        %v849 = vpop.permute.xlu0 %848
        %852 = vset.pattern.permute.xlu0 0
        %853 = vperm.xlu0 %852, %v811
        %v854 = vpop.permute.xlu0 %853
        %857 = vset.pattern.permute.xlu0 0
        %858 = vperm.xlu0 %857, %v812
        %v859 = vpop.permute.xlu0 %858
        %862 = vset.pattern.permute.xlu0 0
        %863 = vperm.xlu0 %862, %v813
        %v864 = vpop.permute.xlu0 %863
        %867 = vset.pattern.permute.xlu0 0
        %868 = vperm.xlu0 %867, %v814
        %v869 = vpop.permute.xlu0 %868
        %872 = vset.pattern.permute.xlu0 0
        %873 = vperm.xlu0 %872, %v815
        %v874 = vpop.permute.xlu0 %873
        %877 = vset.pattern.permute.xlu0 0
        %878 = vperm.xlu0 %877, %v816
        %v879 = vpop.permute.xlu0 %878
        %882 = vset.pattern.permute.xlu0 0
        %883 = vperm.xlu0 %882, %v817
        %v884 = vpop.permute.xlu0 %883
        %887 = vset.pattern.permute.xlu0 0
        %888 = vperm.xlu0 %887, %v818
        %v889 = vpop.permute.xlu0 %888
        %892 = vset.pattern.permute.xlu0 0
        %893 = vperm.xlu0 %892, %v819
        %v894 = vpop.permute.xlu0 %893
        %897 = vset.pattern.permute.xlu0 0
        %898 = vperm.xlu0 %897, %v820
        %v899 = vpop.permute.xlu0 %898
        %v902 = vsel %vm370, %v789, 0
        %v905 = vsel %vm370, %v790, 0
        %v908 = vsel %vm370, %v791, 0
        %v911 = vsel %vm370, %v792, 0
        %v914 = vsel %vm370, %v793, 0
        %v917 = vsel %vm370, %v794, 0
        %v920 = vsel %vm370, %v795, 0
        %v923 = vsel %vm370, %v796, 0
        %v926 = vsel %vm370, %v797, 0
        %v929 = vsel %vm370, %v798, 0
        %v932 = vsel %vm370, %v799, 0
        %v935 = vsel %vm370, %v800, 0
        %v938 = vsel %vm370, %v801, 0
        %v941 = vsel %vm370, %v802, 0
        %v944 = vsel %vm370, %v803, 0
        %v947 = vsel %vm370, %v804, 0
        %949 = vmatprep.subr.mxu0 %v422
        %950 = vmatpush1.msra.mxu0 %v420
        %951 = vmatprep.subr.mxu0 0.0
        %952 = vmatpush1.msra.mxu0 0.0
        %953 = vmatprep.subr.mxu0 0.0
        %954 = vmatpush1.msra.mxu0 0.0
        %955 = vmatprep.subr.mxu0 0.0
        %956 = vmatpush1.msra.mxu0 0.0
        %957 = vmatprep.subr.mxu0 0.0
        %958 = vmatpush1.msra.mxu0 0.0
        %959 = vmatprep.subr.mxu0 0.0
        %960 = vmatpush1.msra.mxu0 0.0
        %961 = vmatprep.subr.mxu0 0.0
        %962 = vmatpush1.msra.mxu0 0.0
        %963 = vmatprep.subr.mxu0 0.0
        %964 = vmatpush1.msra.mxu0 0.0
        %965 = vmatprep.subr.mxu0 0.0
        %966 = vmatpush1.msra.mxu0 0.0
        %967 = vmatprep.subr.mxu0 0.0
        %968 = vmatpush1.msra.mxu0 0.0
        %969 = vmatprep.subr.mxu0 0.0
        %970 = vmatpush1.msra.mxu0 0.0
        %971 = vmatprep.subr.mxu0 0.0
        %972 = vmatpush1.msra.mxu0 0.0
        %973 = vmatprep.subr.mxu0 0.0
        %974 = vmatpush1.msra.mxu0 0.0
        %975 = vmatprep.subr.mxu0 0.0
        %976 = vmatpush1.msra.mxu0 0.0
        %977 = vmatprep.subr.mxu0 0.0
        %978 = vmatpush1.msra.mxu0 0.0
        %979 = vmatprep.subr.mxu0 0.0
        %980 = vmatpush1.msra.mxu0 0.0
        %981 = vmatprep.subr.mxu0 0.0
        %982 = vmatpush1.msra.mxu0 0.0
        %983 = vmatprep.subr.mxu0 0.0
        %984 = vmatpush1.msra.mxu0 0.0
        %985 = vmatprep.subr.mxu0 0.0
        %986 = vmatpush1.msra.mxu0 0.0
        %987 = vmatprep.subr.mxu0 0.0
        %988 = vmatpush1.msra.mxu0 0.0
        %989 = vmatprep.subr.mxu0 0.0
        %990 = vmatpush1.msra.mxu0 0.0
        %991 = vmatprep.subr.mxu0 0.0
        %992 = vmatpush1.msra.mxu0 0.0
        %993 = vmatprep.subr.mxu0 0.0
        %994 = vmatpush1.msra.mxu0 0.0
        %995 = vmatprep.subr.mxu0 0.0
        %996 = vmatpush1.msra.mxu0 0.0
        %997 = vmatprep.subr.mxu0 0.0
        %998 = vmatpush1.msra.mxu0 0.0
        %999 = vmatprep.subr.mxu0 0.0
        %1000 = vmatpush1.msra.mxu0 0.0
        %1001 = vmatprep.subr.mxu0 0.0
        %1002 = vmatpush1.msra.mxu0 0.0
        %1003 = vmatprep.subr.mxu0 0.0
        %1004 = vmatpush1.msra.mxu0 0.0
        %1005 = vmatprep.subr.mxu0 0.0
        %1006 = vmatpush1.msra.mxu0 0.0
        %1007 = vmatprep.subr.mxu0 0.0
        %1008 = vmatpush1.msra.mxu0 0.0
        %1009 = vmatprep.subr.mxu0 0.0
        %1010 = vmatpush1.msra.mxu0 0.0
        %1011 = vmatprep.subr.mxu0 0.0
        %1012 = vmatpush1.msra.mxu0 0.0
        %1013 = vmatprep.mubr.f32.mxu0 0.0
        %1014 = vmatmul.mubr.f32.gmra.mrb[0].mxu0 %v902
        %v1015 = vpop.f32.mrb[0].mxu0
        %v1016 = vadd.f32 %v824, %v1015
        %v1017 = vpop.f32.mrb[0].mxu0
        %v1018 = vadd.f32 %v824, %v1017
        %1019 = vmatprep.mubr.f32.mxu0 0.0
        %1020 = vmatmul.mubr.f32.gmra.mrb[0].mxu0 %v905
        %v1021 = vpop.f32.mrb[0].mxu0
        %v1022 = vadd.f32 %v829, %v1021
        %v1023 = vpop.f32.mrb[0].mxu0
        %v1024 = vadd.f32 %v829, %v1023
        %1025 = vmatprep.mubr.f32.mxu0 0.0
        %1026 = vmatmul.mubr.f32.gmra.mrb[0].mxu0 %v908
        %v1027 = vpop.f32.mrb[0].mxu0
        %v1028 = vadd.f32 %v834, %v1027
        %v1029 = vpop.f32.mrb[0].mxu0
        %v1030 = vadd.f32 %v834, %v1029
        %1031 = vmatprep.mubr.f32.mxu0 0.0
        %1032 = vmatmul.mubr.f32.gmra.mrb[0].mxu0 %v911
        %v1033 = vpop.f32.mrb[0].mxu0
        %v1034 = vadd.f32 %v839, %v1033
        %v1035 = vpop.f32.mrb[0].mxu0
        %v1036 = vadd.f32 %v839, %v1035
        %1037 = vmatprep.mubr.f32.mxu0 0.0
        %1038 = vmatmul.mubr.f32.gmra.mrb[0].mxu0 %v914
        %v1039 = vpop.f32.mrb[0].mxu0
        %v1040 = vadd.f32 %v844, %v1039
        %v1041 = vpop.f32.mrb[0].mxu0
        %v1042 = vadd.f32 %v844, %v1041
        %1043 = vmatprep.mubr.f32.mxu0 0.0
        %1044 = vmatmul.mubr.f32.gmra.mrb[0].mxu0 %v917
        %v1045 = vpop.f32.mrb[0].mxu0
        %v1046 = vadd.f32 %v849, %v1045
        %v1047 = vpop.f32.mrb[0].mxu0
        %v1048 = vadd.f32 %v849, %v1047
        %1049 = vmatprep.mubr.f32.mxu0 0.0
        %1050 = vmatmul.mubr.f32.gmra.mrb[0].mxu0 %v920
        %v1051 = vpop.f32.mrb[0].mxu0
        %v1052 = vadd.f32 %v854, %v1051
        %v1053 = vpop.f32.mrb[0].mxu0
        %v1054 = vadd.f32 %v854, %v1053
        %1055 = vmatprep.mubr.f32.mxu0 0.0
        %1056 = vmatmul.mubr.f32.gmra.mrb[0].mxu0 %v923
        %v1057 = vpop.f32.mrb[0].mxu0
        %v1058 = vadd.f32 %v859, %v1057
        %v1059 = vpop.f32.mrb[0].mxu0
        %v1060 = vadd.f32 %v859, %v1059
        %1061 = vmatprep.mubr.f32.mxu0 0.0
        %1062 = vmatmul.mubr.f32.gmra.mrb[0].mxu0 %v926
        %v1063 = vpop.f32.mrb[0].mxu0
        %v1064 = vadd.f32 %v864, %v1063
        %v1065 = vpop.f32.mrb[0].mxu0
        %v1066 = vadd.f32 %v864, %v1065
        %1067 = vmatprep.mubr.f32.mxu0 0.0
        %1068 = vmatmul.mubr.f32.gmra.mrb[0].mxu0 %v929
        %v1069 = vpop.f32.mrb[0].mxu0
        %v1070 = vadd.f32 %v869, %v1069
        %v1071 = vpop.f32.mrb[0].mxu0
        %v1072 = vadd.f32 %v869, %v1071
        %1073 = vmatprep.mubr.f32.mxu0 0.0
        %1074 = vmatmul.mubr.f32.gmra.mrb[0].mxu0 %v932
        %v1075 = vpop.f32.mrb[0].mxu0
        %v1076 = vadd.f32 %v874, %v1075
        %v1077 = vpop.f32.mrb[0].mxu0
        %v1078 = vadd.f32 %v874, %v1077
        %1079 = vmatprep.mubr.f32.mxu0 0.0
        %1080 = vmatmul.mubr.f32.gmra.mrb[0].mxu0 %v935
        %v1081 = vpop.f32.mrb[0].mxu0
        %v1082 = vadd.f32 %v879, %v1081
        %v1083 = vpop.f32.mrb[0].mxu0
        %v1084 = vadd.f32 %v879, %v1083
        %1085 = vmatprep.mubr.f32.mxu0 0.0
        %1086 = vmatmul.mubr.f32.gmra.mrb[0].mxu0 %v938
        %v1087 = vpop.f32.mrb[0].mxu0
        %v1088 = vadd.f32 %v884, %v1087
        %v1089 = vpop.f32.mrb[0].mxu0
        %v1090 = vadd.f32 %v884, %v1089
        %1091 = vmatprep.mubr.f32.mxu0 0.0
        %1092 = vmatmul.mubr.f32.gmra.mrb[0].mxu0 %v941
        %v1093 = vpop.f32.mrb[0].mxu0
        %v1094 = vadd.f32 %v889, %v1093
        %v1095 = vpop.f32.mrb[0].mxu0
        %v1096 = vadd.f32 %v889, %v1095
        %1097 = vmatprep.mubr.f32.mxu0 0.0
        %1098 = vmatmul.mubr.f32.gmra.mrb[0].mxu0 %v944
        %v1099 = vpop.f32.mrb[0].mxu0
        %v1100 = vadd.f32 %v894, %v1099
        %v1101 = vpop.f32.mrb[0].mxu0
        %v1102 = vadd.f32 %v894, %v1101
        %1103 = vmatprep.mubr.f32.mxu0 0.0
        %1104 = vmatmul.mubr.f32.gmra.mrb[0].mxu0 %v947
        %v1105 = vpop.f32.mrb[0].mxu0
        %v1106 = vadd.f32 %v899, %v1105
        %v1107 = vpop.f32.mrb[0].mxu0
        %v1108 = vadd.f32 %v899, %v1107
        %1109 = vdwg.mxu0
        %v1110 = vmax.f32 %v1016, 0.0
        %v1111 = vmax.f32 %v1018, 0.0
        %v1112 = vmax.f32 %v1022, 0.0
        %v1113 = vmax.f32 %v1024, 0.0
        %v1114 = vmax.f32 %v1028, 0.0
        %v1115 = vmax.f32 %v1030, 0.0
        %v1116 = vmax.f32 %v1034, 0.0
        %v1117 = vmax.f32 %v1036, 0.0
        %v1118 = vmax.f32 %v1040, 0.0
        %v1119 = vmax.f32 %v1042, 0.0
        %v1120 = vmax.f32 %v1046, 0.0
        %v1121 = vmax.f32 %v1048, 0.0
        %v1122 = vmax.f32 %v1052, 0.0
        %v1123 = vmax.f32 %v1054, 0.0
        %v1124 = vmax.f32 %v1058, 0.0
        %v1125 = vmax.f32 %v1060, 0.0
        %v1126 = vmax.f32 %v1064, 0.0
        %v1127 = vmax.f32 %v1066, 0.0
        %v1128 = vmax.f32 %v1070, 0.0
        %v1129 = vmax.f32 %v1072, 0.0
        %v1130 = vmax.f32 %v1076, 0.0
        %v1131 = vmax.f32 %v1078, 0.0
        %v1132 = vmax.f32 %v1082, 0.0
        %v1133 = vmax.f32 %v1084, 0.0
        %v1134 = vmax.f32 %v1088, 0.0
        %v1135 = vmax.f32 %v1090, 0.0
        %v1136 = vmax.f32 %v1094, 0.0
        %v1137 = vmax.f32 %v1096, 0.0
        %v1138 = vmax.f32 %v1100, 0.0
        %v1139 = vmax.f32 %v1102, 0.0
        %v1140 = vmax.f32 %v1106, 0.0
        %v1141 = vmax.f32 %v1108, 0.0
        %v1142 = vld [vmem:[%s3 + $0x80] sm:$0xff]
        %v1143 = vld [vmem:[%s3 + $0x88] sm:$0xff]
        %v1144 = vld [vmem:[%s3 + $0x90] sm:$0xff]
        %v1145 = vld [vmem:[%s3 + $0x98] sm:$0xff]
        %v1146 = vld [vmem:[%s3 + $0xa0] sm:$0xff]
        %v1147 = vld [vmem:[%s3 + $0xa8] sm:$0xff]
        %v1148 = vld [vmem:[%s3 + $0xb0] sm:$0xff]
        %v1149 = vld [vmem:[%s3 + $0xb8] sm:$0xff]
        %v1150 = vld [vmem:[%s3 + $0xc0] sm:$0xff]
        %v1151 = vld [vmem:[%s3 + $0xc8] sm:$0xff]
        %v1152 = vld [vmem:[%s3 + $0xd0] sm:$0xff]
        %v1153 = vld [vmem:[%s3 + $0xd8] sm:$0xff]
        %v1154 = vld [vmem:[%s3 + $0xe0] sm:$0xff]
        %v1155 = vld [vmem:[%s3 + $0xe8] sm:$0xff]
        %v1156 = vld [vmem:[%s3 + $0xf0] sm:$0xff]
        %v1157 = vld [vmem:[%s3 + $0xf8] sm:$0xff]
        %1159 = vset.pattern.permute.xlu0 0
        %1160 = vperm.xlu0 %1159, %v1142
        %v1161 = vpop.permute.xlu0 %1160
        %1164 = vset.pattern.permute.xlu0 0
        %1165 = vperm.xlu0 %1164, %v1143
        %v1166 = vpop.permute.xlu0 %1165
        %1169 = vset.pattern.permute.xlu0 0
        %1170 = vperm.xlu0 %1169, %v1144
        %v1171 = vpop.permute.xlu0 %1170
        %1174 = vset.pattern.permute.xlu0 0
        %1175 = vperm.xlu0 %1174, %v1145
        %v1176 = vpop.permute.xlu0 %1175
        %1179 = vset.pattern.permute.xlu0 0
        %1180 = vperm.xlu0 %1179, %v1146
        %v1181 = vpop.permute.xlu0 %1180
        %1184 = vset.pattern.permute.xlu0 0
        %1185 = vperm.xlu0 %1184, %v1147
        %v1186 = vpop.permute.xlu0 %1185
        %1189 = vset.pattern.permute.xlu0 0
        %1190 = vperm.xlu0 %1189, %v1148
        %v1191 = vpop.permute.xlu0 %1190
        %1194 = vset.pattern.permute.xlu0 0
        %1195 = vperm.xlu0 %1194, %v1149
        %v1196 = vpop.permute.xlu0 %1195
        %1199 = vset.pattern.permute.xlu0 0
        %1200 = vperm.xlu0 %1199, %v1150
        %v1201 = vpop.permute.xlu0 %1200
        %1204 = vset.pattern.permute.xlu0 0
        %1205 = vperm.xlu0 %1204, %v1151
        %v1206 = vpop.permute.xlu0 %1205
        %1209 = vset.pattern.permute.xlu0 0
        %1210 = vperm.xlu0 %1209, %v1152
        %v1211 = vpop.permute.xlu0 %1210
        %1214 = vset.pattern.permute.xlu0 0
        %1215 = vperm.xlu0 %1214, %v1153
        %v1216 = vpop.permute.xlu0 %1215
        %1219 = vset.pattern.permute.xlu0 0
        %1220 = vperm.xlu0 %1219, %v1154
        %v1221 = vpop.permute.xlu0 %1220
        %1224 = vset.pattern.permute.xlu0 0
        %1225 = vperm.xlu0 %1224, %v1155
        %v1226 = vpop.permute.xlu0 %1225
        %1229 = vset.pattern.permute.xlu0 0
        %1230 = vperm.xlu0 %1229, %v1156
        %v1231 = vpop.permute.xlu0 %1230
        %1234 = vset.pattern.permute.xlu0 0
        %1235 = vperm.xlu0 %1234, %v1157
        %v1236 = vpop.permute.xlu0 %1235
        %v1238 = vmul.f32 %v1110, %v1161
        %v1239 = vmul.f32 %v1111, %v1161
        %v1240 = vmul.f32 %v1112, %v1166
        %v1241 = vmul.f32 %v1113, %v1166
        %v1242 = vmul.f32 %v1114, %v1171
        %v1243 = vmul.f32 %v1115, %v1171
        %v1244 = vmul.f32 %v1116, %v1176
        %v1245 = vmul.f32 %v1117, %v1176
        %v1246 = vmul.f32 %v1118, %v1181
        %v1247 = vmul.f32 %v1119, %v1181
        %v1248 = vmul.f32 %v1120, %v1186
        %v1249 = vmul.f32 %v1121, %v1186
        %v1250 = vmul.f32 %v1122, %v1191
        %v1251 = vmul.f32 %v1123, %v1191
        %v1252 = vmul.f32 %v1124, %v1196
        %v1253 = vmul.f32 %v1125, %v1196
        %v1254 = vmul.f32 %v1126, %v1201
        %v1255 = vmul.f32 %v1127, %v1201
        %v1256 = vmul.f32 %v1128, %v1206
        %v1257 = vmul.f32 %v1129, %v1206
        %v1258 = vmul.f32 %v1130, %v1211
        %v1259 = vmul.f32 %v1131, %v1211
        %v1260 = vmul.f32 %v1132, %v1216
        %v1261 = vmul.f32 %v1133, %v1216
        %v1262 = vmul.f32 %v1134, %v1221
        %v1263 = vmul.f32 %v1135, %v1221
        %v1264 = vmul.f32 %v1136, %v1226
        %v1265 = vmul.f32 %v1137, %v1226
        %v1266 = vmul.f32 %v1138, %v1231
        %v1267 = vmul.f32 %v1139, %v1231
        %v1268 = vmul.f32 %v1140, %v1236
        %v1269 = vmul.f32 %v1141, %v1236
        %v1270 = vadd.f32 %v1238, %v1240
        %v1271 = vadd.f32 %v1270, %v1242
        %v1272 = vadd.f32 %v1271, %v1244
        %v1273 = vadd.f32 %v1272, %v1246
        %v1274 = vadd.f32 %v1273, %v1248
        %v1275 = vadd.f32 %v1274, %v1250
        %v1276 = vadd.f32 %v1275, %v1252
        %v1277 = vadd.f32 %v1276, %v1254
        %v1278 = vadd.f32 %v1277, %v1256
        %v1279 = vadd.f32 %v1278, %v1258
        %v1280 = vadd.f32 %v1279, %v1260
        %v1281 = vadd.f32 %v1280, %v1262
        %v1282 = vadd.f32 %v1281, %v1264
        %v1283 = vadd.f32 %v1282, %v1266
        %v1284 = vadd.f32 %v1283, %v1268
        %v1285 = vrot.slane %v1284, 4
        %v1286 = vadd.f32 %v1284, %v1285
        %v1287 = vrot.slane %v1286, 2
        %v1288 = vadd.f32 %v1286, %v1287
        %v1289 = vrot.slane %v1288, 1
        %v1290 = vadd.f32 %v1288, %v1289
        %v1291 = vadd.f32 %v1239, %v1241
        %v1292 = vadd.f32 %v1291, %v1243
        %v1293 = vadd.f32 %v1292, %v1245
        %v1294 = vadd.f32 %v1293, %v1247
        %v1295 = vadd.f32 %v1294, %v1249
        %v1296 = vadd.f32 %v1295, %v1251
        %v1297 = vadd.f32 %v1296, %v1253
        %v1298 = vadd.f32 %v1297, %v1255
        %v1299 = vadd.f32 %v1298, %v1257
        %v1300 = vadd.f32 %v1299, %v1259
        %v1301 = vadd.f32 %v1300, %v1261
        %v1302 = vadd.f32 %v1301, %v1263
        %v1303 = vadd.f32 %v1302, %v1265
        %v1304 = vadd.f32 %v1303, %v1267
        %v1305 = vadd.f32 %v1304, %v1269
        %v1306 = vrot.slane %v1305, 4
        %v1307 = vadd.f32 %v1305, %v1306
        %v1308 = vrot.slane %v1307, 2
        %v1309 = vadd.f32 %v1307, %v1308
        %v1310 = vrot.slane %v1309, 1
        %v1311 = vadd.f32 %v1309, %v1310
        %v1312 = vadd.f32 %v787, %v1290
        %v1313 = vadd.f32 %v788, %v1311
        %v1314 = vld [vmem:[%s1 + $0x100] sm:$0xff]
        %v1315 = vld [vmem:[%s1 + $0x108] sm:$0xff]
        %v1316 = vld [vmem:[%s1 + $0x110] sm:$0xff]
        %v1317 = vld [vmem:[%s1 + $0x118] sm:$0xff]
        %v1318 = vld [vmem:[%s1 + $0x120] sm:$0xff]
        %v1319 = vld [vmem:[%s1 + $0x128] sm:$0xff]
        %v1320 = vld [vmem:[%s1 + $0x130] sm:$0xff]
        %v1321 = vld [vmem:[%s1 + $0x138] sm:$0xff]
        %v1322 = vld [vmem:[%s1 + $0x140] sm:$0xff]
        %v1323 = vld [vmem:[%s1 + $0x148] sm:$0xff]
        %v1324 = vld [vmem:[%s1 + $0x150] sm:$0xff]
        %v1325 = vld [vmem:[%s1 + $0x158] sm:$0xff]
        %v1326 = vld [vmem:[%s1 + $0x160] sm:$0xff]
        %v1327 = vld [vmem:[%s1 + $0x168] sm:$0xff]
        %v1328 = vld [vmem:[%s1 + $0x170] sm:$0xff]
        %v1329 = vld [vmem:[%s1 + $0x178] sm:$0xff]
        %v1330 = vld [vmem:[%s2 + $0x100] sm:$0xff]
        %v1331 = vld [vmem:[%s2 + $0x108] sm:$0xff]
        %v1332 = vld [vmem:[%s2 + $0x110] sm:$0xff]
        %v1333 = vld [vmem:[%s2 + $0x118] sm:$0xff]
        %v1334 = vld [vmem:[%s2 + $0x120] sm:$0xff]
        %v1335 = vld [vmem:[%s2 + $0x128] sm:$0xff]
        %v1336 = vld [vmem:[%s2 + $0x130] sm:$0xff]
        %v1337 = vld [vmem:[%s2 + $0x138] sm:$0xff]
        %v1338 = vld [vmem:[%s2 + $0x140] sm:$0xff]
        %v1339 = vld [vmem:[%s2 + $0x148] sm:$0xff]
        %v1340 = vld [vmem:[%s2 + $0x150] sm:$0xff]
        %v1341 = vld [vmem:[%s2 + $0x158] sm:$0xff]
        %v1342 = vld [vmem:[%s2 + $0x160] sm:$0xff]
        %v1343 = vld [vmem:[%s2 + $0x168] sm:$0xff]
        %v1344 = vld [vmem:[%s2 + $0x170] sm:$0xff]
        %v1345 = vld [vmem:[%s2 + $0x178] sm:$0xff]
        %1347 = vset.pattern.permute.xlu0 0
        %1348 = vperm.xlu0 %1347, %v1330
        %v1349 = vpop.permute.xlu0 %1348
        %1352 = vset.pattern.permute.xlu0 0
        %1353 = vperm.xlu0 %1352, %v1331
        %v1354 = vpop.permute.xlu0 %1353
        %1357 = vset.pattern.permute.xlu0 0
        %1358 = vperm.xlu0 %1357, %v1332
        %v1359 = vpop.permute.xlu0 %1358
        %1362 = vset.pattern.permute.xlu0 0
        %1363 = vperm.xlu0 %1362, %v1333
        %v1364 = vpop.permute.xlu0 %1363
        %1367 = vset.pattern.permute.xlu0 0
        %1368 = vperm.xlu0 %1367, %v1334
        %v1369 = vpop.permute.xlu0 %1368
        %1372 = vset.pattern.permute.xlu0 0
        %1373 = vperm.xlu0 %1372, %v1335
        %v1374 = vpop.permute.xlu0 %1373
        %1377 = vset.pattern.permute.xlu0 0
        %1378 = vperm.xlu0 %1377, %v1336
        %v1379 = vpop.permute.xlu0 %1378
        %1382 = vset.pattern.permute.xlu0 0
        %1383 = vperm.xlu0 %1382, %v1337
        %v1384 = vpop.permute.xlu0 %1383
        %1387 = vset.pattern.permute.xlu0 0
        %1388 = vperm.xlu0 %1387, %v1338
        %v1389 = vpop.permute.xlu0 %1388
        %1392 = vset.pattern.permute.xlu0 0
        %1393 = vperm.xlu0 %1392, %v1339
        %v1394 = vpop.permute.xlu0 %1393
        %1397 = vset.pattern.permute.xlu0 0
        %1398 = vperm.xlu0 %1397, %v1340
        %v1399 = vpop.permute.xlu0 %1398
        %1402 = vset.pattern.permute.xlu0 0
        %1403 = vperm.xlu0 %1402, %v1341
        %v1404 = vpop.permute.xlu0 %1403
        %1407 = vset.pattern.permute.xlu0 0
        %1408 = vperm.xlu0 %1407, %v1342
        %v1409 = vpop.permute.xlu0 %1408
        %1412 = vset.pattern.permute.xlu0 0
        %1413 = vperm.xlu0 %1412, %v1343
        %v1414 = vpop.permute.xlu0 %1413
        %1417 = vset.pattern.permute.xlu0 0
        %1418 = vperm.xlu0 %1417, %v1344
        %v1419 = vpop.permute.xlu0 %1418
        %1422 = vset.pattern.permute.xlu0 0
        %1423 = vperm.xlu0 %1422, %v1345
        %v1424 = vpop.permute.xlu0 %1423
        %v1427 = vsel %vm370, %v1314, 0
        %v1430 = vsel %vm370, %v1315, 0
        %v1433 = vsel %vm370, %v1316, 0
        %v1436 = vsel %vm370, %v1317, 0
        %v1439 = vsel %vm370, %v1318, 0
        %v1442 = vsel %vm370, %v1319, 0
        %v1445 = vsel %vm370, %v1320, 0
        %v1448 = vsel %vm370, %v1321, 0
        %v1451 = vsel %vm370, %v1322, 0
        %v1454 = vsel %vm370, %v1323, 0
        %v1457 = vsel %vm370, %v1324, 0
        %v1460 = vsel %vm370, %v1325, 0
        %v1463 = vsel %vm370, %v1326, 0
        %v1466 = vsel %vm370, %v1327, 0
        %v1469 = vsel %vm370, %v1328, 0
        %v1472 = vsel %vm370, %v1329, 0
        %1474 = vmatprep.subr.mxu0 %v422
        %1475 = vmatpush1.msra.mxu0 %v420
        %1476 = vmatprep.subr.mxu0 0.0
        %1477 = vmatpush1.msra.mxu0 0.0
        %1478 = vmatprep.subr.mxu0 0.0
        %1479 = vmatpush1.msra.mxu0 0.0
        %1480 = vmatprep.subr.mxu0 0.0
        %1481 = vmatpush1.msra.mxu0 0.0
        %1482 = vmatprep.subr.mxu0 0.0
        %1483 = vmatpush1.msra.mxu0 0.0
        %1484 = vmatprep.subr.mxu0 0.0
        %1485 = vmatpush1.msra.mxu0 0.0
        %1486 = vmatprep.subr.mxu0 0.0
        %1487 = vmatpush1.msra.mxu0 0.0
        %1488 = vmatprep.subr.mxu0 0.0
        %1489 = vmatpush1.msra.mxu0 0.0
        %1490 = vmatprep.subr.mxu0 0.0
        %1491 = vmatpush1.msra.mxu0 0.0
        %1492 = vmatprep.subr.mxu0 0.0
        %1493 = vmatpush1.msra.mxu0 0.0
        %1494 = vmatprep.subr.mxu0 0.0
        %1495 = vmatpush1.msra.mxu0 0.0
        %1496 = vmatprep.subr.mxu0 0.0
        %1497 = vmatpush1.msra.mxu0 0.0
        %1498 = vmatprep.subr.mxu0 0.0
        %1499 = vmatpush1.msra.mxu0 0.0
        %1500 = vmatprep.subr.mxu0 0.0
        %1501 = vmatpush1.msra.mxu0 0.0
        %1502 = vmatprep.subr.mxu0 0.0
        %1503 = vmatpush1.msra.mxu0 0.0
        %1504 = vmatprep.subr.mxu0 0.0
        %1505 = vmatpush1.msra.mxu0 0.0
        %1506 = vmatprep.subr.mxu0 0.0
        %1507 = vmatpush1.msra.mxu0 0.0
        %1508 = vmatprep.subr.mxu0 0.0
        %1509 = vmatpush1.msra.mxu0 0.0
        %1510 = vmatprep.subr.mxu0 0.0
        %1511 = vmatpush1.msra.mxu0 0.0
        %1512 = vmatprep.subr.mxu0 0.0
        %1513 = vmatpush1.msra.mxu0 0.0
        %1514 = vmatprep.subr.mxu0 0.0
        %1515 = vmatpush1.msra.mxu0 0.0
        %1516 = vmatprep.subr.mxu0 0.0
        %1517 = vmatpush1.msra.mxu0 0.0
        %1518 = vmatprep.subr.mxu0 0.0
        %1519 = vmatpush1.msra.mxu0 0.0
        %1520 = vmatprep.subr.mxu0 0.0
        %1521 = vmatpush1.msra.mxu0 0.0
        %1522 = vmatprep.subr.mxu0 0.0
        %1523 = vmatpush1.msra.mxu0 0.0
        %1524 = vmatprep.subr.mxu0 0.0
        %1525 = vmatpush1.msra.mxu0 0.0
        %1526 = vmatprep.subr.mxu0 0.0
        %1527 = vmatpush1.msra.mxu0 0.0
        %1528 = vmatprep.subr.mxu0 0.0
        %1529 = vmatpush1.msra.mxu0 0.0
        %1530 = vmatprep.subr.mxu0 0.0
        %1531 = vmatpush1.msra.mxu0 0.0
        %1532 = vmatprep.subr.mxu0 0.0
        %1533 = vmatpush1.msra.mxu0 0.0
        %1534 = vmatprep.subr.mxu0 0.0
        %1535 = vmatpush1.msra.mxu0 0.0
        %1536 = vmatprep.subr.mxu0 0.0
        %1537 = vmatpush1.msra.mxu0 0.0
        %1538 = vmatprep.mubr.f32.mxu0 0.0
        %1539 = vmatmul.mubr.f32.gmra.mrb[0].mxu0 %v1427
        %v1540 = vpop.f32.mrb[0].mxu0
        %v1541 = vadd.f32 %v1349, %v1540
        %v1542 = vpop.f32.mrb[0].mxu0
        %v1543 = vadd.f32 %v1349, %v1542
        %1544 = vmatprep.mubr.f32.mxu0 0.0
        %1545 = vmatmul.mubr.f32.gmra.mrb[0].mxu0 %v1430
        %v1546 = vpop.f32.mrb[0].mxu0
        %v1547 = vadd.f32 %v1354, %v1546
        %v1548 = vpop.f32.mrb[0].mxu0
        %v1549 = vadd.f32 %v1354, %v1548
        %1550 = vmatprep.mubr.f32.mxu0 0.0
        %1551 = vmatmul.mubr.f32.gmra.mrb[0].mxu0 %v1433
        %v1552 = vpop.f32.mrb[0].mxu0
        %v1553 = vadd.f32 %v1359, %v1552
        %v1554 = vpop.f32.mrb[0].mxu0
        %v1555 = vadd.f32 %v1359, %v1554
        %1556 = vmatprep.mubr.f32.mxu0 0.0
        %1557 = vmatmul.mubr.f32.gmra.mrb[0].mxu0 %v1436
        %v1558 = vpop.f32.mrb[0].mxu0
        %v1559 = vadd.f32 %v1364, %v1558
        %v1560 = vpop.f32.mrb[0].mxu0
        %v1561 = vadd.f32 %v1364, %v1560
        %1562 = vmatprep.mubr.f32.mxu0 0.0
        %1563 = vmatmul.mubr.f32.gmra.mrb[0].mxu0 %v1439
        %v1564 = vpop.f32.mrb[0].mxu0
        %v1565 = vadd.f32 %v1369, %v1564
        %v1566 = vpop.f32.mrb[0].mxu0
        %v1567 = vadd.f32 %v1369, %v1566
        %1568 = vmatprep.mubr.f32.mxu0 0.0
        %1569 = vmatmul.mubr.f32.gmra.mrb[0].mxu0 %v1442
        %v1570 = vpop.f32.mrb[0].mxu0
        %v1571 = vadd.f32 %v1374, %v1570
        %v1572 = vpop.f32.mrb[0].mxu0
        %v1573 = vadd.f32 %v1374, %v1572
        %1574 = vmatprep.mubr.f32.mxu0 0.0
        %1575 = vmatmul.mubr.f32.gmra.mrb[0].mxu0 %v1445
        %v1576 = vpop.f32.mrb[0].mxu0
        %v1577 = vadd.f32 %v1379, %v1576
        %v1578 = vpop.f32.mrb[0].mxu0
        %v1579 = vadd.f32 %v1379, %v1578
        %1580 = vmatprep.mubr.f32.mxu0 0.0
        %1581 = vmatmul.mubr.f32.gmra.mrb[0].mxu0 %v1448
        %v1582 = vpop.f32.mrb[0].mxu0
        %v1583 = vadd.f32 %v1384, %v1582
        %v1584 = vpop.f32.mrb[0].mxu0
        %v1585 = vadd.f32 %v1384, %v1584
        %1586 = vmatprep.mubr.f32.mxu0 0.0
        %1587 = vmatmul.mubr.f32.gmra.mrb[0].mxu0 %v1451
        %v1588 = vpop.f32.mrb[0].mxu0
        %v1589 = vadd.f32 %v1389, %v1588
        %v1590 = vpop.f32.mrb[0].mxu0
        %v1591 = vadd.f32 %v1389, %v1590
        %1592 = vmatprep.mubr.f32.mxu0 0.0
        %1593 = vmatmul.mubr.f32.gmra.mrb[0].mxu0 %v1454
        %v1594 = vpop.f32.mrb[0].mxu0
        %v1595 = vadd.f32 %v1394, %v1594
        %v1596 = vpop.f32.mrb[0].mxu0
        %v1597 = vadd.f32 %v1394, %v1596
        %1598 = vmatprep.mubr.f32.mxu0 0.0
        %1599 = vmatmul.mubr.f32.gmra.mrb[0].mxu0 %v1457
        %v1600 = vpop.f32.mrb[0].mxu0
        %v1601 = vadd.f32 %v1399, %v1600
        %v1602 = vpop.f32.mrb[0].mxu0
        %v1603 = vadd.f32 %v1399, %v1602
        %1604 = vmatprep.mubr.f32.mxu0 0.0
        %1605 = vmatmul.mubr.f32.gmra.mrb[0].mxu0 %v1460
        %v1606 = vpop.f32.mrb[0].mxu0
        %v1607 = vadd.f32 %v1404, %v1606
        %v1608 = vpop.f32.mrb[0].mxu0
        %v1609 = vadd.f32 %v1404, %v1608
        %1610 = vmatprep.mubr.f32.mxu0 0.0
        %1611 = vmatmul.mubr.f32.gmra.mrb[0].mxu0 %v1463
        %v1612 = vpop.f32.mrb[0].mxu0
        %v1613 = vadd.f32 %v1409, %v1612
        %v1614 = vpop.f32.mrb[0].mxu0
        %v1615 = vadd.f32 %v1409, %v1614
        %1616 = vmatprep.mubr.f32.mxu0 0.0
        %1617 = vmatmul.mubr.f32.gmra.mrb[0].mxu0 %v1466
        %v1618 = vpop.f32.mrb[0].mxu0
        %v1619 = vadd.f32 %v1414, %v1618
        %v1620 = vpop.f32.mrb[0].mxu0
        %v1621 = vadd.f32 %v1414, %v1620
        %1622 = vmatprep.mubr.f32.mxu0 0.0
        %1623 = vmatmul.mubr.f32.gmra.mrb[0].mxu0 %v1469
        %v1624 = vpop.f32.mrb[0].mxu0
        %v1625 = vadd.f32 %v1419, %v1624
        %v1626 = vpop.f32.mrb[0].mxu0
        %v1627 = vadd.f32 %v1419, %v1626
        %1628 = vmatprep.mubr.f32.mxu0 0.0
        %1629 = vmatmul.mubr.f32.gmra.mrb[0].mxu0 %v1472
        %v1630 = vpop.f32.mrb[0].mxu0
        %v1631 = vadd.f32 %v1424, %v1630
        %v1632 = vpop.f32.mrb[0].mxu0
        %v1633 = vadd.f32 %v1424, %v1632
        %1634 = vdwg.mxu0
        %v1635 = vmax.f32 %v1541, 0.0
        %v1636 = vmax.f32 %v1543, 0.0
        %v1637 = vmax.f32 %v1547, 0.0
        %v1638 = vmax.f32 %v1549, 0.0
        %v1639 = vmax.f32 %v1553, 0.0
        %v1640 = vmax.f32 %v1555, 0.0
        %v1641 = vmax.f32 %v1559, 0.0
        %v1642 = vmax.f32 %v1561, 0.0
        %v1643 = vmax.f32 %v1565, 0.0
        %v1644 = vmax.f32 %v1567, 0.0
        %v1645 = vmax.f32 %v1571, 0.0
        %v1646 = vmax.f32 %v1573, 0.0
        %v1647 = vmax.f32 %v1577, 0.0
        %v1648 = vmax.f32 %v1579, 0.0
        %v1649 = vmax.f32 %v1583, 0.0
        %v1650 = vmax.f32 %v1585, 0.0
        %v1651 = vmax.f32 %v1589, 0.0
        %v1652 = vmax.f32 %v1591, 0.0
        %v1653 = vmax.f32 %v1595, 0.0
        %v1654 = vmax.f32 %v1597, 0.0
        %v1655 = vmax.f32 %v1601, 0.0
        %v1656 = vmax.f32 %v1603, 0.0
        %v1657 = vmax.f32 %v1607, 0.0
        %v1658 = vmax.f32 %v1609, 0.0
        %v1659 = vmax.f32 %v1613, 0.0
        %v1660 = vmax.f32 %v1615, 0.0
        %v1661 = vmax.f32 %v1619, 0.0
        %v1662 = vmax.f32 %v1621, 0.0
        %v1663 = vmax.f32 %v1625, 0.0
        %v1664 = vmax.f32 %v1627, 0.0
        %v1665 = vmax.f32 %v1631, 0.0
        %v1666 = vmax.f32 %v1633, 0.0
        %v1667 = vld [vmem:[%s3 + $0x100] sm:$0xff]
        %v1668 = vld [vmem:[%s3 + $0x108] sm:$0xff]
        %v1669 = vld [vmem:[%s3 + $0x110] sm:$0xff]
        %v1670 = vld [vmem:[%s3 + $0x118] sm:$0xff]
        %v1671 = vld [vmem:[%s3 + $0x120] sm:$0xff]
        %v1672 = vld [vmem:[%s3 + $0x128] sm:$0xff]
        %v1673 = vld [vmem:[%s3 + $0x130] sm:$0xff]
        %v1674 = vld [vmem:[%s3 + $0x138] sm:$0xff]
        %v1675 = vld [vmem:[%s3 + $0x140] sm:$0xff]
        %v1676 = vld [vmem:[%s3 + $0x148] sm:$0xff]
        %v1677 = vld [vmem:[%s3 + $0x150] sm:$0xff]
        %v1678 = vld [vmem:[%s3 + $0x158] sm:$0xff]
        %v1679 = vld [vmem:[%s3 + $0x160] sm:$0xff]
        %v1680 = vld [vmem:[%s3 + $0x168] sm:$0xff]
        %v1681 = vld [vmem:[%s3 + $0x170] sm:$0xff]
        %v1682 = vld [vmem:[%s3 + $0x178] sm:$0xff]
        %1684 = vset.pattern.permute.xlu0 0
        %1685 = vperm.xlu0 %1684, %v1667
        %v1686 = vpop.permute.xlu0 %1685
        %1689 = vset.pattern.permute.xlu0 0
        %1690 = vperm.xlu0 %1689, %v1668
        %v1691 = vpop.permute.xlu0 %1690
        %1694 = vset.pattern.permute.xlu0 0
        %1695 = vperm.xlu0 %1694, %v1669
        %v1696 = vpop.permute.xlu0 %1695
        %1699 = vset.pattern.permute.xlu0 0
        %1700 = vperm.xlu0 %1699, %v1670
        %v1701 = vpop.permute.xlu0 %1700
        %1704 = vset.pattern.permute.xlu0 0
        %1705 = vperm.xlu0 %1704, %v1671
        %v1706 = vpop.permute.xlu0 %1705
        %1709 = vset.pattern.permute.xlu0 0
        %1710 = vperm.xlu0 %1709, %v1672
        %v1711 = vpop.permute.xlu0 %1710
        %1714 = vset.pattern.permute.xlu0 0
        %1715 = vperm.xlu0 %1714, %v1673
        %v1716 = vpop.permute.xlu0 %1715
        %1719 = vset.pattern.permute.xlu0 0
        %1720 = vperm.xlu0 %1719, %v1674
        %v1721 = vpop.permute.xlu0 %1720
        %1724 = vset.pattern.permute.xlu0 0
        %1725 = vperm.xlu0 %1724, %v1675
        %v1726 = vpop.permute.xlu0 %1725
        %1729 = vset.pattern.permute.xlu0 0
        %1730 = vperm.xlu0 %1729, %v1676
        %v1731 = vpop.permute.xlu0 %1730
        %1734 = vset.pattern.permute.xlu0 0
        %1735 = vperm.xlu0 %1734, %v1677
        %v1736 = vpop.permute.xlu0 %1735
        %1739 = vset.pattern.permute.xlu0 0
        %1740 = vperm.xlu0 %1739, %v1678
        %v1741 = vpop.permute.xlu0 %1740
        %1744 = vset.pattern.permute.xlu0 0
        %1745 = vperm.xlu0 %1744, %v1679
        %v1746 = vpop.permute.xlu0 %1745
        %1749 = vset.pattern.permute.xlu0 0
        %1750 = vperm.xlu0 %1749, %v1680
        %v1751 = vpop.permute.xlu0 %1750
        %1754 = vset.pattern.permute.xlu0 0
        %1755 = vperm.xlu0 %1754, %v1681
        %v1756 = vpop.permute.xlu0 %1755
        %1759 = vset.pattern.permute.xlu0 0
        %1760 = vperm.xlu0 %1759, %v1682
        %v1761 = vpop.permute.xlu0 %1760
        %v1763 = vmul.f32 %v1635, %v1686
        %v1764 = vmul.f32 %v1636, %v1686
        %v1765 = vmul.f32 %v1637, %v1691
        %v1766 = vmul.f32 %v1638, %v1691
        %v1767 = vmul.f32 %v1639, %v1696
        %v1768 = vmul.f32 %v1640, %v1696
        %v1769 = vmul.f32 %v1641, %v1701
        %v1770 = vmul.f32 %v1642, %v1701
        %v1771 = vmul.f32 %v1643, %v1706
        %v1772 = vmul.f32 %v1644, %v1706
        %v1773 = vmul.f32 %v1645, %v1711
        %v1774 = vmul.f32 %v1646, %v1711
        %v1775 = vmul.f32 %v1647, %v1716
        %v1776 = vmul.f32 %v1648, %v1716
        %v1777 = vmul.f32 %v1649, %v1721
        %v1778 = vmul.f32 %v1650, %v1721
        %v1779 = vmul.f32 %v1651, %v1726
        %v1780 = vmul.f32 %v1652, %v1726
        %v1781 = vmul.f32 %v1653, %v1731
        %v1782 = vmul.f32 %v1654, %v1731
        %v1783 = vmul.f32 %v1655, %v1736
        %v1784 = vmul.f32 %v1656, %v1736
        %v1785 = vmul.f32 %v1657, %v1741
        %v1786 = vmul.f32 %v1658, %v1741
        %v1787 = vmul.f32 %v1659, %v1746
        %v1788 = vmul.f32 %v1660, %v1746
        %v1789 = vmul.f32 %v1661, %v1751
        %v1790 = vmul.f32 %v1662, %v1751
        %v1791 = vmul.f32 %v1663, %v1756
        %v1792 = vmul.f32 %v1664, %v1756
        %v1793 = vmul.f32 %v1665, %v1761
        %v1794 = vmul.f32 %v1666, %v1761
        %v1795 = vadd.f32 %v1763, %v1765
        %v1796 = vadd.f32 %v1795, %v1767
        %v1797 = vadd.f32 %v1796, %v1769
        %v1798 = vadd.f32 %v1797, %v1771
        %v1799 = vadd.f32 %v1798, %v1773
        %v1800 = vadd.f32 %v1799, %v1775
        %v1801 = vadd.f32 %v1800, %v1777
        %v1802 = vadd.f32 %v1801, %v1779
        %v1803 = vadd.f32 %v1802, %v1781
        %v1804 = vadd.f32 %v1803, %v1783
        %v1805 = vadd.f32 %v1804, %v1785
        %v1806 = vadd.f32 %v1805, %v1787
        %v1807 = vadd.f32 %v1806, %v1789
        %v1808 = vadd.f32 %v1807, %v1791
        %v1809 = vadd.f32 %v1808, %v1793
        %v1810 = vrot.slane %v1809, 4
        %v1811 = vadd.f32 %v1809, %v1810
        %v1812 = vrot.slane %v1811, 2
        %v1813 = vadd.f32 %v1811, %v1812
        %v1814 = vrot.slane %v1813, 1
        %v1815 = vadd.f32 %v1813, %v1814
        %v1816 = vadd.f32 %v1764, %v1766
        %v1817 = vadd.f32 %v1816, %v1768
        %v1818 = vadd.f32 %v1817, %v1770
        %v1819 = vadd.f32 %v1818, %v1772
        %v1820 = vadd.f32 %v1819, %v1774
        %v1821 = vadd.f32 %v1820, %v1776
        %v1822 = vadd.f32 %v1821, %v1778
        %v1823 = vadd.f32 %v1822, %v1780
        %v1824 = vadd.f32 %v1823, %v1782
        %v1825 = vadd.f32 %v1824, %v1784
        %v1826 = vadd.f32 %v1825, %v1786
        %v1827 = vadd.f32 %v1826, %v1788
        %v1828 = vadd.f32 %v1827, %v1790
        %v1829 = vadd.f32 %v1828, %v1792
        %v1830 = vadd.f32 %v1829, %v1794
        %v1831 = vrot.slane %v1830, 4
        %v1832 = vadd.f32 %v1830, %v1831
        %v1833 = vrot.slane %v1832, 2
        %v1834 = vadd.f32 %v1832, %v1833
        %v1835 = vrot.slane %v1834, 1
        %v1836 = vadd.f32 %v1834, %v1835
        %v1837 = vadd.f32 %v1312, %v1815
        %v1838 = vadd.f32 %v1313, %v1836
        %v1839 = vld [vmem:[%s1 + $0x180] sm:$0xff]
        %v1840 = vld [vmem:[%s1 + $0x188] sm:$0xff]
        %v1841 = vld [vmem:[%s1 + $0x190] sm:$0xff]
        %v1842 = vld [vmem:[%s1 + $0x198] sm:$0xff]
        %v1843 = vld [vmem:[%s1 + $0x1a0] sm:$0xff]
        %v1844 = vld [vmem:[%s1 + $0x1a8] sm:$0xff]
        %v1845 = vld [vmem:[%s1 + $0x1b0] sm:$0xff]
        %v1846 = vld [vmem:[%s1 + $0x1b8] sm:$0xff]
        %v1847 = vld [vmem:[%s1 + $0x1c0] sm:$0xff]
        %v1848 = vld [vmem:[%s1 + $0x1c8] sm:$0xff]
        %v1849 = vld [vmem:[%s1 + $0x1d0] sm:$0xff]
        %v1850 = vld [vmem:[%s1 + $0x1d8] sm:$0xff]
        %v1851 = vld [vmem:[%s1 + $0x1e0] sm:$0xff]
        %v1852 = vld [vmem:[%s1 + $0x1e8] sm:$0xff]
        %v1853 = vld [vmem:[%s1 + $0x1f0] sm:$0xff]
        %v1854 = vld [vmem:[%s1 + $0x1f8] sm:$0xff]
        %v1855 = vld [vmem:[%s2 + $0x180] sm:$0xff]
        %v1856 = vld [vmem:[%s2 + $0x188] sm:$0xff]
        %v1857 = vld [vmem:[%s2 + $0x190] sm:$0xff]
        %v1858 = vld [vmem:[%s2 + $0x198] sm:$0xff]
        %v1859 = vld [vmem:[%s2 + $0x1a0] sm:$0xff]
        %v1860 = vld [vmem:[%s2 + $0x1a8] sm:$0xff]
        %v1861 = vld [vmem:[%s2 + $0x1b0] sm:$0xff]
        %v1862 = vld [vmem:[%s2 + $0x1b8] sm:$0xff]
        %v1863 = vld [vmem:[%s2 + $0x1c0] sm:$0xff]
        %v1864 = vld [vmem:[%s2 + $0x1c8] sm:$0xff]
        %v1865 = vld [vmem:[%s2 + $0x1d0] sm:$0xff]
        %v1866 = vld [vmem:[%s2 + $0x1d8] sm:$0xff]
        %v1867 = vld [vmem:[%s2 + $0x1e0] sm:$0xff]
        %v1868 = vld [vmem:[%s2 + $0x1e8] sm:$0xff]
        %v1869 = vld [vmem:[%s2 + $0x1f0] sm:$0xff]
        %v1870 = vld [vmem:[%s2 + $0x1f8] sm:$0xff]
        %1872 = vset.pattern.permute.xlu0 0
        %1873 = vperm.xlu0 %1872, %v1855
        %v1874 = vpop.permute.xlu0 %1873
        %1877 = vset.pattern.permute.xlu0 0
        %1878 = vperm.xlu0 %1877, %v1856
        %v1879 = vpop.permute.xlu0 %1878
        %1882 = vset.pattern.permute.xlu0 0
        %1883 = vperm.xlu0 %1882, %v1857
        %v1884 = vpop.permute.xlu0 %1883
        %1887 = vset.pattern.permute.xlu0 0
        %1888 = vperm.xlu0 %1887, %v1858
        %v1889 = vpop.permute.xlu0 %1888
        %1892 = vset.pattern.permute.xlu0 0
        %1893 = vperm.xlu0 %1892, %v1859
        %v1894 = vpop.permute.xlu0 %1893
        %1897 = vset.pattern.permute.xlu0 0
        %1898 = vperm.xlu0 %1897, %v1860
        %v1899 = vpop.permute.xlu0 %1898
        %1902 = vset.pattern.permute.xlu0 0
        %1903 = vperm.xlu0 %1902, %v1861
        %v1904 = vpop.permute.xlu0 %1903
        %1907 = vset.pattern.permute.xlu0 0
        %1908 = vperm.xlu0 %1907, %v1862
        %v1909 = vpop.permute.xlu0 %1908
        %1912 = vset.pattern.permute.xlu0 0
        %1913 = vperm.xlu0 %1912, %v1863
        %v1914 = vpop.permute.xlu0 %1913
        %1917 = vset.pattern.permute.xlu0 0
        %1918 = vperm.xlu0 %1917, %v1864
        %v1919 = vpop.permute.xlu0 %1918
        %1922 = vset.pattern.permute.xlu0 0
        %1923 = vperm.xlu0 %1922, %v1865
        %v1924 = vpop.permute.xlu0 %1923
        %1927 = vset.pattern.permute.xlu0 0
        %1928 = vperm.xlu0 %1927, %v1866
        %v1929 = vpop.permute.xlu0 %1928
        %1932 = vset.pattern.permute.xlu0 0
        %1933 = vperm.xlu0 %1932, %v1867
        %v1934 = vpop.permute.xlu0 %1933
        %1937 = vset.pattern.permute.xlu0 0
        %1938 = vperm.xlu0 %1937, %v1868
        %v1939 = vpop.permute.xlu0 %1938
        %1942 = vset.pattern.permute.xlu0 0
        %1943 = vperm.xlu0 %1942, %v1869
        %v1944 = vpop.permute.xlu0 %1943
        %1947 = vset.pattern.permute.xlu0 0
        %1948 = vperm.xlu0 %1947, %v1870
        %v1949 = vpop.permute.xlu0 %1948
        %v1952 = vsel %vm370, %v1839, 0
        %v1955 = vsel %vm370, %v1840, 0
        %v1958 = vsel %vm370, %v1841, 0
        %v1961 = vsel %vm370, %v1842, 0
        %v1964 = vsel %vm370, %v1843, 0
        %v1967 = vsel %vm370, %v1844, 0
        %v1970 = vsel %vm370, %v1845, 0
        %v1973 = vsel %vm370, %v1846, 0
        %v1976 = vsel %vm370, %v1847, 0
        %v1979 = vsel %vm370, %v1848, 0
        %v1982 = vsel %vm370, %v1849, 0
        %v1985 = vsel %vm370, %v1850, 0
        %v1988 = vsel %vm370, %v1851, 0
        %v1991 = vsel %vm370, %v1852, 0
        %v1994 = vsel %vm370, %v1853, 0
        %v1997 = vsel %vm370, %v1854, 0
        %1999 = vmatprep.subr.mxu0 %v422
        %2000 = vmatpush1.msra.mxu0 %v420
        %2001 = vmatprep.subr.mxu0 0.0
        %2002 = vmatpush1.msra.mxu0 0.0
        %2003 = vmatprep.subr.mxu0 0.0
        %2004 = vmatpush1.msra.mxu0 0.0
        %2005 = vmatprep.subr.mxu0 0.0
        %2006 = vmatpush1.msra.mxu0 0.0
        %2007 = vmatprep.subr.mxu0 0.0
        %2008 = vmatpush1.msra.mxu0 0.0
        %2009 = vmatprep.subr.mxu0 0.0
        %2010 = vmatpush1.msra.mxu0 0.0
        %2011 = vmatprep.subr.mxu0 0.0
        %2012 = vmatpush1.msra.mxu0 0.0
        %2013 = vmatprep.subr.mxu0 0.0
        %2014 = vmatpush1.msra.mxu0 0.0
        %2015 = vmatprep.subr.mxu0 0.0
        %2016 = vmatpush1.msra.mxu0 0.0
        %2017 = vmatprep.subr.mxu0 0.0
        %2018 = vmatpush1.msra.mxu0 0.0
        %2019 = vmatprep.subr.mxu0 0.0
        %2020 = vmatpush1.msra.mxu0 0.0
        %2021 = vmatprep.subr.mxu0 0.0
        %2022 = vmatpush1.msra.mxu0 0.0
        %2023 = vmatprep.subr.mxu0 0.0
        %2024 = vmatpush1.msra.mxu0 0.0
        %2025 = vmatprep.subr.mxu0 0.0
        %2026 = vmatpush1.msra.mxu0 0.0
        %2027 = vmatprep.subr.mxu0 0.0
        %2028 = vmatpush1.msra.mxu0 0.0
        %2029 = vmatprep.subr.mxu0 0.0
        %2030 = vmatpush1.msra.mxu0 0.0
        %2031 = vmatprep.subr.mxu0 0.0
        %2032 = vmatpush1.msra.mxu0 0.0
        %2033 = vmatprep.subr.mxu0 0.0
        %2034 = vmatpush1.msra.mxu0 0.0
        %2035 = vmatprep.subr.mxu0 0.0
        %2036 = vmatpush1.msra.mxu0 0.0
        %2037 = vmatprep.subr.mxu0 0.0
        %2038 = vmatpush1.msra.mxu0 0.0
        %2039 = vmatprep.subr.mxu0 0.0
        %2040 = vmatpush1.msra.mxu0 0.0
        %2041 = vmatprep.subr.mxu0 0.0
        %2042 = vmatpush1.msra.mxu0 0.0
        %2043 = vmatprep.subr.mxu0 0.0
        %2044 = vmatpush1.msra.mxu0 0.0
        %2045 = vmatprep.subr.mxu0 0.0
        %2046 = vmatpush1.msra.mxu0 0.0
        %2047 = vmatprep.subr.mxu0 0.0
        %2048 = vmatpush1.msra.mxu0 0.0
        %2049 = vmatprep.subr.mxu0 0.0
        %2050 = vmatpush1.msra.mxu0 0.0
        %2051 = vmatprep.subr.mxu0 0.0
        %2052 = vmatpush1.msra.mxu0 0.0
        %2053 = vmatprep.subr.mxu0 0.0
        %2054 = vmatpush1.msra.mxu0 0.0
        %2055 = vmatprep.subr.mxu0 0.0
        %2056 = vmatpush1.msra.mxu0 0.0
        %2057 = vmatprep.subr.mxu0 0.0
        %2058 = vmatpush1.msra.mxu0 0.0
        %2059 = vmatprep.subr.mxu0 0.0
        %2060 = vmatpush1.msra.mxu0 0.0
        %2061 = vmatprep.subr.mxu0 0.0
        %2062 = vmatpush1.msra.mxu0 0.0
        %2063 = vmatprep.mubr.f32.mxu0 0.0
        %2064 = vmatmul.mubr.f32.gmra.mrb[0].mxu0 %v1952
        %v2065 = vpop.f32.mrb[0].mxu0
        %v2066 = vadd.f32 %v1874, %v2065
        %v2067 = vpop.f32.mrb[0].mxu0
        %v2068 = vadd.f32 %v1874, %v2067
        %2069 = vmatprep.mubr.f32.mxu0 0.0
        %2070 = vmatmul.mubr.f32.gmra.mrb[0].mxu0 %v1955
        %v2071 = vpop.f32.mrb[0].mxu0
        %v2072 = vadd.f32 %v1879, %v2071
        %v2073 = vpop.f32.mrb[0].mxu0
        %v2074 = vadd.f32 %v1879, %v2073
        %2075 = vmatprep.mubr.f32.mxu0 0.0
        %2076 = vmatmul.mubr.f32.gmra.mrb[0].mxu0 %v1958
        %v2077 = vpop.f32.mrb[0].mxu0
        %v2078 = vadd.f32 %v1884, %v2077
        %v2079 = vpop.f32.mrb[0].mxu0
        %v2080 = vadd.f32 %v1884, %v2079
        %2081 = vmatprep.mubr.f32.mxu0 0.0
        %2082 = vmatmul.mubr.f32.gmra.mrb[0].mxu0 %v1961
        %v2083 = vpop.f32.mrb[0].mxu0
        %v2084 = vadd.f32 %v1889, %v2083
        %v2085 = vpop.f32.mrb[0].mxu0
        %v2086 = vadd.f32 %v1889, %v2085
        %2087 = vmatprep.mubr.f32.mxu0 0.0
        %2088 = vmatmul.mubr.f32.gmra.mrb[0].mxu0 %v1964
        %v2089 = vpop.f32.mrb[0].mxu0
        %v2090 = vadd.f32 %v1894, %v2089
        %v2091 = vpop.f32.mrb[0].mxu0
        %v2092 = vadd.f32 %v1894, %v2091
        %2093 = vmatprep.mubr.f32.mxu0 0.0
        %2094 = vmatmul.mubr.f32.gmra.mrb[0].mxu0 %v1967
        %v2095 = vpop.f32.mrb[0].mxu0
        %v2096 = vadd.f32 %v1899, %v2095
        %v2097 = vpop.f32.mrb[0].mxu0
        %v2098 = vadd.f32 %v1899, %v2097
        %2099 = vmatprep.mubr.f32.mxu0 0.0
        %2100 = vmatmul.mubr.f32.gmra.mrb[0].mxu0 %v1970
        %v2101 = vpop.f32.mrb[0].mxu0
        %v2102 = vadd.f32 %v1904, %v2101
        %v2103 = vpop.f32.mrb[0].mxu0
        %v2104 = vadd.f32 %v1904, %v2103
        %2105 = vmatprep.mubr.f32.mxu0 0.0
        %2106 = vmatmul.mubr.f32.gmra.mrb[0].mxu0 %v1973
        %v2107 = vpop.f32.mrb[0].mxu0
        %v2108 = vadd.f32 %v1909, %v2107
        %v2109 = vpop.f32.mrb[0].mxu0
        %v2110 = vadd.f32 %v1909, %v2109
        %2111 = vmatprep.mubr.f32.mxu0 0.0
        %2112 = vmatmul.mubr.f32.gmra.mrb[0].mxu0 %v1976
        %v2113 = vpop.f32.mrb[0].mxu0
        %v2114 = vadd.f32 %v1914, %v2113
        %v2115 = vpop.f32.mrb[0].mxu0
        %v2116 = vadd.f32 %v1914, %v2115
        %2117 = vmatprep.mubr.f32.mxu0 0.0
        %2118 = vmatmul.mubr.f32.gmra.mrb[0].mxu0 %v1979
        %v2119 = vpop.f32.mrb[0].mxu0
        %v2120 = vadd.f32 %v1919, %v2119
        %v2121 = vpop.f32.mrb[0].mxu0
        %v2122 = vadd.f32 %v1919, %v2121
        %2123 = vmatprep.mubr.f32.mxu0 0.0
        %2124 = vmatmul.mubr.f32.gmra.mrb[0].mxu0 %v1982
        %v2125 = vpop.f32.mrb[0].mxu0
        %v2126 = vadd.f32 %v1924, %v2125
        %v2127 = vpop.f32.mrb[0].mxu0
        %v2128 = vadd.f32 %v1924, %v2127
        %2129 = vmatprep.mubr.f32.mxu0 0.0
        %2130 = vmatmul.mubr.f32.gmra.mrb[0].mxu0 %v1985
        %v2131 = vpop.f32.mrb[0].mxu0
        %v2132 = vadd.f32 %v1929, %v2131
        %v2133 = vpop.f32.mrb[0].mxu0
        %v2134 = vadd.f32 %v1929, %v2133
        %2135 = vmatprep.mubr.f32.mxu0 0.0
        %2136 = vmatmul.mubr.f32.gmra.mrb[0].mxu0 %v1988
        %v2137 = vpop.f32.mrb[0].mxu0
        %v2138 = vadd.f32 %v1934, %v2137
        %v2139 = vpop.f32.mrb[0].mxu0
        %v2140 = vadd.f32 %v1934, %v2139
        %2141 = vmatprep.mubr.f32.mxu0 0.0
        %2142 = vmatmul.mubr.f32.gmra.mrb[0].mxu0 %v1991
        %v2143 = vpop.f32.mrb[0].mxu0
        %v2144 = vadd.f32 %v1939, %v2143
        %v2145 = vpop.f32.mrb[0].mxu0
        %v2146 = vadd.f32 %v1939, %v2145
        %2147 = vmatprep.mubr.f32.mxu0 0.0
        %2148 = vmatmul.mubr.f32.gmra.mrb[0].mxu0 %v1994
        %v2149 = vpop.f32.mrb[0].mxu0
        %v2150 = vadd.f32 %v1944, %v2149
        %v2151 = vpop.f32.mrb[0].mxu0
        %v2152 = vadd.f32 %v1944, %v2151
        %2153 = vmatprep.mubr.f32.mxu0 0.0
        %2154 = vmatmul.mubr.f32.gmra.mrb[0].mxu0 %v1997
        %v2155 = vpop.f32.mrb[0].mxu0
        %v2156 = vadd.f32 %v1949, %v2155
        %v2157 = vpop.f32.mrb[0].mxu0
        %v2158 = vadd.f32 %v1949, %v2157
        %2159 = vdwg.mxu0
        %v2160 = vmax.f32 %v2066, 0.0
        %v2161 = vmax.f32 %v2068, 0.0
        %v2162 = vmax.f32 %v2072, 0.0
        %v2163 = vmax.f32 %v2074, 0.0
        %v2164 = vmax.f32 %v2078, 0.0
        %v2165 = vmax.f32 %v2080, 0.0
        %v2166 = vmax.f32 %v2084, 0.0
        %v2167 = vmax.f32 %v2086, 0.0
        %v2168 = vmax.f32 %v2090, 0.0
        %v2169 = vmax.f32 %v2092, 0.0
        %v2170 = vmax.f32 %v2096, 0.0
        %v2171 = vmax.f32 %v2098, 0.0
        %v2172 = vmax.f32 %v2102, 0.0
        %v2173 = vmax.f32 %v2104, 0.0
        %v2174 = vmax.f32 %v2108, 0.0
        %v2175 = vmax.f32 %v2110, 0.0
        %v2176 = vmax.f32 %v2114, 0.0
        %v2177 = vmax.f32 %v2116, 0.0
        %v2178 = vmax.f32 %v2120, 0.0
        %v2179 = vmax.f32 %v2122, 0.0
        %v2180 = vmax.f32 %v2126, 0.0
        %v2181 = vmax.f32 %v2128, 0.0
        %v2182 = vmax.f32 %v2132, 0.0
        %v2183 = vmax.f32 %v2134, 0.0
        %v2184 = vmax.f32 %v2138, 0.0
        %v2185 = vmax.f32 %v2140, 0.0
        %v2186 = vmax.f32 %v2144, 0.0
        %v2187 = vmax.f32 %v2146, 0.0
        %v2188 = vmax.f32 %v2150, 0.0
        %v2189 = vmax.f32 %v2152, 0.0
        %v2190 = vmax.f32 %v2156, 0.0
        %v2191 = vmax.f32 %v2158, 0.0
        %v2192 = vld [vmem:[%s3 + $0x180] sm:$0xff]
        %v2193 = vld [vmem:[%s3 + $0x188] sm:$0xff]
        %v2194 = vld [vmem:[%s3 + $0x190] sm:$0xff]
        %v2195 = vld [vmem:[%s3 + $0x198] sm:$0xff]
        %v2196 = vld [vmem:[%s3 + $0x1a0] sm:$0xff]
        %v2197 = vld [vmem:[%s3 + $0x1a8] sm:$0xff]
        %v2198 = vld [vmem:[%s3 + $0x1b0] sm:$0xff]
        %v2199 = vld [vmem:[%s3 + $0x1b8] sm:$0xff]
        %v2200 = vld [vmem:[%s3 + $0x1c0] sm:$0xff]
        %v2201 = vld [vmem:[%s3 + $0x1c8] sm:$0xff]
        %v2202 = vld [vmem:[%s3 + $0x1d0] sm:$0xff]
        %v2203 = vld [vmem:[%s3 + $0x1d8] sm:$0xff]
        %v2204 = vld [vmem:[%s3 + $0x1e0] sm:$0xff]
        %v2205 = vld [vmem:[%s3 + $0x1e8] sm:$0xff]
        %v2206 = vld [vmem:[%s3 + $0x1f0] sm:$0xff]
        %v2207 = vld [vmem:[%s3 + $0x1f8] sm:$0xff]
        %2209 = vset.pattern.permute.xlu0 0
        %2210 = vperm.xlu0 %2209, %v2192
        %v2211 = vpop.permute.xlu0 %2210
        %2214 = vset.pattern.permute.xlu0 0
        %2215 = vperm.xlu0 %2214, %v2193
        %v2216 = vpop.permute.xlu0 %2215
        %2219 = vset.pattern.permute.xlu0 0
        %2220 = vperm.xlu0 %2219, %v2194
        %v2221 = vpop.permute.xlu0 %2220
        %2224 = vset.pattern.permute.xlu0 0
        %2225 = vperm.xlu0 %2224, %v2195
        %v2226 = vpop.permute.xlu0 %2225
        %2229 = vset.pattern.permute.xlu0 0
        %2230 = vperm.xlu0 %2229, %v2196
        %v2231 = vpop.permute.xlu0 %2230
        %2234 = vset.pattern.permute.xlu0 0
        %2235 = vperm.xlu0 %2234, %v2197
        %v2236 = vpop.permute.xlu0 %2235
        %2239 = vset.pattern.permute.xlu0 0
        %2240 = vperm.xlu0 %2239, %v2198
        %v2241 = vpop.permute.xlu0 %2240
        %2244 = vset.pattern.permute.xlu0 0
        %2245 = vperm.xlu0 %2244, %v2199
        %v2246 = vpop.permute.xlu0 %2245
        %2249 = vset.pattern.permute.xlu0 0
        %2250 = vperm.xlu0 %2249, %v2200
        %v2251 = vpop.permute.xlu0 %2250
        %2254 = vset.pattern.permute.xlu0 0
        %2255 = vperm.xlu0 %2254, %v2201
        %v2256 = vpop.permute.xlu0 %2255
        %2259 = vset.pattern.permute.xlu0 0
        %2260 = vperm.xlu0 %2259, %v2202
        %v2261 = vpop.permute.xlu0 %2260
        %2264 = vset.pattern.permute.xlu0 0
        %2265 = vperm.xlu0 %2264, %v2203
        %v2266 = vpop.permute.xlu0 %2265
        %2269 = vset.pattern.permute.xlu0 0
        %2270 = vperm.xlu0 %2269, %v2204
        %v2271 = vpop.permute.xlu0 %2270
        %2274 = vset.pattern.permute.xlu0 0
        %2275 = vperm.xlu0 %2274, %v2205
        %v2276 = vpop.permute.xlu0 %2275
        %2279 = vset.pattern.permute.xlu0 0
        %2280 = vperm.xlu0 %2279, %v2206
        %v2281 = vpop.permute.xlu0 %2280
        %2284 = vset.pattern.permute.xlu0 0
        %2285 = vperm.xlu0 %2284, %v2207
        %v2286 = vpop.permute.xlu0 %2285
        %v2288 = vmul.f32 %v2160, %v2211
        %v2289 = vmul.f32 %v2161, %v2211
        %v2290 = vmul.f32 %v2162, %v2216
        %v2291 = vmul.f32 %v2163, %v2216
        %v2292 = vmul.f32 %v2164, %v2221
        %v2293 = vmul.f32 %v2165, %v2221
        %v2294 = vmul.f32 %v2166, %v2226
        %v2295 = vmul.f32 %v2167, %v2226
        %v2296 = vmul.f32 %v2168, %v2231
        %v2297 = vmul.f32 %v2169, %v2231
        %v2298 = vmul.f32 %v2170, %v2236
        %v2299 = vmul.f32 %v2171, %v2236
        %v2300 = vmul.f32 %v2172, %v2241
        %v2301 = vmul.f32 %v2173, %v2241
        %v2302 = vmul.f32 %v2174, %v2246
        %v2303 = vmul.f32 %v2175, %v2246
        %v2304 = vmul.f32 %v2176, %v2251
        %v2305 = vmul.f32 %v2177, %v2251
        %v2306 = vmul.f32 %v2178, %v2256
        %v2307 = vmul.f32 %v2179, %v2256
        %v2308 = vmul.f32 %v2180, %v2261
        %v2309 = vmul.f32 %v2181, %v2261
        %v2310 = vmul.f32 %v2182, %v2266
        %v2311 = vmul.f32 %v2183, %v2266
        %v2312 = vmul.f32 %v2184, %v2271
        %v2313 = vmul.f32 %v2185, %v2271
        %v2314 = vmul.f32 %v2186, %v2276
        %v2315 = vmul.f32 %v2187, %v2276
        %v2316 = vmul.f32 %v2188, %v2281
        %v2317 = vmul.f32 %v2189, %v2281
        %v2318 = vmul.f32 %v2190, %v2286
        %v2319 = vmul.f32 %v2191, %v2286
        %v2320 = vadd.f32 %v2288, %v2290
        %v2321 = vadd.f32 %v2320, %v2292
        %v2322 = vadd.f32 %v2321, %v2294
        %v2323 = vadd.f32 %v2322, %v2296
        %v2324 = vadd.f32 %v2323, %v2298
        %v2325 = vadd.f32 %v2324, %v2300
        %v2326 = vadd.f32 %v2325, %v2302
        %v2327 = vadd.f32 %v2326, %v2304
        %v2328 = vadd.f32 %v2327, %v2306
        %v2329 = vadd.f32 %v2328, %v2308
        %v2330 = vadd.f32 %v2329, %v2310
        %v2331 = vadd.f32 %v2330, %v2312
        %v2332 = vadd.f32 %v2331, %v2314
        %v2333 = vadd.f32 %v2332, %v2316
        %v2334 = vadd.f32 %v2333, %v2318
        %v2335 = vrot.slane %v2334, 4
        %v2336 = vadd.f32 %v2334, %v2335
        %v2337 = vrot.slane %v2336, 2
        %v2338 = vadd.f32 %v2336, %v2337
        %v2339 = vrot.slane %v2338, 1
        %v2340 = vadd.f32 %v2338, %v2339
        %v2341 = vadd.f32 %v2289, %v2291
        %v2342 = vadd.f32 %v2341, %v2293
        %v2343 = vadd.f32 %v2342, %v2295
        %v2344 = vadd.f32 %v2343, %v2297
        %v2345 = vadd.f32 %v2344, %v2299
        %v2346 = vadd.f32 %v2345, %v2301
        %v2347 = vadd.f32 %v2346, %v2303
        %v2348 = vadd.f32 %v2347, %v2305
        %v2349 = vadd.f32 %v2348, %v2307
        %v2350 = vadd.f32 %v2349, %v2309
        %v2351 = vadd.f32 %v2350, %v2311
        %v2352 = vadd.f32 %v2351, %v2313
        %v2353 = vadd.f32 %v2352, %v2315
        %v2354 = vadd.f32 %v2353, %v2317
        %v2355 = vadd.f32 %v2354, %v2319
        %v2356 = vrot.slane %v2355, 4
        %v2357 = vadd.f32 %v2355, %v2356
        %v2358 = vrot.slane %v2357, 2
        %v2359 = vadd.f32 %v2357, %v2358
        %v2360 = vrot.slane %v2359, 1
        %v2361 = vadd.f32 %v2359, %v2360
        %v2362 = vadd.f32 %v1837, %v2340
        %v2363 = vadd.f32 %v1838, %v2361
        %s2364 = sld [smem:[#allocation2]]
        %v2365 = vstv %s2364
        %v2366 = vadd.f32 %v2362, %v2365
        %v2367 = vadd.f32 %v2363, %v2365
        %vm2368 = vcmp.gt.f32.partialorder %v2366, 20.0
        %vm2369 = vcmp.gt.f32.partialorder %v2367, 20.0
        %v2370 = vmin.f32 %v2366, 20.0
        %v2371 = vmin.f32 %v2367, 20.0
        %v2372 = vmul.f32 %v2370, 1.442695
        %v2373 = vpow.pop %v2372
        %v2374 = vmul.f32 %v2371, 1.442695
        %v2375 = vpow.pop %v2374
        %v2376 = vadd.f32 %v2373, 1.0
        %v2377 = vlog2.pop %v2376
        %v2378 = vmul.f32 %v2377, 0.6931472
        %v2379 = vmul.f32 -0.5, %v2373
        %v2380 = vadd.f32 %v2379, 1.0
        %v2381 = vmul.f32 %v2380, %v2373
        %v2382 = vand.u32 2147483647, %v2373
        %vm2383 = vcmp.lt.f32.partialorder %v2382, 0.0004427343
        %v2384 = vsel %vm2383, %v2381, %v2378
        %v2385 = vadd.f32 %v2375, 1.0
        %v2386 = vlog2.pop %v2385
        %v2387 = vmul.f32 %v2386, 0.6931472
        %v2388 = vmul.f32 -0.5, %v2375
        %v2389 = vadd.f32 %v2388, 1.0
        %v2390 = vmul.f32 %v2389, %v2375
        %v2391 = vand.u32 2147483647, %v2375
        %vm2392 = vcmp.lt.f32.partialorder %v2391, 0.0004427343
        %v2393 = vsel %vm2392, %v2390, %v2387
        %v2394 = vsel %vm2368, %v2366, %v2384
        %v2395 = vsel %vm2369, %v2367, %v2393
        %v2398 = vcombine.low %v2394, %v2395
        %v2400 = vunpack.c.l.s4 1966171168
        %v2401 = vunpack.c.0.s8 %v2400
        %v2402 = vlaneseq
        %v2403 = vshrl.u32 %v2402, 7
        %v2404 = vsub.s32 %v2401, %v2403
        %v2405 = vrot.slane %v2398, %v2404
        %v2407 = vunpack.c.l.s4 1966171168
        %v2408 = vunpack.c.0.s8 %v2407
        %v2409 = vlaneseq
        %v2410 = vshrl.u32 %v2409, 7
        %v2411 = vsub.s32 %v2408, %v2410
        %v2412 = vrot.slane %v2405, %v2411
        %v2414 = vlaneseq
        %vm2415 = vcmp.ge.s32.totalorder %v2414, 0
        %vm2416 = vcmp.lt.s32.totalorder %v2414, 256
        %vm2417 = vmand %vm2415, %vm2416
        %2418 = vst.msk [vmem:[%s243] sm:$0x3] %vm2417, %v2412
        %s2419 = sand.u32 %s154, 1
        %s2420 = scalar_lea.sflag [#allocation4], %s2419
        %s2421 = sand.u32 %s154, 1
        %s2422 = smul.addr %s2421, 2
        %s2423 = scalar_lea.vmem [#allocation3], %s2422
        // Predicated region
        $region41: #{_spatial_attention_call.1} parent=39 // pred_check
          %p2424 = pneg %p164
        $region42: #{_spatial_attention_call.1} parent=39 // pred_check_branch
          %2426 = sbr.rel (%p2424) target = $region44
        $region43: #{_spatial_attention_call.1} parent=39 // pred_region
          %s2427 = smul.u32 2, %s25
          %s2429 = ssub.s32 32, 32
          %2430 = vsyncadd %s2420, %s2429
          %s2431 = smul.addr %s24, 2
          %s2432 = sadd.s32 %s2427, %s2431
          %s2433 = smul.addr %s2432, 16
          %s2434 = scalar_lea.hbm %s5, %s2433
          %s2436 = sshll.u32 %s2423, 4
          %s2437 = int_to_ptr.vmem [resolvable:$true] %s2436
          %2439 = dma.vmem_to_hbm [thread:$0]  %s2437, 32, %s2434, %s2420
        $region44: #{_spatial_attention_call.1} parent=39 // pred_fallthru
          _
      $region40: #{_spatial_attention_call.1} parent=5 // pred_fallthru
        _
      %p2440 = scmp.le.s32.totalorder 2, %s15
      // Predicated region
      $region45: #{_spatial_attention_call.1} parent=5 // pred_check
        %p2441 = pneg %p2440
      $region46: #{_spatial_attention_call.1} parent=5 // pred_check_branch
        %2443 = sbr.rel (%p2441) target = $region48
      $region47: #{_spatial_attention_call.1} parent=5 // pred_region
        %s2444 = ssub.s32 %s15, 2
        // Predicated region
        $region49: #{_spatial_attention_call.1} parent=47 // pred_check
          %p2445 = pneg %p170
        $region50: #{_spatial_attention_call.1} parent=47 // pred_check_branch
          %2447 = sbr.rel (%p2445) target = $region52
        $region51: #{_spatial_attention_call.1} parent=47 // pred_region
          %s2448 = sand.u32 %s155, 1
          %s2449 = scalar_lea.sflag [#allocation4], %s2448
          %s2450 = sand.u32 %s155, 1
          %s2451 = smul.addr %s2450, 2
          %s2452 = scalar_lea.vmem [#allocation3], %s2451
          %2453 = dma.done %s2449, 32
        $region52: #{_spatial_attention_call.1} parent=47 // pred_fallthru
          _
      $region48: #{_spatial_attention_call.1} parent=5 // pred_fallthru
        _
    $region6: #{_spatial_attention_call.1} parent=1 // loop_footer
      %s19 = sadd.s32 1, %s15
    $region7: #{_spatial_attention_call.1} parent=1 // loop_footer_branch
      %14 = sbr.rel target = $region3
    $region8: #{_spatial_attention_call.1} parent=1 // loop_exit
      _
    %2454 = vsyncpa [#allocation4], 1
    %s2455 = scalar_lea.sflag [#allocation4], 1
    %2456 = vsyncpa %s2455, 1

</llo_original>
